<compile_context>
chip_gen: v6e
topology: v6e:2x2x1
jax: 0.10.0
libtpu: 0.0.40
codegen_flags: <defaults>
</compile_context>

<pallas_src>
import functools

import jax
import jax.numpy as jnp
from jax.experimental import pallas as pl
from jax.experimental.pallas import tpu as pltpu

_LN_EPS = 1e-5          # nn.LayerNorm default
_MASK_FILL = -1e9       # matches scores.masked_fill_(attn_mask, -1e9)
_ACC_DT = jnp.float32   # MXU accumulation / statistics dtype
_MM_DT = jnp.bfloat16   # MXU input dtype (native single-pass matmul)


def _layernorm(y, gamma, beta):
    mean = jnp.mean(y, axis=-1, keepdims=True)
    c = y - mean
    var = jnp.mean(c * c, axis=-1, keepdims=True)
    return c * jax.lax.rsqrt(var + _LN_EPS) * gamma + beta


# ---------------------------------------------------------------------------
# Fused per-layer kernel (one grid step == one batch element)
# ---------------------------------------------------------------------------
def _encoder_layer_kernel(x_ref, m_ref, wqkv_ref, bqkv_ref, wout_ref, bout_ref,
                          ln1g_ref, ln1b_ref, w1_ref, b1_ref, w2_ref, b2_ref,
                          ln2g_ref, ln2b_ref, o_ref, *, num_head, scale):
    x = x_ref[0]                           # (S, H) f32
    S, H = x.shape
    hd = H // num_head
    masked = m_ref[0] != 0                 # (S, S) bool, True == mask out

    # ---- fused QKV projection (bf16 MXU, f32 accumulate) -------------------
    qkv = jnp.dot(x.astype(_MM_DT), wqkv_ref[...],
                  preferred_element_type=_ACC_DT) + bqkv_ref[...]   # (S, 3H)

    # ---- multi-head attention: all heads of this batch in one step ---------
    # Each head's context is folded directly into the output projection so the
    # (S, H) accumulator stays lane-dense; no narrow (S, hd) tensor ever hits
    # HBM and no host-side head transpose is needed.
    attn = jnp.zeros((S, H), _ACC_DT)
    for h in range(num_head):              # static unroll (num_head small)
        q = qkv[:, h * hd:(h + 1) * hd].astype(_MM_DT)
        k = qkv[:, H + h * hd:H + (h + 1) * hd].astype(_MM_DT)
        v = qkv[:, 2 * H + h * hd:2 * H + (h + 1) * hd].astype(_MM_DT)
        s = jax.lax.dot_general(q, k, (((1,), (1,)), ((), ())),
                                preferred_element_type=_ACC_DT) * scale
        s = jnp.where(masked, _MASK_FILL, s)
        s_max = jnp.max(s, axis=-1, keepdims=True)
        p = jnp.exp(s - s_max)
        # EUP approximate reciprocal keeps the divide off the VALU slot.
        p = p * pl.reciprocal(jnp.sum(p, axis=-1, keepdims=True), approx=True)
        ctx = jnp.dot(p.astype(_MM_DT), v, preferred_element_type=_ACC_DT)
        attn += jnp.dot(ctx.astype(_MM_DT), wout_ref[h * hd:(h + 1) * hd, :],
                        preferred_element_type=_ACC_DT)

    # TODO(synk): Dropout(p=0.1) is treated as identity (inference mode).
    attn = _layernorm(attn + bout_ref[...] + x, ln1g_ref[...], ln1b_ref[...])

    # ---- FFNN (Linear -> ReLU -> Linear) + residual + LayerNorm -------------
    # The (S, FFNN_dim) hidden activation lives only in registers/VMEM.
    hmid = jnp.dot(attn.astype(_MM_DT), w1_ref[...],
                   preferred_element_type=_ACC_DT) + b1_ref[...]
    hmid = jnp.maximum(hmid, 0.0)
    y = jnp.dot(hmid.astype(_MM_DT), w2_ref[...],
                preferred_element_type=_ACC_DT) + b2_ref[...] + attn
    o_ref[0] = _layernorm(y, ln2g_ref[...], ln2b_ref[...]).astype(o_ref.dtype)


# ---------------------------------------------------------------------------
# Wrapper: one pallas_call per encoder layer
# ---------------------------------------------------------------------------
def pallas_encoder_layer(x, mask_i8, p, *, num_head):
    B, S, H = x.shape
    hd = H // num_head
    Fd = p["w_ffn1"].shape[1]
    scale = 1.0 / (hd ** 0.5)

    kernel = functools.partial(_encoder_layer_kernel,
                               num_head=num_head, scale=scale)

    def batch_map(b):
        return (b, 0, 0)

    def const2d(b):                      # weights/biases: VMEM-resident blocks
        return (0, 0)

    return pl.pallas_call(
        kernel,
        out_shape=jax.ShapeDtypeStruct((B, S, H), x.dtype),
        grid_spec=pltpu.PrefetchScalarGridSpec(
            num_scalar_prefetch=0,
            grid=(B,),
            in_specs=[
                pl.BlockSpec((1, S, H), batch_map),        # x
                pl.BlockSpec((1, S, S), batch_map),        # attn mask (int8)
                pl.BlockSpec((H, 3 * H), const2d),         # w_qkv (bf16)
                pl.BlockSpec((1, 3 * H), const2d),         # b_qkv (f32)
                pl.BlockSpec((H, H), const2d),             # w_out (bf16)
                pl.BlockSpec((1, H), const2d),             # b_out
                pl.BlockSpec((1, H), const2d),             # ln1 gamma
                pl.BlockSpec((1, H), const2d),             # ln1 beta
                pl.BlockSpec((H, Fd), const2d),            # w_ffn1 (bf16)
                pl.BlockSpec((1, Fd), const2d),            # b_ffn1
                pl.BlockSpec((Fd, H), const2d),            # w_ffn2 (bf16)
                pl.BlockSpec((1, H), const2d),             # b_ffn2
                pl.BlockSpec((1, H), const2d),             # ln2 gamma
                pl.BlockSpec((1, H), const2d),             # ln2 beta
            ],
            out_specs=pl.BlockSpec((1, S, H), batch_map),
        ),
        compiler_params=pltpu.CompilerParams(
            dimension_semantics=("parallel",),
            # Explicit budget; tiny footprint here, safe on v5e/v6e/v7x.
            vmem_limit_bytes=32 * 1024 * 1024,
        ),
    )(x, mask_i8, p["w_qkv"], p["b_qkv"], p["w_out"], p["b_out"],
      p["ln1_g"], p["ln1_b"], p["w_ffn1"], p["b_ffn1"],
      p["w_ffn2"], p["b_ffn2"], p["ln2_g"], p["ln2_b"])


@functools.partial(jax.jit, static_argnames=("num_head",))
def encoder_forward(x, attn_mask, params, *, num_head):
    mask_i8 = attn_mask.astype(jnp.int8)   # compact mask, converted once
    for p in params:
        x = pallas_encoder_layer(x, mask_i8, p, num_head=num_head)
    return x


# ---------------------------------------------------------------------------
# Pure-JAX reference mirroring the PyTorch forward (same bf16 compute policy)
# ---------------------------------------------------------------------------
@functools.partial(jax.jit, static_argnames=("num_head",))
def reference_encoder(x, attn_mask, params, *, num_head):
    bf = lambda t: t.astype(jnp.bfloat16)
    for p in params:
        B, S, H = x.shape
        hd = H // num_head
        scale = 1.0 / (hd ** 0.5)
        qkv = jnp.dot(bf(x), p["w_qkv"],
                      preferred_element_type=jnp.float32) + p["b_qkv"]
        q, k, v = jnp.split(qkv, 3, axis=-1)
        q = q.reshape(B, S, num_head, hd).transpose(0, 2, 1, 3)
        k = k.reshape(B, S, num_head, hd).transpose(0, 2, 1, 3)
        v = v.reshape(B, S, num_head, hd).transpose(0, 2, 1, 3)
        scores = jnp.einsum("bhqd,bhkd->bhqk", bf(q), bf(k),
                            preferred_element_type=jnp.float32) * scale
        scores = jnp.where(attn_mask[:, None, :, :], _MASK_FILL, scores)
        probs = jax.nn.softmax(scores, axis=-1)
        ctx = jnp.einsum("bhqk,bhkd->bhqd", bf(probs), bf(v),
                         preferred_element_type=jnp.float32)
        ctx = ctx.transpose(0, 2, 1, 3).reshape(B, S, H)
        attn = _layernorm(
            jnp.dot(bf(ctx), p["w_out"], preferred_element_type=jnp.float32)
            + p["b_out"] + x, p["ln1_g"], p["ln1_b"])
        h1 = jax.nn.relu(
            jnp.dot(bf(attn), p["w_ffn1"], preferred_element_type=jnp.float32)
            + p["b_ffn1"])
        out = (jnp.dot(bf(h1), p["w_ffn2"], preferred_element_type=jnp.float32)
               + p["b_ffn2"] + attn)
        x = _layernorm(out, p["ln2_g"], p["ln2_b"])
    return x


if __name__ == "__main__":
    # Small shapes consistent with the module; hidden dims kept lane-dense.
    batch, seq = 2, 8
    hidden_dim, ffnn_dim, num_head, num_encoder = 128, 256, 4, 2

    key = jax.random.PRNGKey(0)
    key, k_x = jax.random.split(key)
    x = jax.random.normal(k_x, (batch, seq, hidden_dim), dtype=jnp.float32)

    # Padding-style mask: True means "mask out" (as masked_fill_ in PyTorch).
    valid_len = jnp.array([seq, seq - 2], dtype=jnp.int32)
    key_idx = jnp.arange(seq)[None, None, :]                     # (1, 1, S)
    attn_mask = jnp.broadcast_to(key_idx >= valid_len[:, None, None],
                                 (batch, seq, seq))              # (B, S, S) bool

    params = []
    for _ in range(num_encoder):
        keys = jax.random.split(key, 9)
        key = keys[0]
        params.append({
            # Matmul weights stored in bf16 (halves DMA / VMEM residency).
            "w_qkv": (0.05 * jax.random.normal(
                keys[1], (hidden_dim, 3 * hidden_dim))).astype(jnp.bfloat16),
            "b_qkv": 0.05 * jax.random.normal(
                keys[2], (1, 3 * hidden_dim), jnp.float32),
            "w_out": (0.05 * jax.random.normal(
                keys[3], (hidden_dim, hidden_dim))).astype(jnp.bfloat16),
            "b_out": 0.05 * jax.random.normal(
                keys[4], (1, hidden_dim), jnp.float32),
            "w_ffn1": (0.05 * jax.random.normal(
                keys[5], (hidden_dim, ffnn_dim))).astype(jnp.bfloat16),
            "b_ffn1": 0.05 * jax.random.normal(
                keys[6], (1, ffnn_dim), jnp.float32),
            "w_ffn2": (0.05 * jax.random.normal(
                keys[7], (ffnn_dim, hidden_dim))).astype(jnp.bfloat16),
            "b_ffn2": 0.05 * jax.random.normal(
                keys[8], (1, hidden_dim), jnp.float32),
            "ln1_g": jnp.ones((1, hidden_dim), jnp.float32),
            "ln1_b": jnp.zeros((1, hidden_dim), jnp.float32),
            "ln2_g": jnp.ones((1, hidden_dim), jnp.float32),
            "ln2_b": jnp.zeros((1, hidden_dim), jnp.float32),
        })

    out = jax.block_until_ready(
        encoder_forward(x, attn_mask, params, num_head=num_head))
    ref = jax.block_until_ready(
        reference_encoder(x, attn_mask, params, num_head=num_head))

    assert out.shape == (batch, seq, hidden_dim)
    max_err = jnp.max(jnp.abs(out - ref))
    # Tolerance accounts for the approximate (EUP) softmax reciprocal; both
    # kernel and reference use identical bf16 matmul inputs with f32 accumulate.
    assert jnp.allclose(out, ref, atol=1e-2, rtol=1e-2), (
        f"mismatch vs pure-JAX reference, max abs err = {max_err}")

    print("KERNEL_OK")
</pallas_src>

<mosaic_0001>
module attributes {stable_mosaic.version = 11 : i64} {
  func.func @_encoder_layer_kernel(%arg0: i32, %arg1: memref<1x8x128xf32, #tpu.memory_space<vmem>>, %arg2: memref<1x8x8xi8, #tpu.memory_space<vmem>>, %arg3: memref<128x384xbf16, #tpu.memory_space<vmem>>, %arg4: memref<1x384xf32, #tpu.memory_space<vmem>>, %arg5: memref<128x128xbf16, #tpu.memory_space<vmem>>, %arg6: memref<1x128xf32, #tpu.memory_space<vmem>>, %arg7: memref<1x128xf32, #tpu.memory_space<vmem>>, %arg8: memref<1x128xf32, #tpu.memory_space<vmem>>, %arg9: memref<128x256xbf16, #tpu.memory_space<vmem>>, %arg10: memref<1x256xf32, #tpu.memory_space<vmem>>, %arg11: memref<256x128xbf16, #tpu.memory_space<vmem>>, %arg12: memref<1x128xf32, #tpu.memory_space<vmem>>, %arg13: memref<1x128xf32, #tpu.memory_space<vmem>>, %arg14: memref<1x128xf32, #tpu.memory_space<vmem>>, %arg15: memref<1x8x128xf32, #tpu.memory_space<vmem>>) attributes {dimension_semantics = [#tpu.dimension_semantics<parallel>], iteration_bounds = array<i64: 2>, scalar_prefetch = 0 : i64, scratch_operands = 0 : i64, tpu.core_type = #tpu.core_type<tc>, window_params = [{transform_indices = @transform_0, window_bounds = array<i64: 1, 8, 128>}, {transform_indices = @transform_1, window_bounds = array<i64: 1, 8, 8>}, {pipeline_mode = #tpu.pipeline_mode<synchronous>, transform_indices = @transform_2, window_bounds = array<i64: 128, 384>}, {pipeline_mode = #tpu.pipeline_mode<synchronous>, transform_indices = @transform_3, window_bounds = array<i64: 1, 384>}, {pipeline_mode = #tpu.pipeline_mode<synchronous>, transform_indices = @transform_4, window_bounds = array<i64: 128, 128>}, {pipeline_mode = #tpu.pipeline_mode<synchronous>, transform_indices = @transform_5, window_bounds = array<i64: 1, 128>}, {pipeline_mode = #tpu.pipeline_mode<synchronous>, transform_indices = @transform_6, window_bounds = array<i64: 1, 128>}, {pipeline_mode = #tpu.pipeline_mode<synchronous>, transform_indices = @transform_7, window_bounds = array<i64: 1, 128>}, {pipeline_mode = #tpu.pipeline_mode<synchronous>, transform_indices = @transform_8, window_bounds = array<i64: 128, 256>}, {pipeline_mode = #tpu.pipeline_mode<synchronous>, transform_indices = @transform_9, window_bounds = array<i64: 1, 256>}, {pipeline_mode = #tpu.pipeline_mode<synchronous>, transform_indices = @transform_10, window_bounds = array<i64: 256, 128>}, {pipeline_mode = #tpu.pipeline_mode<synchronous>, transform_indices = @transform_11, window_bounds = array<i64: 1, 128>}, {pipeline_mode = #tpu.pipeline_mode<synchronous>, transform_indices = @transform_12, window_bounds = array<i64: 1, 128>}, {pipeline_mode = #tpu.pipeline_mode<synchronous>, transform_indices = @transform_13, window_bounds = array<i64: 1, 128>}, {transform_indices = @transform_14, window_bounds = array<i64: 1, 8, 128>}]} {
    %c0 = arith.constant 0 : index
    %c0_0 = arith.constant 0 : index
    %c0_1 = arith.constant 0 : index
    %0 = vector.load %arg1[%c0, %c0_0, %c0_1] : memref<1x8x128xf32, #tpu.memory_space<vmem>>, vector<1x8x128xf32>
    %1 = vector.shape_cast %0 : vector<1x8x128xf32> to vector<8x128xf32>
    %c0_2 = arith.constant 0 : index
    %c0_3 = arith.constant 0 : index
    %c0_4 = arith.constant 0 : index
    %2 = vector.load %arg2[%c0_2, %c0_3, %c0_4] : memref<1x8x8xi8, #tpu.memory_space<vmem>>, vector<1x8x8xi8>
    %3 = vector.shape_cast %2 : vector<1x8x8xi8> to vector<8x8xi8>
    %c0_i8 = arith.constant 0 : i8
    %4 = vector.broadcast %c0_i8 : i8 to vector<8x8xi8>
    %5 = arith.cmpi ne, %3, %4 : vector<8x8xi8>
    %6 = arith.truncf %1 : vector<8x128xf32> to vector<8x128xbf16>
    %c0_5 = arith.constant 0 : index
    %c0_6 = arith.constant 0 : index
    %7 = vector.load %arg3[%c0_5, %c0_6] : memref<128x384xbf16, #tpu.memory_space<vmem>>, vector<128x384xbf16>
    %cst = arith.constant dense<0.000000e+00> : vector<8x384xf32>
    %8 = tpu.matmul %6, %7, %cst {dimension_numbers = #tpu.dot_dimension_numbers<[1], [0], [0], [1], [0, 0, 1, 1], [], []>} : vector<8x128xbf16>, vector<128x384xbf16>, vector<8x384xf32> -> vector<8x384xf32>
    %c0_7 = arith.constant 0 : index
    %c0_8 = arith.constant 0 : index
    %9 = vector.load %arg4[%c0_7, %c0_8] : memref<1x384xf32, #tpu.memory_space<vmem>>, vector<1x384xf32>
    %10 = vector.broadcast %9 : vector<1x384xf32> to vector<8x384xf32>
    %11 = arith.addf %8, %10 : vector<8x384xf32>
    %cst_9 = arith.constant 0.000000e+00 : f32
    %12 = vector.broadcast %cst_9 : f32 to vector<8x128xf32>
    %13 = vector.extract_strided_slice %11 {offsets = [0, 0], sizes = [8, 32], strides = [1, 1]} : vector<8x384xf32> to vector<8x32xf32>
    %14 = arith.truncf %13 : vector<8x32xf32> to vector<8x32xbf16>
    %15 = vector.extract_strided_slice %11 {offsets = [0, 128], sizes = [8, 32], strides = [1, 1]} : vector<8x384xf32> to vector<8x32xf32>
    %16 = arith.truncf %15 : vector<8x32xf32> to vector<8x32xbf16>
    %17 = vector.extract_strided_slice %11 {offsets = [0, 256], sizes = [8, 32], strides = [1, 1]} : vector<8x384xf32> to vector<8x32xf32>
    %18 = arith.truncf %17 : vector<8x32xf32> to vector<8x32xbf16>
    %cst_10 = arith.constant dense<0.000000e+00> : vector<8x8xf32>
    %19 = tpu.matmul %14, %16, %cst_10 {dimension_numbers = #tpu.dot_dimension_numbers<[1], [1], [0], [0], [0, 0, 1, 0], [], []>} : vector<8x32xbf16>, vector<8x32xbf16>, vector<8x8xf32> -> vector<8x8xf32>
    %cst_11 = arith.constant 0.176776692 : f32
    %20 = vector.broadcast %cst_11 : f32 to vector<8x8xf32>
    %21 = arith.mulf %19, %20 : vector<8x8xf32>
    %cst_12 = arith.constant -1.000000e+09 : f32
    %22 = vector.broadcast %cst_12 : f32 to vector<8x8xf32>
    %23 = arith.select %5, %22, %21 : vector<8x8xi1>, vector<8x8xf32>
    %cst_13 = arith.constant dense<0xFF800000> : vector<8xf32>
    %24 = vector.multi_reduction <maximumf>, %23, %cst_13 [1] : vector<8x8xf32> to vector<8xf32>
    %25 = vector.shape_cast %24 : vector<8xf32> to vector<8x1xf32>
    %26 = vector.broadcast %25 : vector<8x1xf32> to vector<8x8xf32>
    %27 = arith.subf %23, %26 : vector<8x8xf32>
    %28 = math.exp %27 : vector<8x8xf32>
    %cst_14 = arith.constant dense<0.000000e+00> : vector<8xf32>
    %29 = vector.multi_reduction <add>, %28, %cst_14 [1] : vector<8x8xf32> to vector<8xf32>
    %30 = vector.shape_cast %29 : vector<8xf32> to vector<8x1xf32>
    %31 = tpu.reciprocal %30 {approx = true} : vector<8x1xf32> -> vector<8x1xf32>
    %32 = vector.broadcast %31 : vector<8x1xf32> to vector<8x8xf32>
    %33 = arith.mulf %28, %32 : vector<8x8xf32>
    %34 = arith.truncf %33 : vector<8x8xf32> to vector<8x8xbf16>
    %cst_15 = arith.constant dense<0.000000e+00> : vector<8x32xf32>
    %35 = tpu.matmul %34, %18, %cst_15 {dimension_numbers = #tpu.dot_dimension_numbers<[1], [0], [0], [1], [0, 0, 1, 1], [], []>} : vector<8x8xbf16>, vector<8x32xbf16>, vector<8x32xf32> -> vector<8x32xf32>
    %36 = arith.truncf %35 : vector<8x32xf32> to vector<8x32xbf16>
    %c0_16 = arith.constant 0 : index
    %c0_17 = arith.constant 0 : index
    %37 = vector.load %arg5[%c0_16, %c0_17] : memref<128x128xbf16, #tpu.memory_space<vmem>>, vector<32x128xbf16>
    %cst_18 = arith.constant dense<0.000000e+00> : vector<8x128xf32>
    %38 = tpu.matmul %36, %37, %cst_18 {dimension_numbers = #tpu.dot_dimension_numbers<[1], [0], [0], [1], [0, 0, 1, 1], [], []>} : vector<8x32xbf16>, vector<32x128xbf16>, vector<8x128xf32> -> vector<8x128xf32>
    %39 = arith.addf %12, %38 : vector<8x128xf32>
    %40 = vector.extract_strided_slice %11 {offsets = [0, 32], sizes = [8, 32], strides = [1, 1]} : vector<8x384xf32> to vector<8x32xf32>
    %41 = arith.truncf %40 : vector<8x32xf32> to vector<8x32xbf16>
    %42 = vector.extract_strided_slice %11 {offsets = [0, 160], sizes = [8, 32], strides = [1, 1]} : vector<8x384xf32> to vector<8x32xf32>
    %43 = arith.truncf %42 : vector<8x32xf32> to vector<8x32xbf16>
    %44 = vector.extract_strided_slice %11 {offsets = [0, 288], sizes = [8, 32], strides = [1, 1]} : vector<8x384xf32> to vector<8x32xf32>
    %45 = arith.truncf %44 : vector<8x32xf32> to vector<8x32xbf16>
    %cst_19 = arith.constant dense<0.000000e+00> : vector<8x8xf32>
    %46 = tpu.matmul %41, %43, %cst_19 {dimension_numbers = #tpu.dot_dimension_numbers<[1], [1], [0], [0], [0, 0, 1, 0], [], []>} : vector<8x32xbf16>, vector<8x32xbf16>, vector<8x8xf32> -> vector<8x8xf32>
    %cst_20 = arith.constant 0.176776692 : f32
    %47 = vector.broadcast %cst_20 : f32 to vector<8x8xf32>
    %48 = arith.mulf %46, %47 : vector<8x8xf32>
    %cst_21 = arith.constant -1.000000e+09 : f32
    %49 = vector.broadcast %cst_21 : f32 to vector<8x8xf32>
    %50 = arith.select %5, %49, %48 : vector<8x8xi1>, vector<8x8xf32>
    %cst_22 = arith.constant dense<0xFF800000> : vector<8xf32>
    %51 = vector.multi_reduction <maximumf>, %50, %cst_22 [1] : vector<8x8xf32> to vector<8xf32>
    %52 = vector.shape_cast %51 : vector<8xf32> to vector<8x1xf32>
    %53 = vector.broadcast %52 : vector<8x1xf32> to vector<8x8xf32>
    %54 = arith.subf %50, %53 : vector<8x8xf32>
    %55 = math.exp %54 : vector<8x8xf32>
    %cst_23 = arith.constant dense<0.000000e+00> : vector<8xf32>
    %56 = vector.multi_reduction <add>, %55, %cst_23 [1] : vector<8x8xf32> to vector<8xf32>
    %57 = vector.shape_cast %56 : vector<8xf32> to vector<8x1xf32>
    %58 = tpu.reciprocal %57 {approx = true} : vector<8x1xf32> -> vector<8x1xf32>
    %59 = vector.broadcast %58 : vector<8x1xf32> to vector<8x8xf32>
    %60 = arith.mulf %55, %59 : vector<8x8xf32>
    %61 = arith.truncf %60 : vector<8x8xf32> to vector<8x8xbf16>
    %cst_24 = arith.constant dense<0.000000e+00> : vector<8x32xf32>
    %62 = tpu.matmul %61, %45, %cst_24 {dimension_numbers = #tpu.dot_dimension_numbers<[1], [0], [0], [1], [0, 0, 1, 1], [], []>} : vector<8x8xbf16>, vector<8x32xbf16>, vector<8x32xf32> -> vector<8x32xf32>
    %63 = arith.truncf %62 : vector<8x32xf32> to vector<8x32xbf16>
    %c32 = arith.constant 32 : index
    %c0_25 = arith.constant 0 : index
    %64 = vector.load %arg5[%c32, %c0_25] : memref<128x128xbf16, #tpu.memory_space<vmem>>, vector<32x128xbf16>
    %cst_26 = arith.constant dense<0.000000e+00> : vector<8x128xf32>
    %65 = tpu.matmul %63, %64, %cst_26 {dimension_numbers = #tpu.dot_dimension_numbers<[1], [0], [0], [1], [0, 0, 1, 1], [], []>} : vector<8x32xbf16>, vector<32x128xbf16>, vector<8x128xf32> -> vector<8x128xf32>
    %66 = arith.addf %39, %65 : vector<8x128xf32>
    %67 = vector.extract_strided_slice %11 {offsets = [0, 64], sizes = [8, 32], strides = [1, 1]} : vector<8x384xf32> to vector<8x32xf32>
    %68 = arith.truncf %67 : vector<8x32xf32> to vector<8x32xbf16>
    %69 = vector.extract_strided_slice %11 {offsets = [0, 192], sizes = [8, 32], strides = [1, 1]} : vector<8x384xf32> to vector<8x32xf32>
    %70 = arith.truncf %69 : vector<8x32xf32> to vector<8x32xbf16>
    %71 = vector.extract_strided_slice %11 {offsets = [0, 320], sizes = [8, 32], strides = [1, 1]} : vector<8x384xf32> to vector<8x32xf32>
    %72 = arith.truncf %71 : vector<8x32xf32> to vector<8x32xbf16>
    %cst_27 = arith.constant dense<0.000000e+00> : vector<8x8xf32>
    %73 = tpu.matmul %68, %70, %cst_27 {dimension_numbers = #tpu.dot_dimension_numbers<[1], [1], [0], [0], [0, 0, 1, 0], [], []>} : vector<8x32xbf16>, vector<8x32xbf16>, vector<8x8xf32> -> vector<8x8xf32>
    %cst_28 = arith.constant 0.176776692 : f32
    %74 = vector.broadcast %cst_28 : f32 to vector<8x8xf32>
    %75 = arith.mulf %73, %74 : vector<8x8xf32>
    %cst_29 = arith.constant -1.000000e+09 : f32
    %76 = vector.broadcast %cst_29 : f32 to vector<8x8xf32>
    %77 = arith.select %5, %76, %75 : vector<8x8xi1>, vector<8x8xf32>
    %cst_30 = arith.constant dense<0xFF800000> : vector<8xf32>
    %78 = vector.multi_reduction <maximumf>, %77, %cst_30 [1] : vector<8x8xf32> to vector<8xf32>
    %79 = vector.shape_cast %78 : vector<8xf32> to vector<8x1xf32>
    %80 = vector.broadcast %79 : vector<8x1xf32> to vector<8x8xf32>
    %81 = arith.subf %77, %80 : vector<8x8xf32>
    %82 = math.exp %81 : vector<8x8xf32>
    %cst_31 = arith.constant dense<0.000000e+00> : vector<8xf32>
    %83 = vector.multi_reduction <add>, %82, %cst_31 [1] : vector<8x8xf32> to vector<8xf32>
    %84 = vector.shape_cast %83 : vector<8xf32> to vector<8x1xf32>
    %85 = tpu.reciprocal %84 {approx = true} : vector<8x1xf32> -> vector<8x1xf32>
    %86 = vector.broadcast %85 : vector<8x1xf32> to vector<8x8xf32>
    %87 = arith.mulf %82, %86 : vector<8x8xf32>
    %88 = arith.truncf %87 : vector<8x8xf32> to vector<8x8xbf16>
    %cst_32 = arith.constant dense<0.000000e+00> : vector<8x32xf32>
    %89 = tpu.matmul %88, %72, %cst_32 {dimension_numbers = #tpu.dot_dimension_numbers<[1], [0], [0], [1], [0, 0, 1, 1], [], []>} : vector<8x8xbf16>, vector<8x32xbf16>, vector<8x32xf32> -> vector<8x32xf32>
    %90 = arith.truncf %89 : vector<8x32xf32> to vector<8x32xbf16>
    %c64 = arith.constant 64 : index
    %c0_33 = arith.constant 0 : index
    %91 = vector.load %arg5[%c64, %c0_33] : memref<128x128xbf16, #tpu.memory_space<vmem>>, vector<32x128xbf16>
    %cst_34 = arith.constant dense<0.000000e+00> : vector<8x128xf32>
    %92 = tpu.matmul %90, %91, %cst_34 {dimension_numbers = #tpu.dot_dimension_numbers<[1], [0], [0], [1], [0, 0, 1, 1], [], []>} : vector<8x32xbf16>, vector<32x128xbf16>, vector<8x128xf32> -> vector<8x128xf32>
    %93 = arith.addf %66, %92 : vector<8x128xf32>
    %94 = vector.extract_strided_slice %11 {offsets = [0, 96], sizes = [8, 32], strides = [1, 1]} : vector<8x384xf32> to vector<8x32xf32>
    %95 = arith.truncf %94 : vector<8x32xf32> to vector<8x32xbf16>
    %96 = vector.extract_strided_slice %11 {offsets = [0, 224], sizes = [8, 32], strides = [1, 1]} : vector<8x384xf32> to vector<8x32xf32>
    %97 = arith.truncf %96 : vector<8x32xf32> to vector<8x32xbf16>
    %98 = vector.extract_strided_slice %11 {offsets = [0, 352], sizes = [8, 32], strides = [1, 1]} : vector<8x384xf32> to vector<8x32xf32>
    %99 = arith.truncf %98 : vector<8x32xf32> to vector<8x32xbf16>
    %cst_35 = arith.constant dense<0.000000e+00> : vector<8x8xf32>
    %100 = tpu.matmul %95, %97, %cst_35 {dimension_numbers = #tpu.dot_dimension_numbers<[1], [1], [0], [0], [0, 0, 1, 0], [], []>} : vector<8x32xbf16>, vector<8x32xbf16>, vector<8x8xf32> -> vector<8x8xf32>
    %cst_36 = arith.constant 0.176776692 : f32
    %101 = vector.broadcast %cst_36 : f32 to vector<8x8xf32>
    %102 = arith.mulf %100, %101 : vector<8x8xf32>
    %cst_37 = arith.constant -1.000000e+09 : f32
    %103 = vector.broadcast %cst_37 : f32 to vector<8x8xf32>
    %104 = arith.select %5, %103, %102 : vector<8x8xi1>, vector<8x8xf32>
    %cst_38 = arith.constant dense<0xFF800000> : vector<8xf32>
    %105 = vector.multi_reduction <maximumf>, %104, %cst_38 [1] : vector<8x8xf32> to vector<8xf32>
    %106 = vector.shape_cast %105 : vector<8xf32> to vector<8x1xf32>
    %107 = vector.broadcast %106 : vector<8x1xf32> to vector<8x8xf32>
    %108 = arith.subf %104, %107 : vector<8x8xf32>
    %109 = math.exp %108 : vector<8x8xf32>
    %cst_39 = arith.constant dense<0.000000e+00> : vector<8xf32>
    %110 = vector.multi_reduction <add>, %109, %cst_39 [1] : vector<8x8xf32> to vector<8xf32>
    %111 = vector.shape_cast %110 : vector<8xf32> to vector<8x1xf32>
    %112 = tpu.reciprocal %111 {approx = true} : vector<8x1xf32> -> vector<8x1xf32>
    %113 = vector.broadcast %112 : vector<8x1xf32> to vector<8x8xf32>
    %114 = arith.mulf %109, %113 : vector<8x8xf32>
    %115 = arith.truncf %114 : vector<8x8xf32> to vector<8x8xbf16>
    %cst_40 = arith.constant dense<0.000000e+00> : vector<8x32xf32>
    %116 = tpu.matmul %115, %99, %cst_40 {dimension_numbers = #tpu.dot_dimension_numbers<[1], [0], [0], [1], [0, 0, 1, 1], [], []>} : vector<8x8xbf16>, vector<8x32xbf16>, vector<8x32xf32> -> vector<8x32xf32>
    %117 = arith.truncf %116 : vector<8x32xf32> to vector<8x32xbf16>
    %c96 = arith.constant 96 : index
    %c0_41 = arith.constant 0 : index
    %118 = vector.load %arg5[%c96, %c0_41] : memref<128x128xbf16, #tpu.memory_space<vmem>>, vector<32x128xbf16>
    %cst_42 = arith.constant dense<0.000000e+00> : vector<8x128xf32>
    %119 = tpu.matmul %117, %118, %cst_42 {dimension_numbers = #tpu.dot_dimension_numbers<[1], [0], [0], [1], [0, 0, 1, 1], [], []>} : vector<8x32xbf16>, vector<32x128xbf16>, vector<8x128xf32> -> vector<8x128xf32>
    %120 = arith.addf %93, %119 : vector<8x128xf32>
    %c0_43 = arith.constant 0 : index
    %c0_44 = arith.constant 0 : index
    %121 = vector.load %arg6[%c0_43, %c0_44] : memref<1x128xf32, #tpu.memory_space<vmem>>, vector<1x128xf32>
    %122 = vector.broadcast %121 : vector<1x128xf32> to vector<8x128xf32>
    %123 = arith.addf %120, %122 : vector<8x128xf32>
    %124 = arith.addf %123, %1 : vector<8x128xf32>
    %c0_45 = arith.constant 0 : index
    %c0_46 = arith.constant 0 : index
    %125 = vector.load %arg7[%c0_45, %c0_46] : memref<1x128xf32, #tpu.memory_space<vmem>>, vector<1x128xf32>
    %c0_47 = arith.constant 0 : index
    %c0_48 = arith.constant 0 : index
    %126 = vector.load %arg8[%c0_47, %c0_48] : memref<1x128xf32, #tpu.memory_space<vmem>>, vector<1x128xf32>
    %cst_49 = arith.constant dense<0.000000e+00> : vector<8xf32>
    %127 = vector.multi_reduction <add>, %124, %cst_49 [1] : vector<8x128xf32> to vector<8xf32>
    %128 = vector.shape_cast %127 : vector<8xf32> to vector<8x1xf32>
    %cst_50 = arith.constant 1.280000e+02 : f32
    %129 = vector.broadcast %cst_50 : f32 to vector<8x1xf32>
    %130 = arith.divf %128, %129 : vector<8x1xf32>
    %131 = vector.broadcast %130 : vector<8x1xf32> to vector<8x128xf32>
    %132 = arith.subf %124, %131 : vector<8x128xf32>
    %133 = arith.mulf %132, %132 : vector<8x128xf32>
    %cst_51 = arith.constant dense<0.000000e+00> : vector<8xf32>
    %134 = vector.multi_reduction <add>, %133, %cst_51 [1] : vector<8x128xf32> to vector<8xf32>
    %135 = vector.shape_cast %134 : vector<8xf32> to vector<8x1xf32>
    %cst_52 = arith.constant 1.280000e+02 : f32
    %136 = vector.broadcast %cst_52 : f32 to vector<8x1xf32>
    %137 = arith.divf %135, %136 : vector<8x1xf32>
    %cst_53 = arith.constant 9.99999974E-6 : f32
    %138 = vector.broadcast %cst_53 : f32 to vector<8x1xf32>
    %139 = arith.addf %137, %138 : vector<8x1xf32>
    %140 = math.rsqrt %139 : vector<8x1xf32>
    %141 = vector.broadcast %140 : vector<8x1xf32> to vector<8x128xf32>
    %142 = arith.mulf %132, %141 : vector<8x128xf32>
    %143 = vector.broadcast %125 : vector<1x128xf32> to vector<8x128xf32>
    %144 = arith.mulf %142, %143 : vector<8x128xf32>
    %145 = vector.broadcast %126 : vector<1x128xf32> to vector<8x128xf32>
    %146 = arith.addf %144, %145 : vector<8x128xf32>
    %147 = arith.truncf %146 : vector<8x128xf32> to vector<8x128xbf16>
    %c0_54 = arith.constant 0 : index
    %c0_55 = arith.constant 0 : index
    %148 = vector.load %arg9[%c0_54, %c0_55] : memref<128x256xbf16, #tpu.memory_space<vmem>>, vector<128x256xbf16>
    %cst_56 = arith.constant dense<0.000000e+00> : vector<8x256xf32>
    %149 = tpu.matmul %147, %148, %cst_56 {dimension_numbers = #tpu.dot_dimension_numbers<[1], [0], [0], [1], [0, 0, 1, 1], [], []>} : vector<8x128xbf16>, vector<128x256xbf16>, vector<8x256xf32> -> vector<8x256xf32>
    %c0_57 = arith.constant 0 : index
    %c0_58 = arith.constant 0 : index
    %150 = vector.load %arg10[%c0_57, %c0_58] : memref<1x256xf32, #tpu.memory_space<vmem>>, vector<1x256xf32>
    %151 = vector.broadcast %150 : vector<1x256xf32> to vector<8x256xf32>
    %152 = arith.addf %149, %151 : vector<8x256xf32>
    %cst_59 = arith.constant 0.000000e+00 : f32
    %153 = vector.broadcast %cst_59 : f32 to vector<8x256xf32>
    %154 = arith.maximumf %152, %153 : vector<8x256xf32>
    %155 = arith.truncf %154 : vector<8x256xf32> to vector<8x256xbf16>
    %c0_60 = arith.constant 0 : index
    %c0_61 = arith.constant 0 : index
    %156 = vector.load %arg11[%c0_60, %c0_61] : memref<256x128xbf16, #tpu.memory_space<vmem>>, vector<256x128xbf16>
    %cst_62 = arith.constant dense<0.000000e+00> : vector<8x128xf32>
    %157 = tpu.matmul %155, %156, %cst_62 {dimension_numbers = #tpu.dot_dimension_numbers<[1], [0], [0], [1], [0, 0, 1, 1], [], []>} : vector<8x256xbf16>, vector<256x128xbf16>, vector<8x128xf32> -> vector<8x128xf32>
    %c0_63 = arith.constant 0 : index
    %c0_64 = arith.constant 0 : index
    %158 = vector.load %arg12[%c0_63, %c0_64] : memref<1x128xf32, #tpu.memory_space<vmem>>, vector<1x128xf32>
    %159 = vector.broadcast %158 : vector<1x128xf32> to vector<8x128xf32>
    %160 = arith.addf %157, %159 : vector<8x128xf32>
    %161 = arith.addf %160, %146 : vector<8x128xf32>
    %c0_65 = arith.constant 0 : index
    %c0_66 = arith.constant 0 : index
    %162 = vector.load %arg13[%c0_65, %c0_66] : memref<1x128xf32, #tpu.memory_space<vmem>>, vector<1x128xf32>
    %c0_67 = arith.constant 0 : index
    %c0_68 = arith.constant 0 : index
    %163 = vector.load %arg14[%c0_67, %c0_68] : memref<1x128xf32, #tpu.memory_space<vmem>>, vector<1x128xf32>
    %cst_69 = arith.constant dense<0.000000e+00> : vector<8xf32>
    %164 = vector.multi_reduction <add>, %161, %cst_69 [1] : vector<8x128xf32> to vector<8xf32>
    %165 = vector.shape_cast %164 : vector<8xf32> to vector<8x1xf32>
    %cst_70 = arith.constant 1.280000e+02 : f32
    %166 = vector.broadcast %cst_70 : f32 to vector<8x1xf32>
    %167 = arith.divf %165, %166 : vector<8x1xf32>
    %168 = vector.broadcast %167 : vector<8x1xf32> to vector<8x128xf32>
    %169 = arith.subf %161, %168 : vector<8x128xf32>
    %170 = arith.mulf %169, %169 : vector<8x128xf32>
    %cst_71 = arith.constant dense<0.000000e+00> : vector<8xf32>
    %171 = vector.multi_reduction <add>, %170, %cst_71 [1] : vector<8x128xf32> to vector<8xf32>
    %172 = vector.shape_cast %171 : vector<8xf32> to vector<8x1xf32>
    %cst_72 = arith.constant 1.280000e+02 : f32
    %173 = vector.broadcast %cst_72 : f32 to vector<8x1xf32>
    %174 = arith.divf %172, %173 : vector<8x1xf32>
    %cst_73 = arith.constant 9.99999974E-6 : f32
    %175 = vector.broadcast %cst_73 : f32 to vector<8x1xf32>
    %176 = arith.addf %174, %175 : vector<8x1xf32>
    %177 = math.rsqrt %176 : vector<8x1xf32>
    %178 = vector.broadcast %177 : vector<8x1xf32> to vector<8x128xf32>
    %179 = arith.mulf %169, %178 : vector<8x128xf32>
    %180 = vector.broadcast %162 : vector<1x128xf32> to vector<8x128xf32>
    %181 = arith.mulf %179, %180 : vector<8x128xf32>
    %182 = vector.broadcast %163 : vector<1x128xf32> to vector<8x128xf32>
    %183 = arith.addf %181, %182 : vector<8x128xf32>
    %c0_74 = arith.constant 0 : index
    %c0_75 = arith.constant 0 : index
    %c0_76 = arith.constant 0 : index
    %184 = vector.load %arg15[%c0_74, %c0_75, %c0_76] : memref<1x8x128xf32, #tpu.memory_space<vmem>>, vector<1x8x128xf32>
    %185 = vector.shape_cast %184 : vector<1x8x128xf32> to vector<8x128xf32>
    %186 = vector.shape_cast %183 : vector<8x128xf32> to vector<1x8x128xf32>
    tpu.vector_store %arg15[%c0_74, %c0_75, %c0_76], %186 {strides = array<i32>} : memref<1x8x128xf32, #tpu.memory_space<vmem>>, vector<1x8x128xf32>,
    return
  }
  func.func @transform_0(%arg0: i32) -> (i32, i32, i32) {
    %c0_i32 = arith.constant 0 : i32
    %c0_i32_0 = arith.constant 0 : i32
    %c0_i32_1 = arith.constant 0 : i32
    return %arg0, %c0_i32, %c0_i32_0 : i32, i32, i32
  }
  func.func @transform_1(%arg0: i32) -> (i32, i32, i32) {
    %c0_i32 = arith.constant 0 : i32
    %c0_i32_0 = arith.constant 0 : i32
    %c0_i32_1 = arith.constant 0 : i32
    return %arg0, %c0_i32, %c0_i32_0 : i32, i32, i32
  }
  func.func @transform_2(%arg0: i32) -> (i32, i32) {
    %c0_i32 = arith.constant 0 : i32
    %c0_i32_0 = arith.constant 0 : i32
    %c0_i32_1 = arith.constant 0 : i32
    return %c0_i32, %c0_i32_0 : i32, i32
  }
  func.func @transform_3(%arg0: i32) -> (i32, i32) {
    %c0_i32 = arith.constant 0 : i32
    %c0_i32_0 = arith.constant 0 : i32
    %c0_i32_1 = arith.constant 0 : i32
    return %c0_i32, %c0_i32_0 : i32, i32
  }
  func.func @transform_4(%arg0: i32) -> (i32, i32) {
    %c0_i32 = arith.constant 0 : i32
    %c0_i32_0 = arith.constant 0 : i32
    %c0_i32_1 = arith.constant 0 : i32
    return %c0_i32, %c0_i32_0 : i32, i32
  }
  func.func @transform_5(%arg0: i32) -> (i32, i32) {
    %c0_i32 = arith.constant 0 : i32
    %c0_i32_0 = arith.constant 0 : i32
    %c0_i32_1 = arith.constant 0 : i32
    return %c0_i32, %c0_i32_0 : i32, i32
  }
  func.func @transform_6(%arg0: i32) -> (i32, i32) {
    %c0_i32 = arith.constant 0 : i32
    %c0_i32_0 = arith.constant 0 : i32
    %c0_i32_1 = arith.constant 0 : i32
    return %c0_i32, %c0_i32_0 : i32, i32
  }
  func.func @transform_7(%arg0: i32) -> (i32, i32) {
    %c0_i32 = arith.constant 0 : i32
    %c0_i32_0 = arith.constant 0 : i32
    %c0_i32_1 = arith.constant 0 : i32
    return %c0_i32, %c0_i32_0 : i32, i32
  }
  func.func @transform_8(%arg0: i32) -> (i32, i32) {
    %c0_i32 = arith.constant 0 : i32
    %c0_i32_0 = arith.constant 0 : i32
    %c0_i32_1 = arith.constant 0 : i32
    return %c0_i32, %c0_i32_0 : i32, i32
  }
  func.func @transform_9(%arg0: i32) -> (i32, i32) {
    %c0_i32 = arith.constant 0 : i32
    %c0_i32_0 = arith.constant 0 : i32
    %c0_i32_1 = arith.constant 0 : i32
    return %c0_i32, %c0_i32_0 : i32, i32
  }
  func.func @transform_10(%arg0: i32) -> (i32, i32) {
    %c0_i32 = arith.constant 0 : i32
    %c0_i32_0 = arith.constant 0 : i32
    %c0_i32_1 = arith.constant 0 : i32
    return %c0_i32, %c0_i32_0 : i32, i32
  }
  func.func @transform_11(%arg0: i32) -> (i32, i32) {
    %c0_i32 = arith.constant 0 : i32
    %c0_i32_0 = arith.constant 0 : i32
    %c0_i32_1 = arith.constant 0 : i32
    return %c0_i32, %c0_i32_0 : i32, i32
  }
  func.func @transform_12(%arg0: i32) -> (i32, i32) {
    %c0_i32 = arith.constant 0 : i32
    %c0_i32_0 = arith.constant 0 : i32
    %c0_i32_1 = arith.constant 0 : i32
    return %c0_i32, %c0_i32_0 : i32, i32
  }
  func.func @transform_13(%arg0: i32) -> (i32, i32) {
    %c0_i32 = arith.constant 0 : i32
    %c0_i32_0 = arith.constant 0 : i32
    %c0_i32_1 = arith.constant 0 : i32
    return %c0_i32, %c0_i32_0 : i32, i32
  }
  func.func @transform_14(%arg0: i32) -> (i32, i32, i32) {
    %c0_i32 = arith.constant 0 : i32
    %c0_i32_0 = arith.constant 0 : i32
    %c0_i32_1 = arith.constant 0 : i32
    return %arg0, %c0_i32, %c0_i32_0 : i32, i32, i32
  }
}

module attributes {stable_mosaic.version = 11 : i64} {
  func.func @_encoder_layer_kernel(%arg0: i32, %arg1: memref<1x8x128xf32, #tpu.memory_space<vmem>>, %arg2: memref<1x8x8xi8, #tpu.memory_space<vmem>>, %arg3: memref<128x384xbf16, #tpu.memory_space<vmem>>, %arg4: memref<1x384xf32, #tpu.memory_space<vmem>>, %arg5: memref<128x128xbf16, #tpu.memory_space<vmem>>, %arg6: memref<1x128xf32, #tpu.memory_space<vmem>>, %arg7: memref<1x128xf32, #tpu.memory_space<vmem>>, %arg8: memref<1x128xf32, #tpu.memory_space<vmem>>, %arg9: memref<128x256xbf16, #tpu.memory_space<vmem>>, %arg10: memref<1x256xf32, #tpu.memory_space<vmem>>, %arg11: memref<256x128xbf16, #tpu.memory_space<vmem>>, %arg12: memref<1x128xf32, #tpu.memory_space<vmem>>, %arg13: memref<1x128xf32, #tpu.memory_space<vmem>>, %arg14: memref<1x128xf32, #tpu.memory_space<vmem>>, %arg15: memref<1x8x128xf32, #tpu.memory_space<vmem>>) attributes {dimension_semantics = [#tpu.dimension_semantics<parallel>], iteration_bounds = array<i64: 2>, scalar_prefetch = 0 : i64, scratch_operands = 0 : i64, tpu.core_type = #tpu.core_type<tc>, window_params = [{transform_indices = @transform_0, window_bounds = array<i64: 1, 8, 128>}, {transform_indices = @transform_1, window_bounds = array<i64: 1, 8, 8>}, {pipeline_mode = #tpu.pipeline_mode<synchronous>, transform_indices = @transform_2, window_bounds = array<i64: 128, 384>}, {pipeline_mode = #tpu.pipeline_mode<synchronous>, transform_indices = @transform_3, window_bounds = array<i64: 1, 384>}, {pipeline_mode = #tpu.pipeline_mode<synchronous>, transform_indices = @transform_4, window_bounds = array<i64: 128, 128>}, {pipeline_mode = #tpu.pipeline_mode<synchronous>, transform_indices = @transform_5, window_bounds = array<i64: 1, 128>}, {pipeline_mode = #tpu.pipeline_mode<synchronous>, transform_indices = @transform_6, window_bounds = array<i64: 1, 128>}, {pipeline_mode = #tpu.pipeline_mode<synchronous>, transform_indices = @transform_7, window_bounds = array<i64: 1, 128>}, {pipeline_mode = #tpu.pipeline_mode<synchronous>, transform_indices = @transform_8, window_bounds = array<i64: 128, 256>}, {pipeline_mode = #tpu.pipeline_mode<synchronous>, transform_indices = @transform_9, window_bounds = array<i64: 1, 256>}, {pipeline_mode = #tpu.pipeline_mode<synchronous>, transform_indices = @transform_10, window_bounds = array<i64: 256, 128>}, {pipeline_mode = #tpu.pipeline_mode<synchronous>, transform_indices = @transform_11, window_bounds = array<i64: 1, 128>}, {pipeline_mode = #tpu.pipeline_mode<synchronous>, transform_indices = @transform_12, window_bounds = array<i64: 1, 128>}, {pipeline_mode = #tpu.pipeline_mode<synchronous>, transform_indices = @transform_13, window_bounds = array<i64: 1, 128>}, {transform_indices = @transform_14, window_bounds = array<i64: 1, 8, 128>}]} {
    %c0 = arith.constant 0 : index
    %c0_0 = arith.constant 0 : index
    %c0_1 = arith.constant 0 : index
    %0 = vector.load %arg1[%c0, %c0_0, %c0_1] : memref<1x8x128xf32, #tpu.memory_space<vmem>>, vector<1x8x128xf32>
    %1 = vector.shape_cast %0 : vector<1x8x128xf32> to vector<8x128xf32>
    %c0_2 = arith.constant 0 : index
    %c0_3 = arith.constant 0 : index
    %c0_4 = arith.constant 0 : index
    %2 = vector.load %arg2[%c0_2, %c0_3, %c0_4] : memref<1x8x8xi8, #tpu.memory_space<vmem>>, vector<1x8x8xi8>
    %3 = vector.shape_cast %2 : vector<1x8x8xi8> to vector<8x8xi8>
    %c0_i8 = arith.constant 0 : i8
    %4 = vector.broadcast %c0_i8 : i8 to vector<8x8xi8>
    %5 = arith.cmpi ne, %3, %4 : vector<8x8xi8>
    %6 = arith.truncf %1 : vector<8x128xf32> to vector<8x128xbf16>
    %c0_5 = arith.constant 0 : index
    %c0_6 = arith.constant 0 : index
    %7 = vector.load %arg3[%c0_5, %c0_6] : memref<128x384xbf16, #tpu.memory_space<vmem>>, vector<128x384xbf16>
    %cst = arith.constant dense<0.000000e+00> : vector<8x384xf32>
    %8 = tpu.matmul %6, %7, %cst {dimension_numbers = #tpu.dot_dimension_numbers<[1], [0], [0], [1], [0, 0, 1, 1], [], []>} : vector<8x128xbf16>, vector<128x384xbf16>, vector<8x384xf32> -> vector<8x384xf32>
    %c0_7 = arith.constant 0 : index
    %c0_8 = arith.constant 0 : index
    %9 = vector.load %arg4[%c0_7, %c0_8] : memref<1x384xf32, #tpu.memory_space<vmem>>, vector<1x384xf32>
    %10 = vector.broadcast %9 : vector<1x384xf32> to vector<8x384xf32>
    %11 = arith.addf %8, %10 : vector<8x384xf32>
    %cst_9 = arith.constant 0.000000e+00 : f32
    %12 = vector.broadcast %cst_9 : f32 to vector<8x128xf32>
    %13 = vector.extract_strided_slice %11 {offsets = [0, 0], sizes = [8, 32], strides = [1, 1]} : vector<8x384xf32> to vector<8x32xf32>
    %14 = arith.truncf %13 : vector<8x32xf32> to vector<8x32xbf16>
    %15 = vector.extract_strided_slice %11 {offsets = [0, 128], sizes = [8, 32], strides = [1, 1]} : vector<8x384xf32> to vector<8x32xf32>
    %16 = arith.truncf %15 : vector<8x32xf32> to vector<8x32xbf16>
    %17 = vector.extract_strided_slice %11 {offsets = [0, 256], sizes = [8, 32], strides = [1, 1]} : vector<8x384xf32> to vector<8x32xf32>
    %18 = arith.truncf %17 : vector<8x32xf32> to vector<8x32xbf16>
    %cst_10 = arith.constant dense<0.000000e+00> : vector<8x8xf32>
    %19 = tpu.matmul %14, %16, %cst_10 {dimension_numbers = #tpu.dot_dimension_numbers<[1], [1], [0], [0], [0, 0, 1, 0], [], []>} : vector<8x32xbf16>, vector<8x32xbf16>, vector<8x8xf32> -> vector<8x8xf32>
    %cst_11 = arith.constant 0.176776692 : f32
    %20 = vector.broadcast %cst_11 : f32 to vector<8x8xf32>
    %21 = arith.mulf %19, %20 : vector<8x8xf32>
    %cst_12 = arith.constant -1.000000e+09 : f32
    %22 = vector.broadcast %cst_12 : f32 to vector<8x8xf32>
    %23 = arith.select %5, %22, %21 : vector<8x8xi1>, vector<8x8xf32>
    %cst_13 = arith.constant dense<0xFF800000> : vector<8xf32>
    %24 = vector.multi_reduction <maximumf>, %23, %cst_13 [1] : vector<8x8xf32> to vector<8xf32>
    %25 = vector.shape_cast %24 : vector<8xf32> to vector<8x1xf32>
    %26 = vector.broadcast %25 : vector<8x1xf32> to vector<8x8xf32>
    %27 = arith.subf %23, %26 : vector<8x8xf32>
    %28 = math.exp %27 : vector<8x8xf32>
    %cst_14 = arith.constant dense<0.000000e+00> : vector<8xf32>
    %29 = vector.multi_reduction <add>, %28, %cst_14 [1] : vector<8x8xf32> to vector<8xf32>
    %30 = vector.shape_cast %29 : vector<8xf32> to vector<8x1xf32>
    %31 = tpu.reciprocal %30 {approx = true} : vector<8x1xf32> -> vector<8x1xf32>
    %32 = vector.broadcast %31 : vector<8x1xf32> to vector<8x8xf32>
    %33 = arith.mulf %28, %32 : vector<8x8xf32>
    %34 = arith.truncf %33 : vector<8x8xf32> to vector<8x8xbf16>
    %cst_15 = arith.constant dense<0.000000e+00> : vector<8x32xf32>
    %35 = tpu.matmul %34, %18, %cst_15 {dimension_numbers = #tpu.dot_dimension_numbers<[1], [0], [0], [1], [0, 0, 1, 1], [], []>} : vector<8x8xbf16>, vector<8x32xbf16>, vector<8x32xf32> -> vector<8x32xf32>
    %36 = arith.truncf %35 : vector<8x32xf32> to vector<8x32xbf16>
    %c0_16 = arith.constant 0 : index
    %c0_17 = arith.constant 0 : index
    %37 = vector.load %arg5[%c0_16, %c0_17] : memref<128x128xbf16, #tpu.memory_space<vmem>>, vector<32x128xbf16>
    %cst_18 = arith.constant dense<0.000000e+00> : vector<8x128xf32>
    %38 = tpu.matmul %36, %37, %cst_18 {dimension_numbers = #tpu.dot_dimension_numbers<[1], [0], [0], [1], [0, 0, 1, 1], [], []>} : vector<8x32xbf16>, vector<32x128xbf16>, vector<8x128xf32> -> vector<8x128xf32>
    %39 = arith.addf %12, %38 : vector<8x128xf32>
    %40 = vector.extract_strided_slice %11 {offsets = [0, 32], sizes = [8, 32], strides = [1, 1]} : vector<8x384xf32> to vector<8x32xf32>
    %41 = arith.truncf %40 : vector<8x32xf32> to vector<8x32xbf16>
    %42 = vector.extract_strided_slice %11 {offsets = [0, 160], sizes = [8, 32], strides = [1, 1]} : vector<8x384xf32> to vector<8x32xf32>
    %43 = arith.truncf %42 : vector<8x32xf32> to vector<8x32xbf16>
    %44 = vector.extract_strided_slice %11 {offsets = [0, 288], sizes = [8, 32], strides = [1, 1]} : vector<8x384xf32> to vector<8x32xf32>
    %45 = arith.truncf %44 : vector<8x32xf32> to vector<8x32xbf16>
    %cst_19 = arith.constant dense<0.000000e+00> : vector<8x8xf32>
    %46 = tpu.matmul %41, %43, %cst_19 {dimension_numbers = #tpu.dot_dimension_numbers<[1], [1], [0], [0], [0, 0, 1, 0], [], []>} : vector<8x32xbf16>, vector<8x32xbf16>, vector<8x8xf32> -> vector<8x8xf32>
    %cst_20 = arith.constant 0.176776692 : f32
    %47 = vector.broadcast %cst_20 : f32 to vector<8x8xf32>
    %48 = arith.mulf %46, %47 : vector<8x8xf32>
    %cst_21 = arith.constant -1.000000e+09 : f32
    %49 = vector.broadcast %cst_21 : f32 to vector<8x8xf32>
    %50 = arith.select %5, %49, %48 : vector<8x8xi1>, vector<8x8xf32>
    %cst_22 = arith.constant dense<0xFF800000> : vector<8xf32>
    %51 = vector.multi_reduction <maximumf>, %50, %cst_22 [1] : vector<8x8xf32> to vector<8xf32>
    %52 = vector.shape_cast %51 : vector<8xf32> to vector<8x1xf32>
    %53 = vector.broadcast %52 : vector<8x1xf32> to vector<8x8xf32>
    %54 = arith.subf %50, %53 : vector<8x8xf32>
    %55 = math.exp %54 : vector<8x8xf32>
    %cst_23 = arith.constant dense<0.000000e+00> : vector<8xf32>
    %56 = vector.multi_reduction <add>, %55, %cst_23 [1] : vector<8x8xf32> to vector<8xf32>
    %57 = vector.shape_cast %56 : vector<8xf32> to vector<8x1xf32>
    %58 = tpu.reciprocal %57 {approx = true} : vector<8x1xf32> -> vector<8x1xf32>
    %59 = vector.broadcast %58 : vector<8x1xf32> to vector<8x8xf32>
    %60 = arith.mulf %55, %59 : vector<8x8xf32>
    %61 = arith.truncf %60 : vector<8x8xf32> to vector<8x8xbf16>
    %cst_24 = arith.constant dense<0.000000e+00> : vector<8x32xf32>
    %62 = tpu.matmul %61, %45, %cst_24 {dimension_numbers = #tpu.dot_dimension_numbers<[1], [0], [0], [1], [0, 0, 1, 1], [], []>} : vector<8x8xbf16>, vector<8x32xbf16>, vector<8x32xf32> -> vector<8x32xf32>
    %63 = arith.truncf %62 : vector<8x32xf32> to vector<8x32xbf16>
    %c32 = arith.constant 32 : index
    %c0_25 = arith.constant 0 : index
    %64 = vector.load %arg5[%c32, %c0_25] : memref<128x128xbf16, #tpu.memory_space<vmem>>, vector<32x128xbf16>
    %cst_26 = arith.constant dense<0.000000e+00> : vector<8x128xf32>
    %65 = tpu.matmul %63, %64, %cst_26 {dimension_numbers = #tpu.dot_dimension_numbers<[1], [0], [0], [1], [0, 0, 1, 1], [], []>} : vector<8x32xbf16>, vector<32x128xbf16>, vector<8x128xf32> -> vector<8x128xf32>
    %66 = arith.addf %39, %65 : vector<8x128xf32>
    %67 = vector.extract_strided_slice %11 {offsets = [0, 64], sizes = [8, 32], strides = [1, 1]} : vector<8x384xf32> to vector<8x32xf32>
    %68 = arith.truncf %67 : vector<8x32xf32> to vector<8x32xbf16>
    %69 = vector.extract_strided_slice %11 {offsets = [0, 192], sizes = [8, 32], strides = [1, 1]} : vector<8x384xf32> to vector<8x32xf32>
    %70 = arith.truncf %69 : vector<8x32xf32> to vector<8x32xbf16>
    %71 = vector.extract_strided_slice %11 {offsets = [0, 320], sizes = [8, 32], strides = [1, 1]} : vector<8x384xf32> to vector<8x32xf32>
    %72 = arith.truncf %71 : vector<8x32xf32> to vector<8x32xbf16>
    %cst_27 = arith.constant dense<0.000000e+00> : vector<8x8xf32>
    %73 = tpu.matmul %68, %70, %cst_27 {dimension_numbers = #tpu.dot_dimension_numbers<[1], [1], [0], [0], [0, 0, 1, 0], [], []>} : vector<8x32xbf16>, vector<8x32xbf16>, vector<8x8xf32> -> vector<8x8xf32>
    %cst_28 = arith.constant 0.176776692 : f32
    %74 = vector.broadcast %cst_28 : f32 to vector<8x8xf32>
    %75 = arith.mulf %73, %74 : vector<8x8xf32>
    %cst_29 = arith.constant -1.000000e+09 : f32
    %76 = vector.broadcast %cst_29 : f32 to vector<8x8xf32>
    %77 = arith.select %5, %76, %75 : vector<8x8xi1>, vector<8x8xf32>
    %cst_30 = arith.constant dense<0xFF800000> : vector<8xf32>
    %78 = vector.multi_reduction <maximumf>, %77, %cst_30 [1] : vector<8x8xf32> to vector<8xf32>
    %79 = vector.shape_cast %78 : vector<8xf32> to vector<8x1xf32>
    %80 = vector.broadcast %79 : vector<8x1xf32> to vector<8x8xf32>
    %81 = arith.subf %77, %80 : vector<8x8xf32>
    %82 = math.exp %81 : vector<8x8xf32>
    %cst_31 = arith.constant dense<0.000000e+00> : vector<8xf32>
    %83 = vector.multi_reduction <add>, %82, %cst_31 [1] : vector<8x8xf32> to vector<8xf32>
    %84 = vector.shape_cast %83 : vector<8xf32> to vector<8x1xf32>
    %85 = tpu.reciprocal %84 {approx = true} : vector<8x1xf32> -> vector<8x1xf32>
    %86 = vector.broadcast %85 : vector<8x1xf32> to vector<8x8xf32>
    %87 = arith.mulf %82, %86 : vector<8x8xf32>
    %88 = arith.truncf %87 : vector<8x8xf32> to vector<8x8xbf16>
    %cst_32 = arith.constant dense<0.000000e+00> : vector<8x32xf32>
    %89 = tpu.matmul %88, %72, %cst_32 {dimension_numbers = #tpu.dot_dimension_numbers<[1], [0], [0], [1], [0, 0, 1, 1], [], []>} : vector<8x8xbf16>, vector<8x32xbf16>, vector<8x32xf32> -> vector<8x32xf32>
    %90 = arith.truncf %89 : vector<8x32xf32> to vector<8x32xbf16>
    %c64 = arith.constant 64 : index
    %c0_33 = arith.constant 0 : index
    %91 = vector.load %arg5[%c64, %c0_33] : memref<128x128xbf16, #tpu.memory_space<vmem>>, vector<32x128xbf16>
    %cst_34 = arith.constant dense<0.000000e+00> : vector<8x128xf32>
    %92 = tpu.matmul %90, %91, %cst_34 {dimension_numbers = #tpu.dot_dimension_numbers<[1], [0], [0], [1], [0, 0, 1, 1], [], []>} : vector<8x32xbf16>, vector<32x128xbf16>, vector<8x128xf32> -> vector<8x128xf32>
    %93 = arith.addf %66, %92 : vector<8x128xf32>
    %94 = vector.extract_strided_slice %11 {offsets = [0, 96], sizes = [8, 32], strides = [1, 1]} : vector<8x384xf32> to vector<8x32xf32>
    %95 = arith.truncf %94 : vector<8x32xf32> to vector<8x32xbf16>
    %96 = vector.extract_strided_slice %11 {offsets = [0, 224], sizes = [8, 32], strides = [1, 1]} : vector<8x384xf32> to vector<8x32xf32>
    %97 = arith.truncf %96 : vector<8x32xf32> to vector<8x32xbf16>
    %98 = vector.extract_strided_slice %11 {offsets = [0, 352], sizes = [8, 32], strides = [1, 1]} : vector<8x384xf32> to vector<8x32xf32>
    %99 = arith.truncf %98 : vector<8x32xf32> to vector<8x32xbf16>
    %cst_35 = arith.constant dense<0.000000e+00> : vector<8x8xf32>
    %100 = tpu.matmul %95, %97, %cst_35 {dimension_numbers = #tpu.dot_dimension_numbers<[1], [1], [0], [0], [0, 0, 1, 0], [], []>} : vector<8x32xbf16>, vector<8x32xbf16>, vector<8x8xf32> -> vector<8x8xf32>
    %cst_36 = arith.constant 0.176776692 : f32
    %101 = vector.broadcast %cst_36 : f32 to vector<8x8xf32>
    %102 = arith.mulf %100, %101 : vector<8x8xf32>
    %cst_37 = arith.constant -1.000000e+09 : f32
    %103 = vector.broadcast %cst_37 : f32 to vector<8x8xf32>
    %104 = arith.select %5, %103, %102 : vector<8x8xi1>, vector<8x8xf32>
    %cst_38 = arith.constant dense<0xFF800000> : vector<8xf32>
    %105 = vector.multi_reduction <maximumf>, %104, %cst_38 [1] : vector<8x8xf32> to vector<8xf32>
    %106 = vector.shape_cast %105 : vector<8xf32> to vector<8x1xf32>
    %107 = vector.broadcast %106 : vector<8x1xf32> to vector<8x8xf32>
    %108 = arith.subf %104, %107 : vector<8x8xf32>
    %109 = math.exp %108 : vector<8x8xf32>
    %cst_39 = arith.constant dense<0.000000e+00> : vector<8xf32>
    %110 = vector.multi_reduction <add>, %109, %cst_39 [1] : vector<8x8xf32> to vector<8xf32>
    %111 = vector.shape_cast %110 : vector<8xf32> to vector<8x1xf32>
    %112 = tpu.reciprocal %111 {approx = true} : vector<8x1xf32> -> vector<8x1xf32>
    %113 = vector.broadcast %112 : vector<8x1xf32> to vector<8x8xf32>
    %114 = arith.mulf %109, %113 : vector<8x8xf32>
    %115 = arith.truncf %114 : vector<8x8xf32> to vector<8x8xbf16>
    %cst_40 = arith.constant dense<0.000000e+00> : vector<8x32xf32>
    %116 = tpu.matmul %115, %99, %cst_40 {dimension_numbers = #tpu.dot_dimension_numbers<[1], [0], [0], [1], [0, 0, 1, 1], [], []>} : vector<8x8xbf16>, vector<8x32xbf16>, vector<8x32xf32> -> vector<8x32xf32>
    %117 = arith.truncf %116 : vector<8x32xf32> to vector<8x32xbf16>
    %c96 = arith.constant 96 : index
    %c0_41 = arith.constant 0 : index
    %118 = vector.load %arg5[%c96, %c0_41] : memref<128x128xbf16, #tpu.memory_space<vmem>>, vector<32x128xbf16>
    %cst_42 = arith.constant dense<0.000000e+00> : vector<8x128xf32>
    %119 = tpu.matmul %117, %118, %cst_42 {dimension_numbers = #tpu.dot_dimension_numbers<[1], [0], [0], [1], [0, 0, 1, 1], [], []>} : vector<8x32xbf16>, vector<32x128xbf16>, vector<8x128xf32> -> vector<8x128xf32>
    %120 = arith.addf %93, %119 : vector<8x128xf32>
    %c0_43 = arith.constant 0 : index
    %c0_44 = arith.constant 0 : index
    %121 = vector.load %arg6[%c0_43, %c0_44] : memref<1x128xf32, #tpu.memory_space<vmem>>, vector<1x128xf32>
    %122 = vector.broadcast %121 : vector<1x128xf32> to vector<8x128xf32>
    %123 = arith.addf %120, %122 : vector<8x128xf32>
    %124 = arith.addf %123, %1 : vector<8x128xf32>
    %c0_45 = arith.constant 0 : index
    %c0_46 = arith.constant 0 : index
    %125 = vector.load %arg7[%c0_45, %c0_46] : memref<1x128xf32, #tpu.memory_space<vmem>>, vector<1x128xf32>
    %c0_47 = arith.constant 0 : index
    %c0_48 = arith.constant 0 : index
    %126 = vector.load %arg8[%c0_47, %c0_48] : memref<1x128xf32, #tpu.memory_space<vmem>>, vector<1x128xf32>
    %cst_49 = arith.constant dense<0.000000e+00> : vector<8xf32>
    %127 = vector.multi_reduction <add>, %124, %cst_49 [1] : vector<8x128xf32> to vector<8xf32>
    %128 = vector.shape_cast %127 : vector<8xf32> to vector<8x1xf32>
    %cst_50 = arith.constant 1.280000e+02 : f32
    %129 = vector.broadcast %cst_50 : f32 to vector<8x1xf32>
    %130 = arith.divf %128, %129 : vector<8x1xf32>
    %131 = vector.broadcast %130 : vector<8x1xf32> to vector<8x128xf32>
    %132 = arith.subf %124, %131 : vector<8x128xf32>
    %133 = arith.mulf %132, %132 : vector<8x128xf32>
    %cst_51 = arith.constant dense<0.000000e+00> : vector<8xf32>
    %134 = vector.multi_reduction <add>, %133, %cst_51 [1] : vector<8x128xf32> to vector<8xf32>
    %135 = vector.shape_cast %134 : vector<8xf32> to vector<8x1xf32>
    %cst_52 = arith.constant 1.280000e+02 : f32
    %136 = vector.broadcast %cst_52 : f32 to vector<8x1xf32>
    %137 = arith.divf %135, %136 : vector<8x1xf32>
    %cst_53 = arith.constant 9.99999974E-6 : f32
    %138 = vector.broadcast %cst_53 : f32 to vector<8x1xf32>
    %139 = arith.addf %137, %138 : vector<8x1xf32>
    %140 = math.rsqrt %139 : vector<8x1xf32>
    %141 = vector.broadcast %140 : vector<8x1xf32> to vector<8x128xf32>
    %142 = arith.mulf %132, %141 : vector<8x128xf32>
    %143 = vector.broadcast %125 : vector<1x128xf32> to vector<8x128xf32>
    %144 = arith.mulf %142, %143 : vector<8x128xf32>
    %145 = vector.broadcast %126 : vector<1x128xf32> to vector<8x128xf32>
    %146 = arith.addf %144, %145 : vector<8x128xf32>
    %147 = arith.truncf %146 : vector<8x128xf32> to vector<8x128xbf16>
    %c0_54 = arith.constant 0 : index
    %c0_55 = arith.constant 0 : index
    %148 = vector.load %arg9[%c0_54, %c0_55] : memref<128x256xbf16, #tpu.memory_space<vmem>>, vector<128x256xbf16>
    %cst_56 = arith.constant dense<0.000000e+00> : vector<8x256xf32>
    %149 = tpu.matmul %147, %148, %cst_56 {dimension_numbers = #tpu.dot_dimension_numbers<[1], [0], [0], [1], [0, 0, 1, 1], [], []>} : vector<8x128xbf16>, vector<128x256xbf16>, vector<8x256xf32> -> vector<8x256xf32>
    %c0_57 = arith.constant 0 : index
    %c0_58 = arith.constant 0 : index
    %150 = vector.load %arg10[%c0_57, %c0_58] : memref<1x256xf32, #tpu.memory_space<vmem>>, vector<1x256xf32>
    %151 = vector.broadcast %150 : vector<1x256xf32> to vector<8x256xf32>
    %152 = arith.addf %149, %151 : vector<8x256xf32>
    %cst_59 = arith.constant 0.000000e+00 : f32
    %153 = vector.broadcast %cst_59 : f32 to vector<8x256xf32>
    %154 = arith.maximumf %152, %153 : vector<8x256xf32>
    %155 = arith.truncf %154 : vector<8x256xf32> to vector<8x256xbf16>
    %c0_60 = arith.constant 0 : index
    %c0_61 = arith.constant 0 : index
    %156 = vector.load %arg11[%c0_60, %c0_61] : memref<256x128xbf16, #tpu.memory_space<vmem>>, vector<256x128xbf16>
    %cst_62 = arith.constant dense<0.000000e+00> : vector<8x128xf32>
    %157 = tpu.matmul %155, %156, %cst_62 {dimension_numbers = #tpu.dot_dimension_numbers<[1], [0], [0], [1], [0, 0, 1, 1], [], []>} : vector<8x256xbf16>, vector<256x128xbf16>, vector<8x128xf32> -> vector<8x128xf32>
    %c0_63 = arith.constant 0 : index
    %c0_64 = arith.constant 0 : index
    %158 = vector.load %arg12[%c0_63, %c0_64] : memref<1x128xf32, #tpu.memory_space<vmem>>, vector<1x128xf32>
    %159 = vector.broadcast %158 : vector<1x128xf32> to vector<8x128xf32>
    %160 = arith.addf %157, %159 : vector<8x128xf32>
    %161 = arith.addf %160, %146 : vector<8x128xf32>
    %c0_65 = arith.constant 0 : index
    %c0_66 = arith.constant 0 : index
    %162 = vector.load %arg13[%c0_65, %c0_66] : memref<1x128xf32, #tpu.memory_space<vmem>>, vector<1x128xf32>
    %c0_67 = arith.constant 0 : index
    %c0_68 = arith.constant 0 : index
    %163 = vector.load %arg14[%c0_67, %c0_68] : memref<1x128xf32, #tpu.memory_space<vmem>>, vector<1x128xf32>
    %cst_69 = arith.constant dense<0.000000e+00> : vector<8xf32>
    %164 = vector.multi_reduction <add>, %161, %cst_69 [1] : vector<8x128xf32> to vector<8xf32>
    %165 = vector.shape_cast %164 : vector<8xf32> to vector<8x1xf32>
    %cst_70 = arith.constant 1.280000e+02 : f32
    %166 = vector.broadcast %cst_70 : f32 to vector<8x1xf32>
    %167 = arith.divf %165, %166 : vector<8x1xf32>
    %168 = vector.broadcast %167 : vector<8x1xf32> to vector<8x128xf32>
    %169 = arith.subf %161, %168 : vector<8x128xf32>
    %170 = arith.mulf %169, %169 : vector<8x128xf32>
    %cst_71 = arith.constant dense<0.000000e+00> : vector<8xf32>
    %171 = vector.multi_reduction <add>, %170, %cst_71 [1] : vector<8x128xf32> to vector<8xf32>
    %172 = vector.shape_cast %171 : vector<8xf32> to vector<8x1xf32>
    %cst_72 = arith.constant 1.280000e+02 : f32
    %173 = vector.broadcast %cst_72 : f32 to vector<8x1xf32>
    %174 = arith.divf %172, %173 : vector<8x1xf32>
    %cst_73 = arith.constant 9.99999974E-6 : f32
    %175 = vector.broadcast %cst_73 : f32 to vector<8x1xf32>
    %176 = arith.addf %174, %175 : vector<8x1xf32>
    %177 = math.rsqrt %176 : vector<8x1xf32>
    %178 = vector.broadcast %177 : vector<8x1xf32> to vector<8x128xf32>
    %179 = arith.mulf %169, %178 : vector<8x128xf32>
    %180 = vector.broadcast %162 : vector<1x128xf32> to vector<8x128xf32>
    %181 = arith.mulf %179, %180 : vector<8x128xf32>
    %182 = vector.broadcast %163 : vector<1x128xf32> to vector<8x128xf32>
    %183 = arith.addf %181, %182 : vector<8x128xf32>
    %c0_74 = arith.constant 0 : index
    %c0_75 = arith.constant 0 : index
    %c0_76 = arith.constant 0 : index
    %184 = vector.load %arg15[%c0_74, %c0_75, %c0_76] : memref<1x8x128xf32, #tpu.memory_space<vmem>>, vector<1x8x128xf32>
    %185 = vector.shape_cast %184 : vector<1x8x128xf32> to vector<8x128xf32>
    %186 = vector.shape_cast %183 : vector<8x128xf32> to vector<1x8x128xf32>
    tpu.vector_store %arg15[%c0_74, %c0_75, %c0_76], %186 {strides = array<i32>} : memref<1x8x128xf32, #tpu.memory_space<vmem>>, vector<1x8x128xf32>,
    return
  }
  func.func @transform_0(%arg0: i32) -> (i32, i32, i32) {
    %c0_i32 = arith.constant 0 : i32
    %c0_i32_0 = arith.constant 0 : i32
    %c0_i32_1 = arith.constant 0 : i32
    return %arg0, %c0_i32, %c0_i32_0 : i32, i32, i32
  }
  func.func @transform_1(%arg0: i32) -> (i32, i32, i32) {
    %c0_i32 = arith.constant 0 : i32
    %c0_i32_0 = arith.constant 0 : i32
    %c0_i32_1 = arith.constant 0 : i32
    return %arg0, %c0_i32, %c0_i32_0 : i32, i32, i32
  }
  func.func @transform_2(%arg0: i32) -> (i32, i32) {
    %c0_i32 = arith.constant 0 : i32
    %c0_i32_0 = arith.constant 0 : i32
    %c0_i32_1 = arith.constant 0 : i32
    return %c0_i32, %c0_i32_0 : i32, i32
  }
  func.func @transform_3(%arg0: i32) -> (i32, i32) {
    %c0_i32 = arith.constant 0 : i32
    %c0_i32_0 = arith.constant 0 : i32
    %c0_i32_1 = arith.constant 0 : i32
    return %c0_i32, %c0_i32_0 : i32, i32
  }
  func.func @transform_4(%arg0: i32) -> (i32, i32) {
    %c0_i32 = arith.constant 0 : i32
    %c0_i32_0 = arith.constant 0 : i32
    %c0_i32_1 = arith.constant 0 : i32
    return %c0_i32, %c0_i32_0 : i32, i32
  }
  func.func @transform_5(%arg0: i32) -> (i32, i32) {
    %c0_i32 = arith.constant 0 : i32
    %c0_i32_0 = arith.constant 0 : i32
    %c0_i32_1 = arith.constant 0 : i32
    return %c0_i32, %c0_i32_0 : i32, i32
  }
  func.func @transform_6(%arg0: i32) -> (i32, i32) {
    %c0_i32 = arith.constant 0 : i32
    %c0_i32_0 = arith.constant 0 : i32
    %c0_i32_1 = arith.constant 0 : i32
    return %c0_i32, %c0_i32_0 : i32, i32
  }
  func.func @transform_7(%arg0: i32) -> (i32, i32) {
    %c0_i32 = arith.constant 0 : i32
    %c0_i32_0 = arith.constant 0 : i32
    %c0_i32_1 = arith.constant 0 : i32
    return %c0_i32, %c0_i32_0 : i32, i32
  }
  func.func @transform_8(%arg0: i32) -> (i32, i32) {
    %c0_i32 = arith.constant 0 : i32
    %c0_i32_0 = arith.constant 0 : i32
    %c0_i32_1 = arith.constant 0 : i32
    return %c0_i32, %c0_i32_0 : i32, i32
  }
  func.func @transform_9(%arg0: i32) -> (i32, i32) {
    %c0_i32 = arith.constant 0 : i32
    %c0_i32_0 = arith.constant 0 : i32
    %c0_i32_1 = arith.constant 0 : i32
    return %c0_i32, %c0_i32_0 : i32, i32
  }
  func.func @transform_10(%arg0: i32) -> (i32, i32) {
    %c0_i32 = arith.constant 0 : i32
    %c0_i32_0 = arith.constant 0 : i32
    %c0_i32_1 = arith.constant 0 : i32
    return %c0_i32, %c0_i32_0 : i32, i32
  }
  func.func @transform_11(%arg0: i32) -> (i32, i32) {
    %c0_i32 = arith.constant 0 : i32
    %c0_i32_0 = arith.constant 0 : i32
    %c0_i32_1 = arith.constant 0 : i32
    return %c0_i32, %c0_i32_0 : i32, i32
  }
  func.func @transform_12(%arg0: i32) -> (i32, i32) {
    %c0_i32 = arith.constant 0 : i32
    %c0_i32_0 = arith.constant 0 : i32
    %c0_i32_1 = arith.constant 0 : i32
    return %c0_i32, %c0_i32_0 : i32, i32
  }
  func.func @transform_13(%arg0: i32) -> (i32, i32) {
    %c0_i32 = arith.constant 0 : i32
    %c0_i32_0 = arith.constant 0 : i32
    %c0_i32_1 = arith.constant 0 : i32
    return %c0_i32, %c0_i32_0 : i32, i32
  }
  func.func @transform_14(%arg0: i32) -> (i32, i32, i32) {
    %c0_i32 = arith.constant 0 : i32
    %c0_i32_0 = arith.constant 0 : i32
    %c0_i32_1 = arith.constant 0 : i32
    return %arg0, %c0_i32, %c0_i32_0 : i32, i32, i32
  }
}

</mosaic_0001>

<llo_original>
// kernel: encoder_forward.3
$region0: #{encoder_forward.3}
  #allocation0 [shape = 'u32[]', space=smem, size = 0x4, offset = 0x4, fixed_abs, tag = 'smem constant byte address 0x4 - core index']
  #allocation1 [shape = 'u32[144,128]{1,0:T(1,128)}', space=vmem, size = 0x12000, scoped, tag = 'internal scratch']
  %s0 = inlined_call_operand.vmem [shape: f32[2,8,128], index: 0, kind: input, shape index: {}]
  %s1 = inlined_call_operand.vmem [shape: s8[2,8,8], index: 1, kind: input, shape index: {}]
  %s2 = inlined_call_operand.vmem [shape: bf16[128,384], index: 2, kind: input, shape index: {}]
  %s3 = inlined_call_operand.vmem [shape: f32[1,384], index: 3, kind: input, shape index: {}]
  %s4 = inlined_call_operand.vmem [shape: bf16[128,128], index: 4, kind: input, shape index: {}]
  %s5 = inlined_call_operand.vmem [shape: f32[1,128], index: 5, kind: input, shape index: {}]
  %s6 = inlined_call_operand.vmem [shape: f32[1,128], index: 6, kind: input, shape index: {}]
  %s7 = inlined_call_operand.vmem [shape: f32[1,128], index: 7, kind: input, shape index: {}]
  %s8 = inlined_call_operand.vmem [shape: bf16[128,256], index: 8, kind: input, shape index: {}]
  %s9 = inlined_call_operand.vmem [shape: f32[1,256], index: 9, kind: input, shape index: {}]
  %s10 = inlined_call_operand.vmem [shape: bf16[256,128], index: 10, kind: input, shape index: {}]
  %s11 = inlined_call_operand.vmem [shape: f32[1,128], index: 11, kind: input, shape index: {}]
  %s12 = inlined_call_operand.vmem [shape: f32[1,128], index: 12, kind: input, shape index: {}]
  %s13 = inlined_call_operand.vmem [shape: f32[1,128], index: 13, kind: input, shape index: {}]
  %s14 = inlined_call_operand.hbm [shape: f32[2,8,128], index: 14, kind: output, shape index: {}]
  %s15 = sld [smem:[#allocation0]]
  $region89: #{encoder_forward.3} parent=0
    _
  %s17 = ssub.s32 1, %s15
  %s18 = scalar_select 0, %s17, %s15
  $region1: #{encoder_forward.3} parent=0
    #allocation2 [shape = 'u8[8192]{0}', space=vmem, size = 0x2000, scoped, tag = 'output window, operand 0']
    #allocation3 [shape = 's32[2]{0}', space=sflag, size = 0x8, scoped, tag = 'scoped memory for encoder_forward.3']
    %19 = vsyncpa [#allocation3], 0
    %s20 = scalar_lea.sflag [#allocation3], 1
    %21 = vsyncpa %s20, 0
    loop: start=0, step=1, limit=4
    $region2: #{encoder_forward.3} parent=1 // loop_pre_header
      _
    $region3: #{encoder_forward.3} parent=1 // loop_header
      %s23 = sphi 0, %s27
      %p24 = scmp.ge.s32.totalorder %s23, 4
      %s33 = sphi 0, %s35
      %s36 = sphi 0, %s33
      %s37 = sphi 0, %s36
      %s53 = sphi 0, %s37
      %s59 = sphi 0, %s61
      %s62 = sphi 0, %s59
      %s63 = sphi 0, %s62
      %s79 = sphi 0, %s63
      %s83 = sphi 0, %s83
      %s85 = sphi 0, %s83
      %s86 = sphi 0, %s85
      %s100 = sphi 0, %s86
      %s104 = sphi 0, %s104
      %s106 = sphi 0, %s104
      %s107 = sphi 0, %s106
      %s121 = sphi 0, %s107
      %s125 = sphi 0, %s125
      %s127 = sphi 0, %s125
      %s128 = sphi 0, %s127
      %s142 = sphi 0, %s128
      %s146 = sphi 0, %s146
      %s148 = sphi 0, %s146
      %s149 = sphi 0, %s148
      %s163 = sphi 0, %s149
      %s167 = sphi 0, %s167
      %s169 = sphi 0, %s167
      %s170 = sphi 0, %s169
      %s184 = sphi 0, %s170
      %s188 = sphi 0, %s188
      %s190 = sphi 0, %s188
      %s191 = sphi 0, %s190
      %s205 = sphi 0, %s191
      %s209 = sphi 0, %s209
      %s211 = sphi 0, %s209
      %s212 = sphi 0, %s211
      %s226 = sphi 0, %s212
      %s230 = sphi 0, %s230
      %s232 = sphi 0, %s230
      %s233 = sphi 0, %s232
      %s247 = sphi 0, %s233
      %s251 = sphi 0, %s251
      %s253 = sphi 0, %s251
      %s254 = sphi 0, %s253
      %s268 = sphi 0, %s254
      %s272 = sphi 0, %s272
      %s274 = sphi 0, %s272
      %s275 = sphi 0, %s274
      %s289 = sphi 0, %s275
      %s293 = sphi 0, %s293
      %s295 = sphi 0, %s293
      %s296 = sphi 0, %s295
      %s310 = sphi 0, %s296
      %s314 = sphi 0, %s314
      %s316 = sphi 0, %s314
      %s317 = sphi 0, %s316
      %s331 = sphi 0, %s317
      %s337 = sphi 0, %s339
      %s340 = sphi 0, %s337
      %s341 = sphi 0, %s340
      %s357 = sphi 0, %s341
    $region4: #{encoder_forward.3} parent=1 // loop_header_branch
      %26 = sbr.rel (%p24) target = $region8
    $region5: #{encoder_forward.3} parent=1 // loop_body
      %s28 = ssub.s32 %s23, 1
      %s29 = ssub.s32 %s23, 2
      %s30 = sadd.s32 %s23, 1
      %s31 = ssub.s32 %s23, %s30
      %p32 = scmp.eq.s32.totalorder %s31, 0
      %s34 = sadd.s32 %s33, 1
      %s35 = scalar_select %p32, %s33, %s34
      %p38 = pneg %p32
      %p39 = scmp.eq.s32.totalorder %s23, 1
      %p40 = por %p38, %p39
      %p41 = scmp.ne.s32.totalorder %s33, %s36
      %p42 = scmp.eq.s32.totalorder %s23, 0
      %p43 = por %p41, %p42
      %p44 = scmp.ne.s32.totalorder %s33, %s36
      %p45 = scmp.eq.s32.totalorder %s28, 1
      %p46 = por %p44, %p45
      %p47 = scmp.ne.s32.totalorder %s36, %s37
      %p48 = scmp.eq.s32.totalorder %s28, 0
      %p49 = por %p47, %p48
      %p50 = scmp.ne.s32.totalorder %s36, %s37
      %p51 = scmp.eq.s32.totalorder %s29, 1
      %p52 = por %p50, %p51
      %p54 = scmp.ne.s32.totalorder %s37, %s53
      %p55 = scmp.eq.s32.totalorder %s29, 0
      %p56 = por %p54, %p55
      %s57 = ssub.s32 %s23, %s30
      %p58 = scmp.eq.s32.totalorder %s57, 0
      %s60 = sadd.s32 %s59, 1
      %s61 = scalar_select %p58, %s59, %s60
      %p64 = pneg %p58
      %p65 = scmp.eq.s32.totalorder %s23, 1
      %p66 = por %p64, %p65
      %p67 = scmp.ne.s32.totalorder %s59, %s62
      %p68 = scmp.eq.s32.totalorder %s23, 0
      %p69 = por %p67, %p68
      %p70 = scmp.ne.s32.totalorder %s59, %s62
      %p71 = scmp.eq.s32.totalorder %s28, 1
      %p72 = por %p70, %p71
      %p73 = scmp.ne.s32.totalorder %s62, %s63
      %p74 = scmp.eq.s32.totalorder %s28, 0
      %p75 = por %p73, %p74
      %p76 = scmp.ne.s32.totalorder %s62, %s63
      %p77 = scmp.eq.s32.totalorder %s29, 1
      %p78 = por %p76, %p77
      %p80 = scmp.ne.s32.totalorder %s63, %s79
      %p81 = scmp.eq.s32.totalorder %s29, 0
      %p82 = por %p80, %p81
      %s84 = sadd.s32 %s83, 1
      %p87 = scmp.eq.s32.totalorder %s23, 1
      %p88 = scmp.ne.s32.totalorder %s83, %s85
      %p89 = scmp.eq.s32.totalorder %s23, 0
      %p90 = por %p88, %p89
      %p91 = scmp.ne.s32.totalorder %s83, %s85
      %p92 = scmp.eq.s32.totalorder %s28, 1
      %p93 = por %p91, %p92
      %p94 = scmp.ne.s32.totalorder %s85, %s86
      %p95 = scmp.eq.s32.totalorder %s28, 0
      %p96 = por %p94, %p95
      %p97 = scmp.ne.s32.totalorder %s85, %s86
      %p98 = scmp.eq.s32.totalorder %s29, 1
      %p99 = por %p97, %p98
      %p101 = scmp.ne.s32.totalorder %s86, %s100
      %p102 = scmp.eq.s32.totalorder %s29, 0
      %p103 = por %p101, %p102
      %s105 = sadd.s32 %s104, 1
      %p108 = scmp.eq.s32.totalorder %s23, 1
      %p109 = scmp.ne.s32.totalorder %s104, %s106
      %p110 = scmp.eq.s32.totalorder %s23, 0
      %p111 = por %p109, %p110
      %p112 = scmp.ne.s32.totalorder %s104, %s106
      %p113 = scmp.eq.s32.totalorder %s28, 1
      %p114 = por %p112, %p113
      %p115 = scmp.ne.s32.totalorder %s106, %s107
      %p116 = scmp.eq.s32.totalorder %s28, 0
      %p117 = por %p115, %p116
      %p118 = scmp.ne.s32.totalorder %s106, %s107
      %p119 = scmp.eq.s32.totalorder %s29, 1
      %p120 = por %p118, %p119
      %p122 = scmp.ne.s32.totalorder %s107, %s121
      %p123 = scmp.eq.s32.totalorder %s29, 0
      %p124 = por %p122, %p123
      %s126 = sadd.s32 %s125, 1
      %p129 = scmp.eq.s32.totalorder %s23, 1
      %p130 = scmp.ne.s32.totalorder %s125, %s127
      %p131 = scmp.eq.s32.totalorder %s23, 0
      %p132 = por %p130, %p131
      %p133 = scmp.ne.s32.totalorder %s125, %s127
      %p134 = scmp.eq.s32.totalorder %s28, 1
      %p135 = por %p133, %p134
      %p136 = scmp.ne.s32.totalorder %s127, %s128
      %p137 = scmp.eq.s32.totalorder %s28, 0
      %p138 = por %p136, %p137
      %p139 = scmp.ne.s32.totalorder %s127, %s128
      %p140 = scmp.eq.s32.totalorder %s29, 1
      %p141 = por %p139, %p140
      %p143 = scmp.ne.s32.totalorder %s128, %s142
      %p144 = scmp.eq.s32.totalorder %s29, 0
      %p145 = por %p143, %p144
      %s147 = sadd.s32 %s146, 1
      %p150 = scmp.eq.s32.totalorder %s23, 1
      %p151 = scmp.ne.s32.totalorder %s146, %s148
      %p152 = scmp.eq.s32.totalorder %s23, 0
      %p153 = por %p151, %p152
      %p154 = scmp.ne.s32.totalorder %s146, %s148
      %p155 = scmp.eq.s32.totalorder %s28, 1
      %p156 = por %p154, %p155
      %p157 = scmp.ne.s32.totalorder %s148, %s149
      %p158 = scmp.eq.s32.totalorder %s28, 0
      %p159 = por %p157, %p158
      %p160 = scmp.ne.s32.totalorder %s148, %s149
      %p161 = scmp.eq.s32.totalorder %s29, 1
      %p162 = por %p160, %p161
      %p164 = scmp.ne.s32.totalorder %s149, %s163
      %p165 = scmp.eq.s32.totalorder %s29, 0
      %p166 = por %p164, %p165
      %s168 = sadd.s32 %s167, 1
      %p171 = scmp.eq.s32.totalorder %s23, 1
      %p172 = scmp.ne.s32.totalorder %s167, %s169
      %p173 = scmp.eq.s32.totalorder %s23, 0
      %p174 = por %p172, %p173
      %p175 = scmp.ne.s32.totalorder %s167, %s169
      %p176 = scmp.eq.s32.totalorder %s28, 1
      %p177 = por %p175, %p176
      %p178 = scmp.ne.s32.totalorder %s169, %s170
      %p179 = scmp.eq.s32.totalorder %s28, 0
      %p180 = por %p178, %p179
      %p181 = scmp.ne.s32.totalorder %s169, %s170
      %p182 = scmp.eq.s32.totalorder %s29, 1
      %p183 = por %p181, %p182
      %p185 = scmp.ne.s32.totalorder %s170, %s184
      %p186 = scmp.eq.s32.totalorder %s29, 0
      %p187 = por %p185, %p186
      %s189 = sadd.s32 %s188, 1
      %p192 = scmp.eq.s32.totalorder %s23, 1
      %p193 = scmp.ne.s32.totalorder %s188, %s190
      %p194 = scmp.eq.s32.totalorder %s23, 0
      %p195 = por %p193, %p194
      %p196 = scmp.ne.s32.totalorder %s188, %s190
      %p197 = scmp.eq.s32.totalorder %s28, 1
      %p198 = por %p196, %p197
      %p199 = scmp.ne.s32.totalorder %s190, %s191
      %p200 = scmp.eq.s32.totalorder %s28, 0
      %p201 = por %p199, %p200
      %p202 = scmp.ne.s32.totalorder %s190, %s191
      %p203 = scmp.eq.s32.totalorder %s29, 1
      %p204 = por %p202, %p203
      %p206 = scmp.ne.s32.totalorder %s191, %s205
      %p207 = scmp.eq.s32.totalorder %s29, 0
      %p208 = por %p206, %p207
      %s210 = sadd.s32 %s209, 1
      %p213 = scmp.eq.s32.totalorder %s23, 1
      %p214 = scmp.ne.s32.totalorder %s209, %s211
      %p215 = scmp.eq.s32.totalorder %s23, 0
      %p216 = por %p214, %p215
      %p217 = scmp.ne.s32.totalorder %s209, %s211
      %p218 = scmp.eq.s32.totalorder %s28, 1
      %p219 = por %p217, %p218
      %p220 = scmp.ne.s32.totalorder %s211, %s212
      %p221 = scmp.eq.s32.totalorder %s28, 0
      %p222 = por %p220, %p221
      %p223 = scmp.ne.s32.totalorder %s211, %s212
      %p224 = scmp.eq.s32.totalorder %s29, 1
      %p225 = por %p223, %p224
      %p227 = scmp.ne.s32.totalorder %s212, %s226
      %p228 = scmp.eq.s32.totalorder %s29, 0
      %p229 = por %p227, %p228
      %s231 = sadd.s32 %s230, 1
      %p234 = scmp.eq.s32.totalorder %s23, 1
      %p235 = scmp.ne.s32.totalorder %s230, %s232
      %p236 = scmp.eq.s32.totalorder %s23, 0
      %p237 = por %p235, %p236
      %p238 = scmp.ne.s32.totalorder %s230, %s232
      %p239 = scmp.eq.s32.totalorder %s28, 1
      %p240 = por %p238, %p239
      %p241 = scmp.ne.s32.totalorder %s232, %s233
      %p242 = scmp.eq.s32.totalorder %s28, 0
      %p243 = por %p241, %p242
      %p244 = scmp.ne.s32.totalorder %s232, %s233
      %p245 = scmp.eq.s32.totalorder %s29, 1
      %p246 = por %p244, %p245
      %p248 = scmp.ne.s32.totalorder %s233, %s247
      %p249 = scmp.eq.s32.totalorder %s29, 0
      %p250 = por %p248, %p249
      %s252 = sadd.s32 %s251, 1
      %p255 = scmp.eq.s32.totalorder %s23, 1
      %p256 = scmp.ne.s32.totalorder %s251, %s253
      %p257 = scmp.eq.s32.totalorder %s23, 0
      %p258 = por %p256, %p257
      %p259 = scmp.ne.s32.totalorder %s251, %s253
      %p260 = scmp.eq.s32.totalorder %s28, 1
      %p261 = por %p259, %p260
      %p262 = scmp.ne.s32.totalorder %s253, %s254
      %p263 = scmp.eq.s32.totalorder %s28, 0
      %p264 = por %p262, %p263
      %p265 = scmp.ne.s32.totalorder %s253, %s254
      %p266 = scmp.eq.s32.totalorder %s29, 1
      %p267 = por %p265, %p266
      %p269 = scmp.ne.s32.totalorder %s254, %s268
      %p270 = scmp.eq.s32.totalorder %s29, 0
      %p271 = por %p269, %p270
      %s273 = sadd.s32 %s272, 1
      %p276 = scmp.eq.s32.totalorder %s23, 1
      %p277 = scmp.ne.s32.totalorder %s272, %s274
      %p278 = scmp.eq.s32.totalorder %s23, 0
      %p279 = por %p277, %p278
      %p280 = scmp.ne.s32.totalorder %s272, %s274
      %p281 = scmp.eq.s32.totalorder %s28, 1
      %p282 = por %p280, %p281
      %p283 = scmp.ne.s32.totalorder %s274, %s275
      %p284 = scmp.eq.s32.totalorder %s28, 0
      %p285 = por %p283, %p284
      %p286 = scmp.ne.s32.totalorder %s274, %s275
      %p287 = scmp.eq.s32.totalorder %s29, 1
      %p288 = por %p286, %p287
      %p290 = scmp.ne.s32.totalorder %s275, %s289
      %p291 = scmp.eq.s32.totalorder %s29, 0
      %p292 = por %p290, %p291
      %s294 = sadd.s32 %s293, 1
      %p297 = scmp.eq.s32.totalorder %s23, 1
      %p298 = scmp.ne.s32.totalorder %s293, %s295
      %p299 = scmp.eq.s32.totalorder %s23, 0
      %p300 = por %p298, %p299
      %p301 = scmp.ne.s32.totalorder %s293, %s295
      %p302 = scmp.eq.s32.totalorder %s28, 1
      %p303 = por %p301, %p302
      %p304 = scmp.ne.s32.totalorder %s295, %s296
      %p305 = scmp.eq.s32.totalorder %s28, 0
      %p306 = por %p304, %p305
      %p307 = scmp.ne.s32.totalorder %s295, %s296
      %p308 = scmp.eq.s32.totalorder %s29, 1
      %p309 = por %p307, %p308
      %p311 = scmp.ne.s32.totalorder %s296, %s310
      %p312 = scmp.eq.s32.totalorder %s29, 0
      %p313 = por %p311, %p312
      %s315 = sadd.s32 %s314, 1
      %p318 = scmp.eq.s32.totalorder %s23, 1
      %p319 = scmp.ne.s32.totalorder %s314, %s316
      %p320 = scmp.eq.s32.totalorder %s23, 0
      %p321 = por %p319, %p320
      %p322 = scmp.ne.s32.totalorder %s314, %s316
      %p323 = scmp.eq.s32.totalorder %s28, 1
      %p324 = por %p322, %p323
      %p325 = scmp.ne.s32.totalorder %s316, %s317
      %p326 = scmp.eq.s32.totalorder %s28, 0
      %p327 = por %p325, %p326
      %p328 = scmp.ne.s32.totalorder %s316, %s317
      %p329 = scmp.eq.s32.totalorder %s29, 1
      %p330 = por %p328, %p329
      %p332 = scmp.ne.s32.totalorder %s317, %s331
      %p333 = scmp.eq.s32.totalorder %s29, 0
      %p334 = por %p332, %p333
      %s335 = ssub.s32 %s23, %s30
      %p336 = scmp.eq.s32.totalorder %s335, 0
      %s338 = sadd.s32 %s337, 1
      %s339 = scalar_select %p336, %s337, %s338
      %p342 = pneg %p336
      %p343 = scmp.eq.s32.totalorder %s23, 1
      %p344 = por %p342, %p343
      %p345 = scmp.ne.s32.totalorder %s337, %s340
      %p346 = scmp.eq.s32.totalorder %s23, 0
      %p347 = por %p345, %p346
      %p348 = scmp.ne.s32.totalorder %s337, %s340
      %p349 = scmp.eq.s32.totalorder %s28, 1
      %p350 = por %p348, %p349
      %p351 = scmp.ne.s32.totalorder %s340, %s341
      %p352 = scmp.eq.s32.totalorder %s28, 0
      %p353 = por %p351, %p352
      %p354 = scmp.ne.s32.totalorder %s340, %s341
      %p355 = scmp.eq.s32.totalorder %s29, 1
      %p356 = por %p354, %p355
      %p358 = scmp.ne.s32.totalorder %s341, %s357
      %p359 = scmp.eq.s32.totalorder %s29, 0
      %p360 = por %p358, %p359
      %p361 = scmp.le.s32.totalorder 1, %s23
      %p362 = scmp.lt.s32.totalorder %s23, 3
      %p363 = pnand %p361, %p362
      %p364 = pneg %p363
      // Predicated region
      $region9: #{encoder_forward.3} parent=5 // pred_check
        _
      $region10: #{encoder_forward.3} parent=5 // pred_check_branch
        %366 = sbr.rel (%p363) target = $region12
      $region11: #{encoder_forward.3} parent=5 // pred_region
        %s367 = ssub.s32 %s23, 1
        // Predicated region
        $region13: #{encoder_forward.3} parent=11 // pred_check
          %p368 = pneg %p96
        $region14: #{encoder_forward.3} parent=11 // pred_check_branch
          %370 = sbr.rel (%p368) target = $region16
        $region15: #{encoder_forward.3} parent=11 // pred_region
          _
        $region16: #{encoder_forward.3} parent=11 // pred_fallthru
          _
        // Predicated region
        $region17: #{encoder_forward.3} parent=11 // pred_check
          %p371 = pneg %p117
        $region18: #{encoder_forward.3} parent=11 // pred_check_branch
          %373 = sbr.rel (%p371) target = $region20
        $region19: #{encoder_forward.3} parent=11 // pred_region
          _
        $region20: #{encoder_forward.3} parent=11 // pred_fallthru
          _
        // Predicated region
        $region21: #{encoder_forward.3} parent=11 // pred_check
          %p374 = pneg %p138
        $region22: #{encoder_forward.3} parent=11 // pred_check_branch
          %376 = sbr.rel (%p374) target = $region24
        $region23: #{encoder_forward.3} parent=11 // pred_region
          _
        $region24: #{encoder_forward.3} parent=11 // pred_fallthru
          _
        // Predicated region
        $region25: #{encoder_forward.3} parent=11 // pred_check
          %p377 = pneg %p159
        $region26: #{encoder_forward.3} parent=11 // pred_check_branch
          %379 = sbr.rel (%p377) target = $region28
        $region27: #{encoder_forward.3} parent=11 // pred_region
          _
        $region28: #{encoder_forward.3} parent=11 // pred_fallthru
          _
        // Predicated region
        $region29: #{encoder_forward.3} parent=11 // pred_check
          %p380 = pneg %p180
        $region30: #{encoder_forward.3} parent=11 // pred_check_branch
          %382 = sbr.rel (%p380) target = $region32
        $region31: #{encoder_forward.3} parent=11 // pred_region
          _
        $region32: #{encoder_forward.3} parent=11 // pred_fallthru
          _
        // Predicated region
        $region33: #{encoder_forward.3} parent=11 // pred_check
          %p383 = pneg %p201
        $region34: #{encoder_forward.3} parent=11 // pred_check_branch
          %385 = sbr.rel (%p383) target = $region36
        $region35: #{encoder_forward.3} parent=11 // pred_region
          _
        $region36: #{encoder_forward.3} parent=11 // pred_fallthru
          _
        // Predicated region
        $region37: #{encoder_forward.3} parent=11 // pred_check
          %p386 = pneg %p222
        $region38: #{encoder_forward.3} parent=11 // pred_check_branch
          %388 = sbr.rel (%p386) target = $region40
        $region39: #{encoder_forward.3} parent=11 // pred_region
          _
        $region40: #{encoder_forward.3} parent=11 // pred_fallthru
          _
        // Predicated region
        $region41: #{encoder_forward.3} parent=11 // pred_check
          %p389 = pneg %p243
        $region42: #{encoder_forward.3} parent=11 // pred_check_branch
          %391 = sbr.rel (%p389) target = $region44
        $region43: #{encoder_forward.3} parent=11 // pred_region
          _
        $region44: #{encoder_forward.3} parent=11 // pred_fallthru
          _
        // Predicated region
        $region45: #{encoder_forward.3} parent=11 // pred_check
          %p392 = pneg %p264
        $region46: #{encoder_forward.3} parent=11 // pred_check_branch
          %394 = sbr.rel (%p392) target = $region48
        $region47: #{encoder_forward.3} parent=11 // pred_region
          _
        $region48: #{encoder_forward.3} parent=11 // pred_fallthru
          _
        // Predicated region
        $region49: #{encoder_forward.3} parent=11 // pred_check
          %p395 = pneg %p285
        $region50: #{encoder_forward.3} parent=11 // pred_check_branch
          %397 = sbr.rel (%p395) target = $region52
        $region51: #{encoder_forward.3} parent=11 // pred_region
          _
        $region52: #{encoder_forward.3} parent=11 // pred_fallthru
          _
        // Predicated region
        $region53: #{encoder_forward.3} parent=11 // pred_check
          %p398 = pneg %p306
        $region54: #{encoder_forward.3} parent=11 // pred_check_branch
          %400 = sbr.rel (%p398) target = $region56
        $region55: #{encoder_forward.3} parent=11 // pred_region
          _
        $region56: #{encoder_forward.3} parent=11 // pred_fallthru
          _
        // Predicated region
        $region57: #{encoder_forward.3} parent=11 // pred_check
          %p401 = pneg %p327
        $region58: #{encoder_forward.3} parent=11 // pred_check_branch
          %403 = sbr.rel (%p401) target = $region60
        $region59: #{encoder_forward.3} parent=11 // pred_region
          _
        $region60: #{encoder_forward.3} parent=11 // pred_fallthru
          _
      $region12: #{encoder_forward.3} parent=5 // pred_fallthru
        _
      %p404 = scmp.lt.s32.totalorder %s23, 2
      // Predicated region
      $region61: #{encoder_forward.3} parent=5 // pred_check
        %p405 = pneg %p404
      $region62: #{encoder_forward.3} parent=5 // pred_check_branch
        %407 = sbr.rel (%p405) target = $region64
      $region63: #{encoder_forward.3} parent=5 // pred_region
        // Predicated region
        $region65: #{encoder_forward.3} parent=63 // pred_check
          %p408 = pneg %p43
        $region66: #{encoder_forward.3} parent=63 // pred_check_branch
          %410 = sbr.rel (%p408) target = $region68
        $region67: #{encoder_forward.3} parent=63 // pred_region
          %p411 = scmp.lt.s32.totalorder %s23, 1
          %s412 = scalar_select %p411, %s23, 1
          %s413 = smul.addr %s412, 8
          %s414 = scalar_lea.vmem %s0, %s413
        $region68: #{encoder_forward.3} parent=63 // pred_fallthru
          _
        // Predicated region
        $region69: #{encoder_forward.3} parent=63 // pred_check
          %p415 = pneg %p69
        $region70: #{encoder_forward.3} parent=63 // pred_check_branch
          %417 = sbr.rel (%p415) target = $region72
        $region71: #{encoder_forward.3} parent=63 // pred_region
          %p418 = scmp.lt.s32.totalorder %s23, 1
          %s419 = scalar_select %p418, %s23, 1
          %s420 = smul.addr %s419, 2
          %s421 = scalar_lea.vmem %s1, %s420
        $region72: #{encoder_forward.3} parent=63 // pred_fallthru
          _
      $region64: #{encoder_forward.3} parent=5 // pred_fallthru
        _
      %p422 = scmp.le.s32.totalorder 1, %s23
      %p423 = scmp.lt.s32.totalorder %s23, 3
      %p424 = pnand %p422, %p423
      %p425 = pneg %p424
      // Predicated region
      $region73: #{encoder_forward.3} parent=5 // pred_check
        _
      $region74: #{encoder_forward.3} parent=5 // pred_check_branch
        %427 = sbr.rel (%p424) target = $region76
      $region75: #{encoder_forward.3} parent=5 // pred_region
        %s428 = ssub.s32 %s23, 1
        %p429 = scmp.lt.s32.totalorder %s28, 1
        %s430 = scalar_select %p429, %s28, 1
        %s431 = smul.addr %s430, 8
        %s432 = scalar_lea.vmem %s0, %s431
        %p433 = pneg %p49
        %p434 = pneg %p46
        %p435 = scmp.lt.s32.totalorder %s28, 1
        %s436 = scalar_select %p435, %s28, 1
        %s437 = smul.addr %s436, 2
        %s438 = scalar_lea.vmem %s1, %s437
        %p439 = pneg %p75
        %p440 = pneg %p72
        %p441 = pneg %p96
        %p442 = pneg %p93
        %p443 = pneg %p117
        %p444 = pneg %p114
        %p445 = pneg %p138
        %p446 = pneg %p135
        %p447 = pneg %p159
        %p448 = pneg %p156
        %p449 = pneg %p180
        %p450 = pneg %p177
        %p451 = pneg %p201
        %p452 = pneg %p198
        %p453 = pneg %p222
        %p454 = pneg %p219
        %p455 = pneg %p243
        %p456 = pneg %p240
        %p457 = pneg %p264
        %p458 = pneg %p261
        %p459 = pneg %p285
        %p460 = pneg %p282
        %p461 = pneg %p306
        %p462 = pneg %p303
        %p463 = pneg %p327
        %p464 = pneg %p324
        %p465 = pneg %p353
        %p466 = pneg %p350
        %s467 = sand.u32 %s340, 1
        %s468 = scalar_lea.sflag [#allocation3], %s467
        %s469 = sand.u32 %s340, 1
        %s470 = smul.addr %s469, 8
        %s471 = scalar_lea.vmem [#allocation2], %s470
        %p472 = scmp.lt.s32.totalorder %s28, 1
        %s473 = scalar_select %p472, %s28, 1
        %s474 = smul.addr %s473, 8
        %s475 = scalar_lea.vmem %s0, %s474
        %p476 = scmp.lt.s32.totalorder %s28, 1
        %s477 = scalar_select %p476, %s28, 1
        %s478 = smul.addr %s477, 2
        %s479 = scalar_lea.vmem %s1, %s478
        %v483 = vld [vmem:[%s475] sm:$0xff]
        %v484 = vld [vmem:[%s479] sm:$0x3]
        %vm485 = vnez %v484
        %v486 = vpack.c.bf16 %v483, %v483
        %v487 = vld [vmem:[%s2] sm:$0xff]
        %v488 = vld [vmem:[%s2 + $0x8] sm:$0xf]
        %v489 = vld [vmem:[%s2 + $0xc] sm:$0xff]
        %v490 = vld [vmem:[%s2 + $0x14] sm:$0xf]
        %v491 = vld [vmem:[%s2 + $0x18] sm:$0xff]
        %v492 = vld [vmem:[%s2 + $0x20] sm:$0xf]
        %v493 = vld [vmem:[%s2 + $0x24] sm:$0xff]
        %v494 = vld [vmem:[%s2 + $0x2c] sm:$0xf]
        %v495 = vld [vmem:[%s2 + $0x30] sm:$0xff]
        %v496 = vld [vmem:[%s2 + $0x38] sm:$0xf]
        %v497 = vld [vmem:[%s2 + $0x3c] sm:$0xff]
        %v498 = vld [vmem:[%s2 + $0x44] sm:$0xf]
        %v499 = vld [vmem:[%s2 + $0x48] sm:$0xff]
        %v500 = vld [vmem:[%s2 + $0x50] sm:$0xf]
        %v501 = vld [vmem:[%s2 + $0x54] sm:$0xff]
        %v502 = vld [vmem:[%s2 + $0x5c] sm:$0xf]
        %v503 = vld [vmem:[%s2 + $0x60] sm:$0xff]
        %v504 = vld [vmem:[%s2 + $0x68] sm:$0xf]
        %v505 = vld [vmem:[%s2 + $0x6c] sm:$0xff]
        %v506 = vld [vmem:[%s2 + $0x74] sm:$0xf]
        %v507 = vld [vmem:[%s2 + $0x78] sm:$0xff]
        %v508 = vld [vmem:[%s2 + $0x80] sm:$0xf]
        %v509 = vld [vmem:[%s2 + $0x84] sm:$0xff]
        %v510 = vld [vmem:[%s2 + $0x8c] sm:$0xf]
        %v511 = vld [vmem:[%s2 + $0x90] sm:$0xff]
        %v512 = vld [vmem:[%s2 + $0x98] sm:$0xf]
        %v513 = vld [vmem:[%s2 + $0x9c] sm:$0xff]
        %v514 = vld [vmem:[%s2 + $0xa4] sm:$0xf]
        %v515 = vld [vmem:[%s2 + $0xa8] sm:$0xff]
        %v516 = vld [vmem:[%s2 + $0xb0] sm:$0xf]
        %v517 = vld [vmem:[%s2 + $0xb4] sm:$0xff]
        %v518 = vld [vmem:[%s2 + $0xbc] sm:$0xf]
        %v519 = vld [vmem:[%s3] sm:$0x7]
        %v521 = vlaneseq
        %v522 = vshrl.u32 %v521, 7
        %v523 = vsub.s32 0, %v522
        %v524 = vrot.slane %v519, %v523
        %v525 = vlaneseq
        %v526 = vshrl.u32 %v525, 7
        %v527 = vsub.s32 1, %v526
        %v528 = vrot.slane %v519, %v527
        %v529 = vlaneseq
        %v530 = vshrl.u32 %v529, 7
        %v531 = vsub.s32 2, %v530
        %v532 = vrot.slane %v519, %v531
        %v568 = vunpack.c.l.b16 %v487
        %v569 = vunpack.c.h.b16 %v487
        %v570 = vunpack.c.l.b16 %v488
        %v571 = vunpack.c.l.b16 %v489
        %v572 = vunpack.c.h.b16 %v489
        %v573 = vunpack.c.l.b16 %v490
        %v574 = vunpack.c.l.b16 %v491
        %v575 = vunpack.c.h.b16 %v491
        %v576 = vunpack.c.l.b16 %v492
        %v577 = vunpack.c.l.b16 %v493
        %v578 = vunpack.c.h.b16 %v493
        %v579 = vunpack.c.l.b16 %v494
        %v580 = vunpack.c.l.b16 %v495
        %v581 = vunpack.c.h.b16 %v495
        %v582 = vunpack.c.l.b16 %v496
        %v583 = vunpack.c.l.b16 %v497
        %v584 = vunpack.c.h.b16 %v497
        %v585 = vunpack.c.l.b16 %v498
        %v586 = vunpack.c.l.b16 %v499
        %v587 = vunpack.c.h.b16 %v499
        %v588 = vunpack.c.l.b16 %v500
        %v589 = vunpack.c.l.b16 %v501
        %v590 = vunpack.c.h.b16 %v501
        %v591 = vunpack.c.l.b16 %v502
        %v592 = vunpack.c.l.b16 %v503
        %v593 = vunpack.c.h.b16 %v503
        %v594 = vunpack.c.l.b16 %v504
        %v595 = vunpack.c.l.b16 %v505
        %v596 = vunpack.c.h.b16 %v505
        %v597 = vunpack.c.l.b16 %v506
        %v598 = vunpack.c.l.b16 %v507
        %v599 = vunpack.c.h.b16 %v507
        %v600 = vunpack.c.l.b16 %v508
        %v601 = vunpack.c.l.b16 %v509
        %v602 = vunpack.c.h.b16 %v509
        %v603 = vunpack.c.l.b16 %v510
        %v604 = vunpack.c.l.b16 %v511
        %v605 = vunpack.c.h.b16 %v511
        %v606 = vunpack.c.l.b16 %v512
        %v607 = vunpack.c.l.b16 %v513
        %v608 = vunpack.c.h.b16 %v513
        %v609 = vunpack.c.l.b16 %v514
        %v610 = vunpack.c.l.b16 %v515
        %v611 = vunpack.c.h.b16 %v515
        %v612 = vunpack.c.l.b16 %v516
        %v613 = vunpack.c.l.b16 %v517
        %v614 = vunpack.c.h.b16 %v517
        %v615 = vunpack.c.l.b16 %v518
        %v616 = vpack.c.b16 %v571, %v568
        %v617 = vpack.c.b16 %v572, %v569
        %v618 = vpack.c.b16 %v573, %v570
        %v619 = vpack.c.b16 %v577, %v574
        %v620 = vpack.c.b16 %v578, %v575
        %v621 = vpack.c.b16 %v579, %v576
        %v622 = vpack.c.b16 %v583, %v580
        %v623 = vpack.c.b16 %v584, %v581
        %v624 = vpack.c.b16 %v585, %v582
        %v625 = vpack.c.b16 %v589, %v586
        %v626 = vpack.c.b16 %v590, %v587
        %v627 = vpack.c.b16 %v591, %v588
        %v628 = vpack.c.b16 %v595, %v592
        %v629 = vpack.c.b16 %v596, %v593
        %v630 = vpack.c.b16 %v597, %v594
        %v631 = vpack.c.b16 %v601, %v598
        %v632 = vpack.c.b16 %v602, %v599
        %v633 = vpack.c.b16 %v603, %v600
        %v634 = vpack.c.b16 %v607, %v604
        %v635 = vpack.c.b16 %v608, %v605
        %v636 = vpack.c.b16 %v609, %v606
        %v637 = vpack.c.b16 %v613, %v610
        %v638 = vpack.c.b16 %v614, %v611
        %v639 = vpack.c.b16 %v615, %v612
        %664 = vmatprep.subr.bf16.mxu0 %v638
        %665 = vmatpush1.bf16.msra.mxu0 %v637
        %666 = vmatprep.subr.bf16.mxu0 %v635
        %667 = vmatpush1.bf16.msra.mxu0 %v634
        %668 = vmatprep.subr.bf16.mxu0 %v632
        %669 = vmatpush1.bf16.msra.mxu0 %v631
        %670 = vmatprep.subr.bf16.mxu0 %v629
        %671 = vmatpush1.bf16.msra.mxu0 %v628
        %672 = vmatprep.subr.bf16.mxu0 %v626
        %673 = vmatpush1.bf16.msra.mxu0 %v625
        %674 = vmatprep.subr.bf16.mxu0 %v623
        %675 = vmatpush1.bf16.msra.mxu0 %v622
        %676 = vmatprep.subr.bf16.mxu0 %v620
        %677 = vmatpush1.bf16.msra.mxu0 %v619
        %678 = vmatprep.subr.bf16.mxu0 %v617
        %679 = vmatpush1.bf16.msra.mxu0 %v616
        %680 = vmatprep.subr.bf16.mxu0 0
        %681 = vmatpush2.bf16.msra.mxu0 0
        %682 = vmatprep.subr.bf16.mxu0 0
        %683 = vmatpush2.bf16.msra.mxu0 0
        %684 = vmatprep.subr.bf16.mxu0 0
        %685 = vmatpush2.bf16.msra.mxu0 0
        %686 = vmatprep.subr.bf16.mxu0 0
        %687 = vmatpush2.bf16.msra.mxu0 0
        %688 = vmatprep.subr.bf16.mxu0 0
        %689 = vmatpush2.bf16.msra.mxu0 0
        %690 = vmatprep.subr.bf16.mxu0 0
        %691 = vmatpush2.bf16.msra.mxu0 0
        %692 = vmatprep.subr.bf16.mxu0 0
        %693 = vmatpush2.bf16.msra.mxu0 0
        %694 = vmatprep.subr.bf16.mxu0 0
        %695 = vmatpush2.bf16.msra.mxu0 0
        %696 = vmatprep.mubr.bf16.mxu0 0
        %697 = vmatmul.mubr.bf16.gmra.mxu0 %v486
        %v698 = vpop.f32.mrf.mxu0
        %v699 = vadd.f32 %v524, %v698
        %v700 = vpop.f32.mrf.mxu0
        %v701 = vadd.f32 %v528, %v700
        %v702 = vpop.f32.mrf.mxu0
        %v703 = vpop.f32.mrf.mxu0
        %704 = vdwg.mxu0
        %705 = vmatprep.subr.bf16.mxu0 0
        %706 = vmatpush1.bf16.msra.mxu0 %v639
        %707 = vmatprep.subr.bf16.mxu0 0
        %708 = vmatpush1.bf16.msra.mxu0 %v636
        %709 = vmatprep.subr.bf16.mxu0 0
        %710 = vmatpush1.bf16.msra.mxu0 %v633
        %711 = vmatprep.subr.bf16.mxu0 0
        %712 = vmatpush1.bf16.msra.mxu0 %v630
        %713 = vmatprep.subr.bf16.mxu0 0
        %714 = vmatpush1.bf16.msra.mxu0 %v627
        %715 = vmatprep.subr.bf16.mxu0 0
        %716 = vmatpush1.bf16.msra.mxu0 %v624
        %717 = vmatprep.subr.bf16.mxu0 0
        %718 = vmatpush1.bf16.msra.mxu0 %v621
        %719 = vmatprep.subr.bf16.mxu0 0
        %720 = vmatpush1.bf16.msra.mxu0 %v618
        %721 = vmatprep.subr.bf16.mxu0 0
        %722 = vmatpush2.bf16.msra.mxu0 0
        %723 = vmatprep.subr.bf16.mxu0 0
        %724 = vmatpush2.bf16.msra.mxu0 0
        %725 = vmatprep.subr.bf16.mxu0 0
        %726 = vmatpush2.bf16.msra.mxu0 0
        %727 = vmatprep.subr.bf16.mxu0 0
        %728 = vmatpush2.bf16.msra.mxu0 0
        %729 = vmatprep.subr.bf16.mxu0 0
        %730 = vmatpush2.bf16.msra.mxu0 0
        %731 = vmatprep.subr.bf16.mxu0 0
        %732 = vmatpush2.bf16.msra.mxu0 0
        %733 = vmatprep.subr.bf16.mxu0 0
        %734 = vmatpush2.bf16.msra.mxu0 0
        %735 = vmatprep.subr.bf16.mxu0 0
        %736 = vmatpush2.bf16.msra.mxu0 0
        %737 = vmatprep.mubr.bf16.mxu0 0
        %738 = vmatmul.mubr.bf16.gmra.mxu0 %v486
        %v739 = vpop.f32.mrf.mxu0
        %v740 = vadd.f32 %v532, %v739
        %v741 = vpop.f32.mrf.mxu0
        %v742 = vpop.f32.mrf.mxu0
        %v743 = vpop.f32.mrf.mxu0
        %744 = vdwg.mxu0
        %v745 = vpack.c.bf16 %v699, %v699
        %v746 = vpack.c.bf16 %v701, %v701
        %v747 = vpack.c.bf16 %v740, %v740
        %vm748 = vcmask 261120
        %v750 = vsel %vm748, %v745, 0
        %v753 = vsel %vm748, %v746, 0
        %755 = vmatprep.subr.bf16.mxu0 0
        %756 = vmatpush1.bf16.xpose.msra.mxu0 0
        %757 = vmatprep.subr.bf16.mxu0 0
        %758 = vmatpush1.bf16.xpose.msra.mxu0 0
        %759 = vmatprep.subr.bf16.mxu0 0
        %760 = vmatpush1.bf16.xpose.msra.mxu0 0
        %761 = vmatprep.subr.bf16.mxu0 0
        %762 = vmatpush1.bf16.xpose.msra.mxu0 0
        %763 = vmatprep.subr.bf16.mxu0 0
        %764 = vmatpush1.bf16.xpose.msra.mxu0 0
        %765 = vmatprep.subr.bf16.mxu0 0
        %766 = vmatpush1.bf16.xpose.msra.mxu0 0
        %767 = vmatprep.subr.bf16.mxu0 0
        %768 = vmatpush1.bf16.xpose.msra.mxu0 0
        %769 = vmatprep.subr.bf16.mxu0 0
        %770 = vmatpush1.bf16.xpose.msra.mxu0 %v753
        %771 = vmatprep.subr.bf16.mxu0 0
        %772 = vmatpush2.bf16.xpose.msra.mxu0 0
        %773 = vmatprep.subr.bf16.mxu0 0
        %774 = vmatpush2.bf16.xpose.msra.mxu0 0
        %775 = vmatprep.subr.bf16.mxu0 0
        %776 = vmatpush2.bf16.xpose.msra.mxu0 0
        %777 = vmatprep.subr.bf16.mxu0 0
        %778 = vmatpush2.bf16.xpose.msra.mxu0 0
        %779 = vmatprep.subr.bf16.mxu0 0
        %780 = vmatpush2.bf16.xpose.msra.mxu0 0
        %781 = vmatprep.subr.bf16.mxu0 0
        %782 = vmatpush2.bf16.xpose.msra.mxu0 0
        %783 = vmatprep.subr.bf16.mxu0 0
        %784 = vmatpush2.bf16.xpose.msra.mxu0 0
        %785 = vmatprep.subr.bf16.mxu0 0
        %786 = vmatpush2.bf16.xpose.msra.mxu0 0
        %787 = vmatprep.mubr.bf16.mxu0 0
        %788 = vmatmul.mubr.bf16.gmra.mxu0 %v750
        %v789 = vpop.f32.mrf.mxu0
        %v790 = vadd.f32 0.0, %v789
        %v791 = vpop.f32.mrf.mxu0
        %v792 = vpop.f32.mrf.mxu0
        %v793 = vpop.f32.mrf.mxu0
        %794 = vdwg.mxu0
        %v795 = vmul.f32 %v790, 0.17677669
        %v796 = vsel %vm485, 16843009, 0
        %v797 = vunpack.c.0.s8 %v796
        %vm798 = vcmp.ne.s32.totalorder %v797, 0
        %v799 = vsel %vm798, -1e+09, %v795
        %vm800 = vcmask 64512
        %v801 = vsel %vm800, %v799, -inf
        %802 = vmax.xlane.f32.xlu0 %v801
        %v803 = vpop.xlane.xlu0 %802
        %v804 = vsub.f32 %v799, %v803
        %v805 = vmul.f32 %v804, 1.442695
        %v806 = vpow.pop %v805
        %v807 = vsel %vm800, %v806, 0.0
        %808 = vadd.xlane.f32.xlu0 %v807
        %v809 = vpop.xlane.xlu0 %808
        %v810 = vrcp.pop %v809
        %v811 = vmul.f32 %v806, %v810
        %v812 = vpack.c.bf16 %v811, %v811
        %v814 = vsel %vm800, %v812, 0
        %vm816 = vcmask 1043456
        %v818 = vsel %vm816, %v747, 0
        %820 = vmatprep.subr.bf16.mxu0 0
        %821 = vmatpush1.bf16.msra.mxu0 0
        %822 = vmatprep.subr.bf16.mxu0 0
        %823 = vmatpush1.bf16.msra.mxu0 0
        %824 = vmatprep.subr.bf16.mxu0 0
        %825 = vmatpush1.bf16.msra.mxu0 0
        %826 = vmatprep.subr.bf16.mxu0 0
        %827 = vmatpush1.bf16.msra.mxu0 0
        %828 = vmatprep.subr.bf16.mxu0 0
        %829 = vmatpush1.bf16.msra.mxu0 0
        %830 = vmatprep.subr.bf16.mxu0 0
        %831 = vmatpush1.bf16.msra.mxu0 0
        %832 = vmatprep.subr.bf16.mxu0 0
        %833 = vmatpush1.bf16.msra.mxu0 0
        %834 = vmatprep.subr.bf16.mxu0 0
        %835 = vmatpush1.bf16.msra.mxu0 %v818
        %836 = vmatprep.subr.bf16.mxu0 0
        %837 = vmatpush2.bf16.msra.mxu0 0
        %838 = vmatprep.subr.bf16.mxu0 0
        %839 = vmatpush2.bf16.msra.mxu0 0
        %840 = vmatprep.subr.bf16.mxu0 0
        %841 = vmatpush2.bf16.msra.mxu0 0
        %842 = vmatprep.subr.bf16.mxu0 0
        %843 = vmatpush2.bf16.msra.mxu0 0
        %844 = vmatprep.subr.bf16.mxu0 0
        %845 = vmatpush2.bf16.msra.mxu0 0
        %846 = vmatprep.subr.bf16.mxu0 0
        %847 = vmatpush2.bf16.msra.mxu0 0
        %848 = vmatprep.subr.bf16.mxu0 0
        %849 = vmatpush2.bf16.msra.mxu0 0
        %850 = vmatprep.subr.bf16.mxu0 0
        %851 = vmatpush2.bf16.msra.mxu0 0
        %852 = vmatprep.mubr.bf16.mxu0 0
        %853 = vmatmul.mubr.bf16.gmra.mxu0 %v814
        %v854 = vpop.f32.mrf.mxu0
        %v855 = vadd.f32 0.0, %v854
        %v856 = vpop.f32.mrf.mxu0
        %v857 = vpop.f32.mrf.mxu0
        %v858 = vpop.f32.mrf.mxu0
        %859 = vdwg.mxu0
        %v860 = vpack.c.bf16 %v855, %v855
        %v861 = vld [vmem:[%s4] sm:$0xf]
        %v862 = vld [vmem:[%s4 + $0x4] sm:$0xf]
        %v863 = vld [vmem:[%s4 + $0x8] sm:$0xf]
        %v864 = vld [vmem:[%s4 + $0xc] sm:$0xf]
        %866 = vrot.lane.b32.xlu0 %v745, 96
        %v867 = vpop.permute.xlu0 %866
        %869 = vrot.lane.b32.xlu0 %v746, 96
        %v870 = vpop.permute.xlu0 %869
        %v872 = vsel %vm748, %v867, 0
        %v875 = vsel %vm748, %v870, 0
        %877 = vmatprep.subr.bf16.mxu0 0
        %878 = vmatpush1.bf16.xpose.msra.mxu0 0
        %879 = vmatprep.subr.bf16.mxu0 0
        %880 = vmatpush1.bf16.xpose.msra.mxu0 0
        %881 = vmatprep.subr.bf16.mxu0 0
        %882 = vmatpush1.bf16.xpose.msra.mxu0 0
        %883 = vmatprep.subr.bf16.mxu0 0
        %884 = vmatpush1.bf16.xpose.msra.mxu0 0
        %885 = vmatprep.subr.bf16.mxu0 0
        %886 = vmatpush1.bf16.xpose.msra.mxu0 0
        %887 = vmatprep.subr.bf16.mxu0 0
        %888 = vmatpush1.bf16.xpose.msra.mxu0 0
        %889 = vmatprep.subr.bf16.mxu0 0
        %890 = vmatpush1.bf16.xpose.msra.mxu0 0
        %891 = vmatprep.subr.bf16.mxu0 0
        %892 = vmatpush1.bf16.xpose.msra.mxu0 %v875
        %893 = vmatprep.subr.bf16.mxu0 0
        %894 = vmatpush2.bf16.xpose.msra.mxu0 0
        %895 = vmatprep.subr.bf16.mxu0 0
        %896 = vmatpush2.bf16.xpose.msra.mxu0 0
        %897 = vmatprep.subr.bf16.mxu0 0
        %898 = vmatpush2.bf16.xpose.msra.mxu0 0
        %899 = vmatprep.subr.bf16.mxu0 0
        %900 = vmatpush2.bf16.xpose.msra.mxu0 0
        %901 = vmatprep.subr.bf16.mxu0 0
        %902 = vmatpush2.bf16.xpose.msra.mxu0 0
        %903 = vmatprep.subr.bf16.mxu0 0
        %904 = vmatpush2.bf16.xpose.msra.mxu0 0
        %905 = vmatprep.subr.bf16.mxu0 0
        %906 = vmatpush2.bf16.xpose.msra.mxu0 0
        %907 = vmatprep.subr.bf16.mxu0 0
        %908 = vmatpush2.bf16.xpose.msra.mxu0 0
        %909 = vmatprep.mubr.bf16.mxu0 0
        %910 = vmatmul.mubr.bf16.gmra.mxu0 %v872
        %v911 = vpop.f32.mrf.mxu0
        %v912 = vadd.f32 0.0, %v911
        %v913 = vpop.f32.mrf.mxu0
        %v914 = vpop.f32.mrf.mxu0
        %v915 = vpop.f32.mrf.mxu0
        %916 = vdwg.mxu0
        %v917 = vmul.f32 %v912, 0.17677669
        %v918 = vsel %vm798, -1e+09, %v917
        %v919 = vsel %vm800, %v918, -inf
        %920 = vmax.xlane.f32.xlu0 %v919
        %v921 = vpop.xlane.xlu0 %920
        %v922 = vsub.f32 %v918, %v921
        %v923 = vmul.f32 %v922, 1.442695
        %v924 = vpow.pop %v923
        %v925 = vsel %vm800, %v924, 0.0
        %926 = vadd.xlane.f32.xlu0 %v925
        %v927 = vpop.xlane.xlu0 %926
        %v928 = vrcp.pop %v927
        %v929 = vmul.f32 %v924, %v928
        %v930 = vpack.c.bf16 %v929, %v929
        %932 = vrot.lane.b32.xlu0 %v747, 96
        %v933 = vpop.permute.xlu0 %932
        %v935 = vsel %vm800, %v930, 0
        %v938 = vsel %vm816, %v933, 0
        %940 = vmatprep.subr.bf16.mxu0 0
        %941 = vmatpush1.bf16.msra.mxu0 0
        %942 = vmatprep.subr.bf16.mxu0 0
        %943 = vmatpush1.bf16.msra.mxu0 0
        %944 = vmatprep.subr.bf16.mxu0 0
        %945 = vmatpush1.bf16.msra.mxu0 0
        %946 = vmatprep.subr.bf16.mxu0 0
        %947 = vmatpush1.bf16.msra.mxu0 0
        %948 = vmatprep.subr.bf16.mxu0 0
        %949 = vmatpush1.bf16.msra.mxu0 0
        %950 = vmatprep.subr.bf16.mxu0 0
        %951 = vmatpush1.bf16.msra.mxu0 0
        %952 = vmatprep.subr.bf16.mxu0 0
        %953 = vmatpush1.bf16.msra.mxu0 0
        %954 = vmatprep.subr.bf16.mxu0 0
        %955 = vmatpush1.bf16.msra.mxu0 %v938
        %956 = vmatprep.subr.bf16.mxu0 0
        %957 = vmatpush2.bf16.msra.mxu0 0
        %958 = vmatprep.subr.bf16.mxu0 0
        %959 = vmatpush2.bf16.msra.mxu0 0
        %960 = vmatprep.subr.bf16.mxu0 0
        %961 = vmatpush2.bf16.msra.mxu0 0
        %962 = vmatprep.subr.bf16.mxu0 0
        %963 = vmatpush2.bf16.msra.mxu0 0
        %964 = vmatprep.subr.bf16.mxu0 0
        %965 = vmatpush2.bf16.msra.mxu0 0
        %966 = vmatprep.subr.bf16.mxu0 0
        %967 = vmatpush2.bf16.msra.mxu0 0
        %968 = vmatprep.subr.bf16.mxu0 0
        %969 = vmatpush2.bf16.msra.mxu0 0
        %970 = vmatprep.subr.bf16.mxu0 0
        %971 = vmatpush2.bf16.msra.mxu0 0
        %972 = vmatprep.mubr.bf16.mxu0 0
        %973 = vmatmul.mubr.bf16.gmra.mxu0 %v935
        %v974 = vpop.f32.mrf.mxu0
        %v975 = vadd.f32 0.0, %v974
        %v976 = vpop.f32.mrf.mxu0
        %v977 = vpop.f32.mrf.mxu0
        %v978 = vpop.f32.mrf.mxu0
        %979 = vdwg.mxu0
        %v980 = vpack.c.bf16 %v975, %v975
        %v981 = vld [vmem:[%s4 + $0x10] sm:$0xf]
        %v982 = vld [vmem:[%s4 + $0x14] sm:$0xf]
        %v983 = vld [vmem:[%s4 + $0x18] sm:$0xf]
        %v984 = vld [vmem:[%s4 + $0x1c] sm:$0xf]
        %v989 = vunpack.c.l.b16 %v981
        %v990 = vunpack.c.l.b16 %v982
        %v991 = vunpack.c.l.b16 %v983
        %v992 = vunpack.c.l.b16 %v984
        %v993 = vpack.c.b16 %v990, %v989
        %v994 = vpack.c.b16 %v992, %v991
        %v998 = vsel %vm748, %v980, 0
        %1000 = vmatprep.subr.bf16.mxu0 0
        %1001 = vmatpush1.bf16.msra.mxu0 0
        %1002 = vmatprep.subr.bf16.mxu0 0
        %1003 = vmatpush1.bf16.msra.mxu0 0
        %1004 = vmatprep.subr.bf16.mxu0 0
        %1005 = vmatpush1.bf16.msra.mxu0 0
        %1006 = vmatprep.subr.bf16.mxu0 0
        %1007 = vmatpush1.bf16.msra.mxu0 0
        %1008 = vmatprep.subr.bf16.mxu0 0
        %1009 = vmatpush1.bf16.msra.mxu0 0
        %1010 = vmatprep.subr.bf16.mxu0 0
        %1011 = vmatpush1.bf16.msra.mxu0 0
        %1012 = vmatprep.subr.bf16.mxu0 0
        %1013 = vmatpush1.bf16.msra.mxu0 %v994
        %1014 = vmatprep.subr.bf16.mxu0 0
        %1015 = vmatpush1.bf16.msra.mxu0 %v993
        %1016 = vmatprep.subr.bf16.mxu0 0
        %1017 = vmatpush2.bf16.msra.mxu0 0
        %1018 = vmatprep.subr.bf16.mxu0 0
        %1019 = vmatpush2.bf16.msra.mxu0 0
        %1020 = vmatprep.subr.bf16.mxu0 0
        %1021 = vmatpush2.bf16.msra.mxu0 0
        %1022 = vmatprep.subr.bf16.mxu0 0
        %1023 = vmatpush2.bf16.msra.mxu0 0
        %1024 = vmatprep.subr.bf16.mxu0 0
        %1025 = vmatpush2.bf16.msra.mxu0 0
        %1026 = vmatprep.subr.bf16.mxu0 0
        %1027 = vmatpush2.bf16.msra.mxu0 0
        %1028 = vmatprep.subr.bf16.mxu0 0
        %1029 = vmatpush2.bf16.msra.mxu0 0
        %1030 = vmatprep.subr.bf16.mxu0 0
        %1031 = vmatpush2.bf16.msra.mxu0 0
        %1032 = vmatprep.mubr.bf16.mxu0 0
        %1033 = vmatmul.mubr.bf16.gmra.mxu0 %v998
        %v1034 = vpop.f32.mrf.mxu0
        %v1035 = vadd.f32 0.0, %v1034
        %v1036 = vpop.f32.mrf.mxu0
        %v1037 = vpop.f32.mrf.mxu0
        %v1038 = vpop.f32.mrf.mxu0
        %1039 = vdwg.mxu0
        %v1044 = vunpack.c.l.b16 %v861
        %v1045 = vunpack.c.l.b16 %v862
        %v1046 = vunpack.c.l.b16 %v863
        %v1047 = vunpack.c.l.b16 %v864
        %v1048 = vpack.c.b16 %v1045, %v1044
        %v1049 = vpack.c.b16 %v1047, %v1046
        %v1053 = vsel %vm748, %v860, 0
        %1055 = vmatprep.subr.bf16.mxu0 0
        %1056 = vmatpush1.bf16.msra.mxu0 0
        %1057 = vmatprep.subr.bf16.mxu0 0
        %1058 = vmatpush1.bf16.msra.mxu0 0
        %1059 = vmatprep.subr.bf16.mxu0 0
        %1060 = vmatpush1.bf16.msra.mxu0 0
        %1061 = vmatprep.subr.bf16.mxu0 0
        %1062 = vmatpush1.bf16.msra.mxu0 0
        %1063 = vmatprep.subr.bf16.mxu0 0
        %1064 = vmatpush1.bf16.msra.mxu0 0
        %1065 = vmatprep.subr.bf16.mxu0 0
        %1066 = vmatpush1.bf16.msra.mxu0 0
        %1067 = vmatprep.subr.bf16.mxu0 0
        %1068 = vmatpush1.bf16.msra.mxu0 %v1049
        %1069 = vmatprep.subr.bf16.mxu0 0
        %1070 = vmatpush1.bf16.msra.mxu0 %v1048
        %1071 = vmatprep.subr.bf16.mxu0 0
        %1072 = vmatpush2.bf16.msra.mxu0 0
        %1073 = vmatprep.subr.bf16.mxu0 0
        %1074 = vmatpush2.bf16.msra.mxu0 0
        %1075 = vmatprep.subr.bf16.mxu0 0
        %1076 = vmatpush2.bf16.msra.mxu0 0
        %1077 = vmatprep.subr.bf16.mxu0 0
        %1078 = vmatpush2.bf16.msra.mxu0 0
        %1079 = vmatprep.subr.bf16.mxu0 0
        %1080 = vmatpush2.bf16.msra.mxu0 0
        %1081 = vmatprep.subr.bf16.mxu0 0
        %1082 = vmatpush2.bf16.msra.mxu0 0
        %1083 = vmatprep.subr.bf16.mxu0 0
        %1084 = vmatpush2.bf16.msra.mxu0 0
        %1085 = vmatprep.subr.bf16.mxu0 0
        %1086 = vmatpush2.bf16.msra.mxu0 0
        %1087 = vmatprep.mubr.bf16.mxu0 0
        %1088 = vmatmul.mubr.bf16.gmra.mxu0 %v1053
        %v1089 = vpop.f32.mrf.mxu0
        %v1090 = vadd.f32 %v1035, %v1089
        %v1091 = vpop.f32.mrf.mxu0
        %v1092 = vpop.f32.mrf.mxu0
        %v1093 = vpop.f32.mrf.mxu0
        %1094 = vdwg.mxu0
        %1095 = vrot.lane.b32.xlu0 %v745, 64
        %v1096 = vpop.permute.xlu0 %1095
        %1097 = vrot.lane.b32.xlu0 %v746, 64
        %v1098 = vpop.permute.xlu0 %1097
        %v1100 = vsel %vm748, %v1096, 0
        %v1103 = vsel %vm748, %v1098, 0
        %1105 = vmatprep.subr.bf16.mxu0 0
        %1106 = vmatpush1.bf16.xpose.msra.mxu0 0
        %1107 = vmatprep.subr.bf16.mxu0 0
        %1108 = vmatpush1.bf16.xpose.msra.mxu0 0
        %1109 = vmatprep.subr.bf16.mxu0 0
        %1110 = vmatpush1.bf16.xpose.msra.mxu0 0
        %1111 = vmatprep.subr.bf16.mxu0 0
        %1112 = vmatpush1.bf16.xpose.msra.mxu0 0
        %1113 = vmatprep.subr.bf16.mxu0 0
        %1114 = vmatpush1.bf16.xpose.msra.mxu0 0
        %1115 = vmatprep.subr.bf16.mxu0 0
        %1116 = vmatpush1.bf16.xpose.msra.mxu0 0
        %1117 = vmatprep.subr.bf16.mxu0 0
        %1118 = vmatpush1.bf16.xpose.msra.mxu0 0
        %1119 = vmatprep.subr.bf16.mxu0 0
        %1120 = vmatpush1.bf16.xpose.msra.mxu0 %v1103
        %1121 = vmatprep.subr.bf16.mxu0 0
        %1122 = vmatpush2.bf16.xpose.msra.mxu0 0
        %1123 = vmatprep.subr.bf16.mxu0 0
        %1124 = vmatpush2.bf16.xpose.msra.mxu0 0
        %1125 = vmatprep.subr.bf16.mxu0 0
        %1126 = vmatpush2.bf16.xpose.msra.mxu0 0
        %1127 = vmatprep.subr.bf16.mxu0 0
        %1128 = vmatpush2.bf16.xpose.msra.mxu0 0
        %1129 = vmatprep.subr.bf16.mxu0 0
        %1130 = vmatpush2.bf16.xpose.msra.mxu0 0
        %1131 = vmatprep.subr.bf16.mxu0 0
        %1132 = vmatpush2.bf16.xpose.msra.mxu0 0
        %1133 = vmatprep.subr.bf16.mxu0 0
        %1134 = vmatpush2.bf16.xpose.msra.mxu0 0
        %1135 = vmatprep.subr.bf16.mxu0 0
        %1136 = vmatpush2.bf16.xpose.msra.mxu0 0
        %1137 = vmatprep.mubr.bf16.mxu0 0
        %1138 = vmatmul.mubr.bf16.gmra.mxu0 %v1100
        %v1139 = vpop.f32.mrf.mxu0
        %v1140 = vadd.f32 0.0, %v1139
        %v1141 = vpop.f32.mrf.mxu0
        %v1142 = vpop.f32.mrf.mxu0
        %v1143 = vpop.f32.mrf.mxu0
        %1144 = vdwg.mxu0
        %v1145 = vmul.f32 %v1140, 0.17677669
        %v1146 = vsel %vm798, -1e+09, %v1145
        %v1147 = vsel %vm800, %v1146, -inf
        %1148 = vmax.xlane.f32.xlu0 %v1147
        %v1149 = vpop.xlane.xlu0 %1148
        %v1150 = vsub.f32 %v1146, %v1149
        %v1151 = vmul.f32 %v1150, 1.442695
        %v1152 = vpow.pop %v1151
        %v1153 = vsel %vm800, %v1152, 0.0
        %1154 = vadd.xlane.f32.xlu0 %v1153
        %v1155 = vpop.xlane.xlu0 %1154
        %v1156 = vrcp.pop %v1155
        %v1157 = vmul.f32 %v1152, %v1156
        %v1158 = vpack.c.bf16 %v1157, %v1157
        %1159 = vrot.lane.b32.xlu0 %v747, 64
        %v1160 = vpop.permute.xlu0 %1159
        %v1162 = vsel %vm800, %v1158, 0
        %v1165 = vsel %vm816, %v1160, 0
        %1167 = vmatprep.subr.bf16.mxu0 0
        %1168 = vmatpush1.bf16.msra.mxu0 0
        %1169 = vmatprep.subr.bf16.mxu0 0
        %1170 = vmatpush1.bf16.msra.mxu0 0
        %1171 = vmatprep.subr.bf16.mxu0 0
        %1172 = vmatpush1.bf16.msra.mxu0 0
        %1173 = vmatprep.subr.bf16.mxu0 0
        %1174 = vmatpush1.bf16.msra.mxu0 0
        %1175 = vmatprep.subr.bf16.mxu0 0
        %1176 = vmatpush1.bf16.msra.mxu0 0
        %1177 = vmatprep.subr.bf16.mxu0 0
        %1178 = vmatpush1.bf16.msra.mxu0 0
        %1179 = vmatprep.subr.bf16.mxu0 0
        %1180 = vmatpush1.bf16.msra.mxu0 0
        %1181 = vmatprep.subr.bf16.mxu0 0
        %1182 = vmatpush1.bf16.msra.mxu0 %v1165
        %1183 = vmatprep.subr.bf16.mxu0 0
        %1184 = vmatpush2.bf16.msra.mxu0 0
        %1185 = vmatprep.subr.bf16.mxu0 0
        %1186 = vmatpush2.bf16.msra.mxu0 0
        %1187 = vmatprep.subr.bf16.mxu0 0
        %1188 = vmatpush2.bf16.msra.mxu0 0
        %1189 = vmatprep.subr.bf16.mxu0 0
        %1190 = vmatpush2.bf16.msra.mxu0 0
        %1191 = vmatprep.subr.bf16.mxu0 0
        %1192 = vmatpush2.bf16.msra.mxu0 0
        %1193 = vmatprep.subr.bf16.mxu0 0
        %1194 = vmatpush2.bf16.msra.mxu0 0
        %1195 = vmatprep.subr.bf16.mxu0 0
        %1196 = vmatpush2.bf16.msra.mxu0 0
        %1197 = vmatprep.subr.bf16.mxu0 0
        %1198 = vmatpush2.bf16.msra.mxu0 0
        %1199 = vmatprep.mubr.bf16.mxu0 0
        %1200 = vmatmul.mubr.bf16.gmra.mxu0 %v1162
        %v1201 = vpop.f32.mrf.mxu0
        %v1202 = vadd.f32 0.0, %v1201
        %v1203 = vpop.f32.mrf.mxu0
        %v1204 = vpop.f32.mrf.mxu0
        %v1205 = vpop.f32.mrf.mxu0
        %1206 = vdwg.mxu0
        %v1207 = vpack.c.bf16 %v1202, %v1202
        %v1208 = vld [vmem:[%s4 + $0x20] sm:$0xf]
        %v1209 = vld [vmem:[%s4 + $0x24] sm:$0xf]
        %v1210 = vld [vmem:[%s4 + $0x28] sm:$0xf]
        %v1211 = vld [vmem:[%s4 + $0x2c] sm:$0xf]
        %v1216 = vunpack.c.l.b16 %v1208
        %v1217 = vunpack.c.l.b16 %v1209
        %v1218 = vunpack.c.l.b16 %v1210
        %v1219 = vunpack.c.l.b16 %v1211
        %v1220 = vpack.c.b16 %v1217, %v1216
        %v1221 = vpack.c.b16 %v1219, %v1218
        %v1225 = vsel %vm748, %v1207, 0
        %1227 = vmatprep.subr.bf16.mxu0 0
        %1228 = vmatpush1.bf16.msra.mxu0 0
        %1229 = vmatprep.subr.bf16.mxu0 0
        %1230 = vmatpush1.bf16.msra.mxu0 0
        %1231 = vmatprep.subr.bf16.mxu0 0
        %1232 = vmatpush1.bf16.msra.mxu0 0
        %1233 = vmatprep.subr.bf16.mxu0 0
        %1234 = vmatpush1.bf16.msra.mxu0 0
        %1235 = vmatprep.subr.bf16.mxu0 0
        %1236 = vmatpush1.bf16.msra.mxu0 0
        %1237 = vmatprep.subr.bf16.mxu0 0
        %1238 = vmatpush1.bf16.msra.mxu0 0
        %1239 = vmatprep.subr.bf16.mxu0 0
        %1240 = vmatpush1.bf16.msra.mxu0 %v1221
        %1241 = vmatprep.subr.bf16.mxu0 0
        %1242 = vmatpush1.bf16.msra.mxu0 %v1220
        %1243 = vmatprep.subr.bf16.mxu0 0
        %1244 = vmatpush2.bf16.msra.mxu0 0
        %1245 = vmatprep.subr.bf16.mxu0 0
        %1246 = vmatpush2.bf16.msra.mxu0 0
        %1247 = vmatprep.subr.bf16.mxu0 0
        %1248 = vmatpush2.bf16.msra.mxu0 0
        %1249 = vmatprep.subr.bf16.mxu0 0
        %1250 = vmatpush2.bf16.msra.mxu0 0
        %1251 = vmatprep.subr.bf16.mxu0 0
        %1252 = vmatpush2.bf16.msra.mxu0 0
        %1253 = vmatprep.subr.bf16.mxu0 0
        %1254 = vmatpush2.bf16.msra.mxu0 0
        %1255 = vmatprep.subr.bf16.mxu0 0
        %1256 = vmatpush2.bf16.msra.mxu0 0
        %1257 = vmatprep.subr.bf16.mxu0 0
        %1258 = vmatpush2.bf16.msra.mxu0 0
        %1259 = vmatprep.mubr.bf16.mxu0 0
        %1260 = vmatmul.mubr.bf16.gmra.mxu0 %v1225
        %v1261 = vpop.f32.mrf.mxu0
        %v1262 = vadd.f32 0.0, %v1261
        %v1263 = vpop.f32.mrf.mxu0
        %v1264 = vpop.f32.mrf.mxu0
        %v1265 = vpop.f32.mrf.mxu0
        %1266 = vdwg.mxu0
        %v1267 = vadd.f32 %v1090, %v1262
        %1268 = vrot.lane.b32.xlu0 %v745, 32
        %v1269 = vpop.permute.xlu0 %1268
        %1270 = vrot.lane.b32.xlu0 %v746, 32
        %v1271 = vpop.permute.xlu0 %1270
        %v1273 = vsel %vm748, %v1269, 0
        %v1276 = vsel %vm748, %v1271, 0
        %1278 = vmatprep.subr.bf16.mxu0 0
        %1279 = vmatpush1.bf16.xpose.msra.mxu0 0
        %1280 = vmatprep.subr.bf16.mxu0 0
        %1281 = vmatpush1.bf16.xpose.msra.mxu0 0
        %1282 = vmatprep.subr.bf16.mxu0 0
        %1283 = vmatpush1.bf16.xpose.msra.mxu0 0
        %1284 = vmatprep.subr.bf16.mxu0 0
        %1285 = vmatpush1.bf16.xpose.msra.mxu0 0
        %1286 = vmatprep.subr.bf16.mxu0 0
        %1287 = vmatpush1.bf16.xpose.msra.mxu0 0
        %1288 = vmatprep.subr.bf16.mxu0 0
        %1289 = vmatpush1.bf16.xpose.msra.mxu0 0
        %1290 = vmatprep.subr.bf16.mxu0 0
        %1291 = vmatpush1.bf16.xpose.msra.mxu0 0
        %1292 = vmatprep.subr.bf16.mxu0 0
        %1293 = vmatpush1.bf16.xpose.msra.mxu0 %v1276
        %1294 = vmatprep.subr.bf16.mxu0 0
        %1295 = vmatpush2.bf16.xpose.msra.mxu0 0
        %1296 = vmatprep.subr.bf16.mxu0 0
        %1297 = vmatpush2.bf16.xpose.msra.mxu0 0
        %1298 = vmatprep.subr.bf16.mxu0 0
        %1299 = vmatpush2.bf16.xpose.msra.mxu0 0
        %1300 = vmatprep.subr.bf16.mxu0 0
        %1301 = vmatpush2.bf16.xpose.msra.mxu0 0
        %1302 = vmatprep.subr.bf16.mxu0 0
        %1303 = vmatpush2.bf16.xpose.msra.mxu0 0
        %1304 = vmatprep.subr.bf16.mxu0 0
        %1305 = vmatpush2.bf16.xpose.msra.mxu0 0
        %1306 = vmatprep.subr.bf16.mxu0 0
        %1307 = vmatpush2.bf16.xpose.msra.mxu0 0
        %1308 = vmatprep.subr.bf16.mxu0 0
        %1309 = vmatpush2.bf16.xpose.msra.mxu0 0
        %1310 = vmatprep.mubr.bf16.mxu0 0
        %1311 = vmatmul.mubr.bf16.gmra.mxu0 %v1273
        %v1312 = vpop.f32.mrf.mxu0
        %v1313 = vadd.f32 0.0, %v1312
        %v1314 = vpop.f32.mrf.mxu0
        %v1315 = vpop.f32.mrf.mxu0
        %v1316 = vpop.f32.mrf.mxu0
        %1317 = vdwg.mxu0
        %v1318 = vmul.f32 %v1313, 0.17677669
        %v1319 = vsel %vm798, -1e+09, %v1318
        %v1320 = vsel %vm800, %v1319, -inf
        %1321 = vmax.xlane.f32.xlu0 %v1320
        %v1322 = vpop.xlane.xlu0 %1321
        %v1323 = vsub.f32 %v1319, %v1322
        %v1324 = vmul.f32 %v1323, 1.442695
        %v1325 = vpow.pop %v1324
        %v1326 = vsel %vm800, %v1325, 0.0
        %1327 = vadd.xlane.f32.xlu0 %v1326
        %v1328 = vpop.xlane.xlu0 %1327
        %v1329 = vrcp.pop %v1328
        %v1330 = vmul.f32 %v1325, %v1329
        %v1331 = vpack.c.bf16 %v1330, %v1330
        %1332 = vrot.lane.b32.xlu0 %v747, 32
        %v1333 = vpop.permute.xlu0 %1332
        %v1335 = vsel %vm800, %v1331, 0
        %v1338 = vsel %vm816, %v1333, 0
        %1340 = vmatprep.subr.bf16.mxu0 0
        %1341 = vmatpush1.bf16.msra.mxu0 0
        %1342 = vmatprep.subr.bf16.mxu0 0
        %1343 = vmatpush1.bf16.msra.mxu0 0
        %1344 = vmatprep.subr.bf16.mxu0 0
        %1345 = vmatpush1.bf16.msra.mxu0 0
        %1346 = vmatprep.subr.bf16.mxu0 0
        %1347 = vmatpush1.bf16.msra.mxu0 0
        %1348 = vmatprep.subr.bf16.mxu0 0
        %1349 = vmatpush1.bf16.msra.mxu0 0
        %1350 = vmatprep.subr.bf16.mxu0 0
        %1351 = vmatpush1.bf16.msra.mxu0 0
        %1352 = vmatprep.subr.bf16.mxu0 0
        %1353 = vmatpush1.bf16.msra.mxu0 0
        %1354 = vmatprep.subr.bf16.mxu0 0
        %1355 = vmatpush1.bf16.msra.mxu0 %v1338
        %1356 = vmatprep.subr.bf16.mxu0 0
        %1357 = vmatpush2.bf16.msra.mxu0 0
        %1358 = vmatprep.subr.bf16.mxu0 0
        %1359 = vmatpush2.bf16.msra.mxu0 0
        %1360 = vmatprep.subr.bf16.mxu0 0
        %1361 = vmatpush2.bf16.msra.mxu0 0
        %1362 = vmatprep.subr.bf16.mxu0 0
        %1363 = vmatpush2.bf16.msra.mxu0 0
        %1364 = vmatprep.subr.bf16.mxu0 0
        %1365 = vmatpush2.bf16.msra.mxu0 0
        %1366 = vmatprep.subr.bf16.mxu0 0
        %1367 = vmatpush2.bf16.msra.mxu0 0
        %1368 = vmatprep.subr.bf16.mxu0 0
        %1369 = vmatpush2.bf16.msra.mxu0 0
        %1370 = vmatprep.subr.bf16.mxu0 0
        %1371 = vmatpush2.bf16.msra.mxu0 0
        %1372 = vmatprep.mubr.bf16.mxu0 0
        %1373 = vmatmul.mubr.bf16.gmra.mxu0 %v1335
        %v1374 = vpop.f32.mrf.mxu0
        %v1375 = vadd.f32 0.0, %v1374
        %v1376 = vpop.f32.mrf.mxu0
        %v1377 = vpop.f32.mrf.mxu0
        %v1378 = vpop.f32.mrf.mxu0
        %1379 = vdwg.mxu0
        %v1380 = vpack.c.bf16 %v1375, %v1375
        %v1381 = vld [vmem:[%s4 + $0x30] sm:$0xf]
        %v1382 = vld [vmem:[%s4 + $0x34] sm:$0xf]
        %v1383 = vld [vmem:[%s4 + $0x38] sm:$0xf]
        %v1384 = vld [vmem:[%s4 + $0x3c] sm:$0xf]
        %v1389 = vunpack.c.l.b16 %v1381
        %v1390 = vunpack.c.l.b16 %v1382
        %v1391 = vunpack.c.l.b16 %v1383
        %v1392 = vunpack.c.l.b16 %v1384
        %v1393 = vpack.c.b16 %v1390, %v1389
        %v1394 = vpack.c.b16 %v1392, %v1391
        %v1398 = vsel %vm748, %v1380, 0
        %1400 = vmatprep.subr.bf16.mxu0 0
        %1401 = vmatpush1.bf16.msra.mxu0 0
        %1402 = vmatprep.subr.bf16.mxu0 0
        %1403 = vmatpush1.bf16.msra.mxu0 0
        %1404 = vmatprep.subr.bf16.mxu0 0
        %1405 = vmatpush1.bf16.msra.mxu0 0
        %1406 = vmatprep.subr.bf16.mxu0 0
        %1407 = vmatpush1.bf16.msra.mxu0 0
        %1408 = vmatprep.subr.bf16.mxu0 0
        %1409 = vmatpush1.bf16.msra.mxu0 0
        %1410 = vmatprep.subr.bf16.mxu0 0
        %1411 = vmatpush1.bf16.msra.mxu0 0
        %1412 = vmatprep.subr.bf16.mxu0 0
        %1413 = vmatpush1.bf16.msra.mxu0 %v1394
        %1414 = vmatprep.subr.bf16.mxu0 0
        %1415 = vmatpush1.bf16.msra.mxu0 %v1393
        %1416 = vmatprep.subr.bf16.mxu0 0
        %1417 = vmatpush2.bf16.msra.mxu0 0
        %1418 = vmatprep.subr.bf16.mxu0 0
        %1419 = vmatpush2.bf16.msra.mxu0 0
        %1420 = vmatprep.subr.bf16.mxu0 0
        %1421 = vmatpush2.bf16.msra.mxu0 0
        %1422 = vmatprep.subr.bf16.mxu0 0
        %1423 = vmatpush2.bf16.msra.mxu0 0
        %1424 = vmatprep.subr.bf16.mxu0 0
        %1425 = vmatpush2.bf16.msra.mxu0 0
        %1426 = vmatprep.subr.bf16.mxu0 0
        %1427 = vmatpush2.bf16.msra.mxu0 0
        %1428 = vmatprep.subr.bf16.mxu0 0
        %1429 = vmatpush2.bf16.msra.mxu0 0
        %1430 = vmatprep.subr.bf16.mxu0 0
        %1431 = vmatpush2.bf16.msra.mxu0 0
        %1432 = vmatprep.mubr.bf16.mxu0 0
        %1433 = vmatmul.mubr.bf16.gmra.mxu0 %v1398
        %v1434 = vpop.f32.mrf.mxu0
        %v1435 = vadd.f32 0.0, %v1434
        %v1436 = vpop.f32.mrf.mxu0
        %v1437 = vpop.f32.mrf.mxu0
        %v1438 = vpop.f32.mrf.mxu0
        %1439 = vdwg.mxu0
        %v1440 = vadd.f32 %v1267, %v1435
        %v1441 = vld [vmem:[%s5] sm:$0x1]
        %v1443 = vlaneseq
        %v1444 = vshrl.u32 %v1443, 7
        %v1445 = vsub.s32 0, %v1444
        %v1446 = vrot.slane %v1441, %v1445
        %v1448 = vadd.f32 %v1440, %v1446
        %v1449 = vadd.f32 %v1448, %v483
        %v1450 = vld [vmem:[%s6] sm:$0x1]
        %v1451 = vld [vmem:[%s7] sm:$0x1]
        %1452 = vadd.xlane.f32.xlu0 %v1449
        %v1453 = vpop.xlane.xlu0 %1452
        %v1454 = vrcp.pop 128.0
        %v1455 = vmul.f32 %v1453, %v1454
        %v1456 = vsub.f32 %v1449, %v1455
        %v1457 = vmul.f32 %v1456, %v1456
        %1458 = vadd.xlane.f32.xlu0 %v1457
        %v1459 = vpop.xlane.xlu0 %1458
        %v1460 = vmul.f32 %v1459, %v1454
        %v1461 = vadd.f32 %v1460, 1e-05
        %v1462 = vrsqrt.pop %v1461
        %v1463 = vmul.f32 %v1456, %v1462
        %v1465 = vlaneseq
        %v1466 = vshrl.u32 %v1465, 7
        %v1467 = vsub.s32 0, %v1466
        %v1468 = vrot.slane %v1450, %v1467
        %v1470 = vmul.f32 %v1463, %v1468
        %v1472 = vlaneseq
        %v1473 = vshrl.u32 %v1472, 7
        %v1474 = vsub.s32 0, %v1473
        %v1475 = vrot.slane %v1451, %v1474
        %v1477 = vadd.f32 %v1470, %v1475
        %v1478 = vpack.c.bf16 %v1477, %v1477
        %v1479 = vld [vmem:[%s8] sm:$0xff]
        %v1480 = vld [vmem:[%s8 + $0x8] sm:$0xff]
        %v1481 = vld [vmem:[%s8 + $0x10] sm:$0xff]
        %v1482 = vld [vmem:[%s8 + $0x18] sm:$0xff]
        %v1483 = vld [vmem:[%s8 + $0x20] sm:$0xff]
        %v1484 = vld [vmem:[%s8 + $0x28] sm:$0xff]
        %v1485 = vld [vmem:[%s8 + $0x30] sm:$0xff]
        %v1486 = vld [vmem:[%s8 + $0x38] sm:$0xff]
        %v1487 = vld [vmem:[%s8 + $0x40] sm:$0xff]
        %v1488 = vld [vmem:[%s8 + $0x48] sm:$0xff]
        %v1489 = vld [vmem:[%s8 + $0x50] sm:$0xff]
        %v1490 = vld [vmem:[%s8 + $0x58] sm:$0xff]
        %v1491 = vld [vmem:[%s8 + $0x60] sm:$0xff]
        %v1492 = vld [vmem:[%s8 + $0x68] sm:$0xff]
        %v1493 = vld [vmem:[%s8 + $0x70] sm:$0xff]
        %v1494 = vld [vmem:[%s8 + $0x78] sm:$0xff]
        %v1495 = vld [vmem:[%s9] sm:$0x3]
        %v1497 = vlaneseq
        %v1498 = vshrl.u32 %v1497, 7
        %v1499 = vsub.s32 0, %v1498
        %v1500 = vrot.slane %v1495, %v1499
        %v1501 = vlaneseq
        %v1502 = vshrl.u32 %v1501, 7
        %v1503 = vsub.s32 1, %v1502
        %v1504 = vrot.slane %v1495, %v1503
        %v1523 = vunpack.c.l.b16 %v1479
        %v1524 = vunpack.c.h.b16 %v1479
        %v1525 = vunpack.c.l.b16 %v1480
        %v1526 = vunpack.c.h.b16 %v1480
        %v1527 = vunpack.c.l.b16 %v1481
        %v1528 = vunpack.c.h.b16 %v1481
        %v1529 = vunpack.c.l.b16 %v1482
        %v1530 = vunpack.c.h.b16 %v1482
        %v1531 = vunpack.c.l.b16 %v1483
        %v1532 = vunpack.c.h.b16 %v1483
        %v1533 = vunpack.c.l.b16 %v1484
        %v1534 = vunpack.c.h.b16 %v1484
        %v1535 = vunpack.c.l.b16 %v1485
        %v1536 = vunpack.c.h.b16 %v1485
        %v1537 = vunpack.c.l.b16 %v1486
        %v1538 = vunpack.c.h.b16 %v1486
        %v1539 = vunpack.c.l.b16 %v1487
        %v1540 = vunpack.c.h.b16 %v1487
        %v1541 = vunpack.c.l.b16 %v1488
        %v1542 = vunpack.c.h.b16 %v1488
        %v1543 = vunpack.c.l.b16 %v1489
        %v1544 = vunpack.c.h.b16 %v1489
        %v1545 = vunpack.c.l.b16 %v1490
        %v1546 = vunpack.c.h.b16 %v1490
        %v1547 = vunpack.c.l.b16 %v1491
        %v1548 = vunpack.c.h.b16 %v1491
        %v1549 = vunpack.c.l.b16 %v1492
        %v1550 = vunpack.c.h.b16 %v1492
        %v1551 = vunpack.c.l.b16 %v1493
        %v1552 = vunpack.c.h.b16 %v1493
        %v1553 = vunpack.c.l.b16 %v1494
        %v1554 = vunpack.c.h.b16 %v1494
        %v1555 = vpack.c.b16 %v1525, %v1523
        %v1556 = vpack.c.b16 %v1526, %v1524
        %v1557 = vpack.c.b16 %v1529, %v1527
        %v1558 = vpack.c.b16 %v1530, %v1528
        %v1559 = vpack.c.b16 %v1533, %v1531
        %v1560 = vpack.c.b16 %v1534, %v1532
        %v1561 = vpack.c.b16 %v1537, %v1535
        %v1562 = vpack.c.b16 %v1538, %v1536
        %v1563 = vpack.c.b16 %v1541, %v1539
        %v1564 = vpack.c.b16 %v1542, %v1540
        %v1565 = vpack.c.b16 %v1545, %v1543
        %v1566 = vpack.c.b16 %v1546, %v1544
        %v1567 = vpack.c.b16 %v1549, %v1547
        %v1568 = vpack.c.b16 %v1550, %v1548
        %v1569 = vpack.c.b16 %v1553, %v1551
        %v1570 = vpack.c.b16 %v1554, %v1552
        %1587 = vmatprep.subr.bf16.mxu0 %v1570
        %1588 = vmatpush1.bf16.msra.mxu0 %v1569
        %1589 = vmatprep.subr.bf16.mxu0 %v1568
        %1590 = vmatpush1.bf16.msra.mxu0 %v1567
        %1591 = vmatprep.subr.bf16.mxu0 %v1566
        %1592 = vmatpush1.bf16.msra.mxu0 %v1565
        %1593 = vmatprep.subr.bf16.mxu0 %v1564
        %1594 = vmatpush1.bf16.msra.mxu0 %v1563
        %1595 = vmatprep.subr.bf16.mxu0 %v1562
        %1596 = vmatpush1.bf16.msra.mxu0 %v1561
        %1597 = vmatprep.subr.bf16.mxu0 %v1560
        %1598 = vmatpush1.bf16.msra.mxu0 %v1559
        %1599 = vmatprep.subr.bf16.mxu0 %v1558
        %1600 = vmatpush1.bf16.msra.mxu0 %v1557
        %1601 = vmatprep.subr.bf16.mxu0 %v1556
        %1602 = vmatpush1.bf16.msra.mxu0 %v1555
        %1603 = vmatprep.subr.bf16.mxu0 0
        %1604 = vmatpush2.bf16.msra.mxu0 0
        %1605 = vmatprep.subr.bf16.mxu0 0
        %1606 = vmatpush2.bf16.msra.mxu0 0
        %1607 = vmatprep.subr.bf16.mxu0 0
        %1608 = vmatpush2.bf16.msra.mxu0 0
        %1609 = vmatprep.subr.bf16.mxu0 0
        %1610 = vmatpush2.bf16.msra.mxu0 0
        %1611 = vmatprep.subr.bf16.mxu0 0
        %1612 = vmatpush2.bf16.msra.mxu0 0
        %1613 = vmatprep.subr.bf16.mxu0 0
        %1614 = vmatpush2.bf16.msra.mxu0 0
        %1615 = vmatprep.subr.bf16.mxu0 0
        %1616 = vmatpush2.bf16.msra.mxu0 0
        %1617 = vmatprep.subr.bf16.mxu0 0
        %1618 = vmatpush2.bf16.msra.mxu0 0
        %1619 = vmatprep.mubr.bf16.mxu0 0
        %1620 = vmatmul.mubr.bf16.gmra.mxu0 %v1478
        %v1621 = vpop.f32.mrf.mxu0
        %v1622 = vadd.f32 %v1500, %v1621
        %v1623 = vpop.f32.mrf.mxu0
        %v1624 = vadd.f32 %v1504, %v1623
        %v1625 = vpop.f32.mrf.mxu0
        %v1626 = vpop.f32.mrf.mxu0
        %1627 = vdwg.mxu0
        %v1628 = vmax.f32 %v1622, 0.0
        %v1629 = vmax.f32 %v1624, 0.0
        %v1630 = vpack.c.bf16 %v1628, %v1628
        %v1631 = vpack.c.bf16 %v1629, %v1629
        %v1632 = vld [vmem:[%s10] sm:$0xf]
        %v1633 = vld [vmem:[%s10 + $0x4] sm:$0xf]
        %v1634 = vld [vmem:[%s10 + $0x8] sm:$0xf]
        %v1635 = vld [vmem:[%s10 + $0xc] sm:$0xf]
        %v1636 = vld [vmem:[%s10 + $0x10] sm:$0xf]
        %v1637 = vld [vmem:[%s10 + $0x14] sm:$0xf]
        %v1638 = vld [vmem:[%s10 + $0x18] sm:$0xf]
        %v1639 = vld [vmem:[%s10 + $0x1c] sm:$0xf]
        %v1640 = vld [vmem:[%s10 + $0x20] sm:$0xf]
        %v1641 = vld [vmem:[%s10 + $0x24] sm:$0xf]
        %v1642 = vld [vmem:[%s10 + $0x28] sm:$0xf]
        %v1643 = vld [vmem:[%s10 + $0x2c] sm:$0xf]
        %v1644 = vld [vmem:[%s10 + $0x30] sm:$0xf]
        %v1645 = vld [vmem:[%s10 + $0x34] sm:$0xf]
        %v1646 = vld [vmem:[%s10 + $0x38] sm:$0xf]
        %v1647 = vld [vmem:[%s10 + $0x3c] sm:$0xf]
        %v1648 = vld [vmem:[%s10 + $0x40] sm:$0xf]
        %v1649 = vld [vmem:[%s10 + $0x44] sm:$0xf]
        %v1650 = vld [vmem:[%s10 + $0x48] sm:$0xf]
        %v1651 = vld [vmem:[%s10 + $0x4c] sm:$0xf]
        %v1652 = vld [vmem:[%s10 + $0x50] sm:$0xf]
        %v1653 = vld [vmem:[%s10 + $0x54] sm:$0xf]
        %v1654 = vld [vmem:[%s10 + $0x58] sm:$0xf]
        %v1655 = vld [vmem:[%s10 + $0x5c] sm:$0xf]
        %v1656 = vld [vmem:[%s10 + $0x60] sm:$0xf]
        %v1657 = vld [vmem:[%s10 + $0x64] sm:$0xf]
        %v1658 = vld [vmem:[%s10 + $0x68] sm:$0xf]
        %v1659 = vld [vmem:[%s10 + $0x6c] sm:$0xf]
        %v1660 = vld [vmem:[%s10 + $0x70] sm:$0xf]
        %v1661 = vld [vmem:[%s10 + $0x74] sm:$0xf]
        %v1662 = vld [vmem:[%s10 + $0x78] sm:$0xf]
        %v1663 = vld [vmem:[%s10 + $0x7c] sm:$0xf]
        %v1664 = vld [vmem:[%s11] sm:$0x1]
        %v1666 = vlaneseq
        %v1667 = vshrl.u32 %v1666, 7
        %v1668 = vsub.s32 0, %v1667
        %v1669 = vrot.slane %v1664, %v1668
        %v1703 = vunpack.c.l.b16 %v1632
        %v1704 = vunpack.c.l.b16 %v1633
        %v1705 = vunpack.c.l.b16 %v1634
        %v1706 = vunpack.c.l.b16 %v1635
        %v1707 = vunpack.c.l.b16 %v1636
        %v1708 = vunpack.c.l.b16 %v1637
        %v1709 = vunpack.c.l.b16 %v1638
        %v1710 = vunpack.c.l.b16 %v1639
        %v1711 = vunpack.c.l.b16 %v1640
        %v1712 = vunpack.c.l.b16 %v1641
        %v1713 = vunpack.c.l.b16 %v1642
        %v1714 = vunpack.c.l.b16 %v1643
        %v1715 = vunpack.c.l.b16 %v1644
        %v1716 = vunpack.c.l.b16 %v1645
        %v1717 = vunpack.c.l.b16 %v1646
        %v1718 = vunpack.c.l.b16 %v1647
        %v1719 = vunpack.c.l.b16 %v1648
        %v1720 = vunpack.c.l.b16 %v1649
        %v1721 = vunpack.c.l.b16 %v1650
        %v1722 = vunpack.c.l.b16 %v1651
        %v1723 = vunpack.c.l.b16 %v1652
        %v1724 = vunpack.c.l.b16 %v1653
        %v1725 = vunpack.c.l.b16 %v1654
        %v1726 = vunpack.c.l.b16 %v1655
        %v1727 = vunpack.c.l.b16 %v1656
        %v1728 = vunpack.c.l.b16 %v1657
        %v1729 = vunpack.c.l.b16 %v1658
        %v1730 = vunpack.c.l.b16 %v1659
        %v1731 = vunpack.c.l.b16 %v1660
        %v1732 = vunpack.c.l.b16 %v1661
        %v1733 = vunpack.c.l.b16 %v1662
        %v1734 = vunpack.c.l.b16 %v1663
        %v1735 = vpack.c.b16 %v1704, %v1703
        %v1736 = vpack.c.b16 %v1706, %v1705
        %v1737 = vpack.c.b16 %v1708, %v1707
        %v1738 = vpack.c.b16 %v1710, %v1709
        %v1739 = vpack.c.b16 %v1712, %v1711
        %v1740 = vpack.c.b16 %v1714, %v1713
        %v1741 = vpack.c.b16 %v1716, %v1715
        %v1742 = vpack.c.b16 %v1718, %v1717
        %v1743 = vpack.c.b16 %v1720, %v1719
        %v1744 = vpack.c.b16 %v1722, %v1721
        %v1745 = vpack.c.b16 %v1724, %v1723
        %v1746 = vpack.c.b16 %v1726, %v1725
        %v1747 = vpack.c.b16 %v1728, %v1727
        %v1748 = vpack.c.b16 %v1730, %v1729
        %v1749 = vpack.c.b16 %v1732, %v1731
        %v1750 = vpack.c.b16 %v1734, %v1733
        %1767 = vmatprep.subr.bf16.mxu0 0
        %1768 = vmatpush1.bf16.msra.mxu0 %v1742
        %1769 = vmatprep.subr.bf16.mxu0 0
        %1770 = vmatpush1.bf16.msra.mxu0 %v1741
        %1771 = vmatprep.subr.bf16.mxu0 0
        %1772 = vmatpush1.bf16.msra.mxu0 %v1740
        %1773 = vmatprep.subr.bf16.mxu0 0
        %1774 = vmatpush1.bf16.msra.mxu0 %v1739
        %1775 = vmatprep.subr.bf16.mxu0 0
        %1776 = vmatpush1.bf16.msra.mxu0 %v1738
        %1777 = vmatprep.subr.bf16.mxu0 0
        %1778 = vmatpush1.bf16.msra.mxu0 %v1737
        %1779 = vmatprep.subr.bf16.mxu0 0
        %1780 = vmatpush1.bf16.msra.mxu0 %v1736
        %1781 = vmatprep.subr.bf16.mxu0 0
        %1782 = vmatpush1.bf16.msra.mxu0 %v1735
        %1783 = vmatprep.subr.bf16.mxu0 0
        %1784 = vmatpush2.bf16.msra.mxu0 %v1750
        %1785 = vmatprep.subr.bf16.mxu0 0
        %1786 = vmatpush2.bf16.msra.mxu0 %v1749
        %1787 = vmatprep.subr.bf16.mxu0 0
        %1788 = vmatpush2.bf16.msra.mxu0 %v1748
        %1789 = vmatprep.subr.bf16.mxu0 0
        %1790 = vmatpush2.bf16.msra.mxu0 %v1747
        %1791 = vmatprep.subr.bf16.mxu0 0
        %1792 = vmatpush2.bf16.msra.mxu0 %v1746
        %1793 = vmatprep.subr.bf16.mxu0 0
        %1794 = vmatpush2.bf16.msra.mxu0 %v1745
        %1795 = vmatprep.subr.bf16.mxu0 0
        %1796 = vmatpush2.bf16.msra.mxu0 %v1744
        %1797 = vmatprep.subr.bf16.mxu0 0
        %1798 = vmatpush2.bf16.msra.mxu0 %v1743
        %1799 = vmatprep.mubr.bf16.mxu0 %v1631
        %1800 = vmatmul.mubr.bf16.gmra.mxu0 %v1630
        %v1801 = vpop.f32.mrf.mxu0
        %v1802 = vadd.f32 %v1669, %v1801
        %v1803 = vpop.f32.mrf.mxu0
        %v1804 = vpop.f32.mrf.mxu0
        %v1805 = vpop.f32.mrf.mxu0
        %1806 = vdwg.mxu0
        %v1807 = vadd.f32 %v1802, %v1477
        %v1808 = vld [vmem:[%s12] sm:$0x1]
        %v1809 = vld [vmem:[%s13] sm:$0x1]
        %1810 = vadd.xlane.f32.xlu0 %v1807
        %v1811 = vpop.xlane.xlu0 %1810
        %v1812 = vmul.f32 %v1811, %v1454
        %v1813 = vsub.f32 %v1807, %v1812
        %v1814 = vmul.f32 %v1813, %v1813
        %1815 = vadd.xlane.f32.xlu0 %v1814
        %v1816 = vpop.xlane.xlu0 %1815
        %v1817 = vmul.f32 %v1816, %v1454
        %v1818 = vadd.f32 %v1817, 1e-05
        %v1819 = vrsqrt.pop %v1818
        %v1820 = vmul.f32 %v1813, %v1819
        %v1822 = vlaneseq
        %v1823 = vshrl.u32 %v1822, 7
        %v1824 = vsub.s32 0, %v1823
        %v1825 = vrot.slane %v1808, %v1824
        %v1827 = vmul.f32 %v1820, %v1825
        %v1829 = vlaneseq
        %v1830 = vshrl.u32 %v1829, 7
        %v1831 = vsub.s32 0, %v1830
        %v1832 = vrot.slane %v1809, %v1831
        %v1834 = vadd.f32 %v1827, %v1832
        %1835 = vst [vmem:[%s471] sm:$0xff] %v1834
        %s1836 = sand.u32 %s340, 1
        %s1837 = scalar_lea.sflag [#allocation3], %s1836
        %s1838 = sand.u32 %s340, 1
        %s1839 = smul.addr %s1838, 8
        %s1840 = scalar_lea.vmem [#allocation2], %s1839
        // Predicated region
        $region77: #{encoder_forward.3} parent=75 // pred_check
          %p1841 = pneg %p350
        $region78: #{encoder_forward.3} parent=75 // pred_check_branch
          %1843 = sbr.rel (%p1841) target = $region80
        $region79: #{encoder_forward.3} parent=75 // pred_region
          %s1845 = ssub.s32 128, 128
          %1846 = vsyncadd %s1837, %s1845
          %s1847 = smul.addr %s28, 128
          %s1848 = scalar_lea.hbm %s14, %s1847
          %s1850 = sshll.u32 %s1840, 4
          %s1851 = int_to_ptr.vmem [resolvable:$true] %s1850
          %1853 = dma.vmem_to_hbm [thread:$0]  %s1851, 128, %s1848, %s1837
        $region80: #{encoder_forward.3} parent=75 // pred_fallthru
          _
      $region76: #{encoder_forward.3} parent=5 // pred_fallthru
        _
      %p1854 = scmp.le.s32.totalorder 2, %s23
      // Predicated region
      $region81: #{encoder_forward.3} parent=5 // pred_check
        %p1855 = pneg %p1854
      $region82: #{encoder_forward.3} parent=5 // pred_check_branch
        %1857 = sbr.rel (%p1855) target = $region84
      $region83: #{encoder_forward.3} parent=5 // pred_region
        %s1858 = ssub.s32 %s23, 2
        // Predicated region
        $region85: #{encoder_forward.3} parent=83 // pred_check
          %p1859 = pneg %p356
        $region86: #{encoder_forward.3} parent=83 // pred_check_branch
          %1861 = sbr.rel (%p1859) target = $region88
        $region87: #{encoder_forward.3} parent=83 // pred_region
          %s1862 = sand.u32 %s341, 1
          %s1863 = scalar_lea.sflag [#allocation3], %s1862
          %s1864 = sand.u32 %s341, 1
          %s1865 = smul.addr %s1864, 8
          %s1866 = scalar_lea.vmem [#allocation2], %s1865
          %1867 = dma.done %s1863, 128
        $region88: #{encoder_forward.3} parent=83 // pred_fallthru
          _
      $region84: #{encoder_forward.3} parent=5 // pred_fallthru
        _
    $region6: #{encoder_forward.3} parent=1 // loop_footer
      %s27 = sadd.s32 1, %s23
    $region7: #{encoder_forward.3} parent=1 // loop_footer_branch
      %22 = sbr.rel target = $region3
    $region8: #{encoder_forward.3} parent=1 // loop_exit
      _
    %1868 = vsyncpa [#allocation3], 1
    %s1869 = scalar_lea.sflag [#allocation3], 1
    %1870 = vsyncpa %s1869, 1

// kernel: encoder_forward.2
$region0: #{encoder_forward.2}
  #allocation0 [shape = 'u32[]', space=smem, size = 0x4, offset = 0x4, fixed_abs, tag = 'smem constant byte address 0x4 - core index']
  #allocation1 [shape = 'u32[144,128]{1,0:T(1,128)}', space=vmem, size = 0x12000, scoped, tag = 'internal scratch']
  %s0 = inlined_call_operand.hbm [shape: f32[2,8,128], index: 0, kind: input, shape index: {}]
  %s1 = inlined_call_operand.vmem [shape: s8[2,8,8], index: 1, kind: input, shape index: {}]
  %s2 = inlined_call_operand.hbm [shape: bf16[128,384], index: 2, kind: input, shape index: {}]
  %s3 = inlined_call_operand.vmem [shape: f32[1,384], index: 3, kind: input, shape index: {}]
  %s4 = inlined_call_operand.hbm [shape: bf16[128,128], index: 4, kind: input, shape index: {}]
  %s5 = inlined_call_operand.vmem [shape: f32[1,128], index: 5, kind: input, shape index: {}]
  %s6 = inlined_call_operand.vmem [shape: f32[1,128], index: 6, kind: input, shape index: {}]
  %s7 = inlined_call_operand.vmem [shape: f32[1,128], index: 7, kind: input, shape index: {}]
  %s8 = inlined_call_operand.hbm [shape: bf16[128,256], index: 8, kind: input, shape index: {}]
  %s9 = inlined_call_operand.vmem [shape: f32[1,256], index: 9, kind: input, shape index: {}]
  %s10 = inlined_call_operand.hbm [shape: bf16[256,128], index: 10, kind: input, shape index: {}]
  %s11 = inlined_call_operand.vmem [shape: f32[1,128], index: 11, kind: input, shape index: {}]
  %s12 = inlined_call_operand.vmem [shape: f32[1,128], index: 12, kind: input, shape index: {}]
  %s13 = inlined_call_operand.vmem [shape: f32[1,128], index: 13, kind: input, shape index: {}]
  %s14 = inlined_call_operand.vmem [shape: f32[2,8,128], index: 14, kind: output, shape index: {}]
  %s15 = sld [smem:[#allocation0]]
  $region109: #{encoder_forward.2} parent=0
    _
  %s17 = ssub.s32 1, %s15
  %s18 = scalar_select 0, %s17, %s15
  $region1: #{encoder_forward.2} parent=0
    #allocation2 [shape = 'u8[8192]{0}', space=vmem, size = 0x2000, scoped, tag = 'input window, operand 0']
    #allocation3 [shape = 's32[2]{0}', space=sflag, size = 0x8, scoped, tag = 'scoped memory for encoder_forward.2']
    #allocation4 [shape = 'u8[98304]{0}', space=vmem, size = 0x18000, scoped, tag = 'input window, operand 2, single buffered']
    #allocation5 [shape = 's32[1]{0}', space=sflag, size = 0x4, scoped, tag = 'scoped memory for encoder_forward.2']
    #allocation6 [shape = 'u8[32768]{0}', space=vmem, size = 0x8000, scoped, tag = 'input window, operand 4, single buffered']
    #allocation7 [shape = 'u8[65536]{0}', space=vmem, size = 0x10000, scoped, tag = 'input window, operand 8, single buffered']
    #allocation8 [shape = 's32[1]{0}', space=sflag, size = 0x4, scoped, tag = 'scoped memory for encoder_forward.2']
    #allocation9 [shape = 'u8[65536]{0}', space=vmem, size = 0x10000, scoped, tag = 'input window, operand 10, single buffered']
    %19 = vsyncpa [#allocation3], 0
    %s20 = scalar_lea.sflag [#allocation3], 1
    %21 = vsyncpa %s20, 0
    %22 = vsyncpa [#allocation5], 0
    %23 = vsyncpa [#allocation8], 0
    loop: start=0, step=1, limit=4
    $region2: #{encoder_forward.2} parent=1 // loop_pre_header
      _
    $region3: #{encoder_forward.2} parent=1 // loop_header
      %s25 = sphi 0, %s29
      %p26 = scmp.ge.s32.totalorder %s25, 4
      %s35 = sphi 0, %s37
      %s38 = sphi 0, %s35
      %s39 = sphi 0, %s38
      %s55 = sphi 0, %s39
      %s61 = sphi 0, %s63
      %s64 = sphi 0, %s61
      %s65 = sphi 0, %s64
      %s81 = sphi 0, %s65
      %s85 = sphi 0, %s85
      %s87 = sphi 0, %s85
      %s88 = sphi 0, %s87
      %s102 = sphi 0, %s88
      %s106 = sphi 0, %s106
      %s108 = sphi 0, %s106
      %s109 = sphi 0, %s108
      %s123 = sphi 0, %s109
      %s127 = sphi 0, %s127
      %s129 = sphi 0, %s127
      %s130 = sphi 0, %s129
      %s144 = sphi 0, %s130
      %s148 = sphi 0, %s148
      %s150 = sphi 0, %s148
      %s151 = sphi 0, %s150
      %s165 = sphi 0, %s151
      %s169 = sphi 0, %s169
      %s171 = sphi 0, %s169
      %s172 = sphi 0, %s171
      %s186 = sphi 0, %s172
      %s190 = sphi 0, %s190
      %s192 = sphi 0, %s190
      %s193 = sphi 0, %s192
      %s207 = sphi 0, %s193
      %s211 = sphi 0, %s211
      %s213 = sphi 0, %s211
      %s214 = sphi 0, %s213
      %s228 = sphi 0, %s214
      %s232 = sphi 0, %s232
      %s234 = sphi 0, %s232
      %s235 = sphi 0, %s234
      %s249 = sphi 0, %s235
      %s253 = sphi 0, %s253
      %s255 = sphi 0, %s253
      %s256 = sphi 0, %s255
      %s270 = sphi 0, %s256
      %s274 = sphi 0, %s274
      %s276 = sphi 0, %s274
      %s277 = sphi 0, %s276
      %s291 = sphi 0, %s277
      %s295 = sphi 0, %s295
      %s297 = sphi 0, %s295
      %s298 = sphi 0, %s297
      %s312 = sphi 0, %s298
      %s316 = sphi 0, %s316
      %s318 = sphi 0, %s316
      %s319 = sphi 0, %s318
      %s333 = sphi 0, %s319
      %s339 = sphi 0, %s341
      %s342 = sphi 0, %s339
      %s343 = sphi 0, %s342
      %s359 = sphi 0, %s343
    $region4: #{encoder_forward.2} parent=1 // loop_header_branch
      %28 = sbr.rel (%p26) target = $region8
    $region5: #{encoder_forward.2} parent=1 // loop_body
      %s30 = ssub.s32 %s25, 1
      %s31 = ssub.s32 %s25, 2
      %s32 = sadd.s32 %s25, 1
      %s33 = ssub.s32 %s25, %s32
      %p34 = scmp.eq.s32.totalorder %s33, 0
      %s36 = sadd.s32 %s35, 1
      %s37 = scalar_select %p34, %s35, %s36
      %p40 = pneg %p34
      %p41 = scmp.eq.s32.totalorder %s25, 1
      %p42 = por %p40, %p41
      %p43 = scmp.ne.s32.totalorder %s35, %s38
      %p44 = scmp.eq.s32.totalorder %s25, 0
      %p45 = por %p43, %p44
      %p46 = scmp.ne.s32.totalorder %s35, %s38
      %p47 = scmp.eq.s32.totalorder %s30, 1
      %p48 = por %p46, %p47
      %p49 = scmp.ne.s32.totalorder %s38, %s39
      %p50 = scmp.eq.s32.totalorder %s30, 0
      %p51 = por %p49, %p50
      %p52 = scmp.ne.s32.totalorder %s38, %s39
      %p53 = scmp.eq.s32.totalorder %s31, 1
      %p54 = por %p52, %p53
      %p56 = scmp.ne.s32.totalorder %s39, %s55
      %p57 = scmp.eq.s32.totalorder %s31, 0
      %p58 = por %p56, %p57
      %s59 = ssub.s32 %s25, %s32
      %p60 = scmp.eq.s32.totalorder %s59, 0
      %s62 = sadd.s32 %s61, 1
      %s63 = scalar_select %p60, %s61, %s62
      %p66 = pneg %p60
      %p67 = scmp.eq.s32.totalorder %s25, 1
      %p68 = por %p66, %p67
      %p69 = scmp.ne.s32.totalorder %s61, %s64
      %p70 = scmp.eq.s32.totalorder %s25, 0
      %p71 = por %p69, %p70
      %p72 = scmp.ne.s32.totalorder %s61, %s64
      %p73 = scmp.eq.s32.totalorder %s30, 1
      %p74 = por %p72, %p73
      %p75 = scmp.ne.s32.totalorder %s64, %s65
      %p76 = scmp.eq.s32.totalorder %s30, 0
      %p77 = por %p75, %p76
      %p78 = scmp.ne.s32.totalorder %s64, %s65
      %p79 = scmp.eq.s32.totalorder %s31, 1
      %p80 = por %p78, %p79
      %p82 = scmp.ne.s32.totalorder %s65, %s81
      %p83 = scmp.eq.s32.totalorder %s31, 0
      %p84 = por %p82, %p83
      %s86 = sadd.s32 %s85, 1
      %p89 = scmp.eq.s32.totalorder %s25, 1
      %p90 = scmp.ne.s32.totalorder %s85, %s87
      %p91 = scmp.eq.s32.totalorder %s25, 0
      %p92 = por %p90, %p91
      %p93 = scmp.ne.s32.totalorder %s85, %s87
      %p94 = scmp.eq.s32.totalorder %s30, 1
      %p95 = por %p93, %p94
      %p96 = scmp.ne.s32.totalorder %s87, %s88
      %p97 = scmp.eq.s32.totalorder %s30, 0
      %p98 = por %p96, %p97
      %p99 = scmp.ne.s32.totalorder %s87, %s88
      %p100 = scmp.eq.s32.totalorder %s31, 1
      %p101 = por %p99, %p100
      %p103 = scmp.ne.s32.totalorder %s88, %s102
      %p104 = scmp.eq.s32.totalorder %s31, 0
      %p105 = por %p103, %p104
      %s107 = sadd.s32 %s106, 1
      %p110 = scmp.eq.s32.totalorder %s25, 1
      %p111 = scmp.ne.s32.totalorder %s106, %s108
      %p112 = scmp.eq.s32.totalorder %s25, 0
      %p113 = por %p111, %p112
      %p114 = scmp.ne.s32.totalorder %s106, %s108
      %p115 = scmp.eq.s32.totalorder %s30, 1
      %p116 = por %p114, %p115
      %p117 = scmp.ne.s32.totalorder %s108, %s109
      %p118 = scmp.eq.s32.totalorder %s30, 0
      %p119 = por %p117, %p118
      %p120 = scmp.ne.s32.totalorder %s108, %s109
      %p121 = scmp.eq.s32.totalorder %s31, 1
      %p122 = por %p120, %p121
      %p124 = scmp.ne.s32.totalorder %s109, %s123
      %p125 = scmp.eq.s32.totalorder %s31, 0
      %p126 = por %p124, %p125
      %s128 = sadd.s32 %s127, 1
      %p131 = scmp.eq.s32.totalorder %s25, 1
      %p132 = scmp.ne.s32.totalorder %s127, %s129
      %p133 = scmp.eq.s32.totalorder %s25, 0
      %p134 = por %p132, %p133
      %p135 = scmp.ne.s32.totalorder %s127, %s129
      %p136 = scmp.eq.s32.totalorder %s30, 1
      %p137 = por %p135, %p136
      %p138 = scmp.ne.s32.totalorder %s129, %s130
      %p139 = scmp.eq.s32.totalorder %s30, 0
      %p140 = por %p138, %p139
      %p141 = scmp.ne.s32.totalorder %s129, %s130
      %p142 = scmp.eq.s32.totalorder %s31, 1
      %p143 = por %p141, %p142
      %p145 = scmp.ne.s32.totalorder %s130, %s144
      %p146 = scmp.eq.s32.totalorder %s31, 0
      %p147 = por %p145, %p146
      %s149 = sadd.s32 %s148, 1
      %p152 = scmp.eq.s32.totalorder %s25, 1
      %p153 = scmp.ne.s32.totalorder %s148, %s150
      %p154 = scmp.eq.s32.totalorder %s25, 0
      %p155 = por %p153, %p154
      %p156 = scmp.ne.s32.totalorder %s148, %s150
      %p157 = scmp.eq.s32.totalorder %s30, 1
      %p158 = por %p156, %p157
      %p159 = scmp.ne.s32.totalorder %s150, %s151
      %p160 = scmp.eq.s32.totalorder %s30, 0
      %p161 = por %p159, %p160
      %p162 = scmp.ne.s32.totalorder %s150, %s151
      %p163 = scmp.eq.s32.totalorder %s31, 1
      %p164 = por %p162, %p163
      %p166 = scmp.ne.s32.totalorder %s151, %s165
      %p167 = scmp.eq.s32.totalorder %s31, 0
      %p168 = por %p166, %p167
      %s170 = sadd.s32 %s169, 1
      %p173 = scmp.eq.s32.totalorder %s25, 1
      %p174 = scmp.ne.s32.totalorder %s169, %s171
      %p175 = scmp.eq.s32.totalorder %s25, 0
      %p176 = por %p174, %p175
      %p177 = scmp.ne.s32.totalorder %s169, %s171
      %p178 = scmp.eq.s32.totalorder %s30, 1
      %p179 = por %p177, %p178
      %p180 = scmp.ne.s32.totalorder %s171, %s172
      %p181 = scmp.eq.s32.totalorder %s30, 0
      %p182 = por %p180, %p181
      %p183 = scmp.ne.s32.totalorder %s171, %s172
      %p184 = scmp.eq.s32.totalorder %s31, 1
      %p185 = por %p183, %p184
      %p187 = scmp.ne.s32.totalorder %s172, %s186
      %p188 = scmp.eq.s32.totalorder %s31, 0
      %p189 = por %p187, %p188
      %s191 = sadd.s32 %s190, 1
      %p194 = scmp.eq.s32.totalorder %s25, 1
      %p195 = scmp.ne.s32.totalorder %s190, %s192
      %p196 = scmp.eq.s32.totalorder %s25, 0
      %p197 = por %p195, %p196
      %p198 = scmp.ne.s32.totalorder %s190, %s192
      %p199 = scmp.eq.s32.totalorder %s30, 1
      %p200 = por %p198, %p199
      %p201 = scmp.ne.s32.totalorder %s192, %s193
      %p202 = scmp.eq.s32.totalorder %s30, 0
      %p203 = por %p201, %p202
      %p204 = scmp.ne.s32.totalorder %s192, %s193
      %p205 = scmp.eq.s32.totalorder %s31, 1
      %p206 = por %p204, %p205
      %p208 = scmp.ne.s32.totalorder %s193, %s207
      %p209 = scmp.eq.s32.totalorder %s31, 0
      %p210 = por %p208, %p209
      %s212 = sadd.s32 %s211, 1
      %p215 = scmp.eq.s32.totalorder %s25, 1
      %p216 = scmp.ne.s32.totalorder %s211, %s213
      %p217 = scmp.eq.s32.totalorder %s25, 0
      %p218 = por %p216, %p217
      %p219 = scmp.ne.s32.totalorder %s211, %s213
      %p220 = scmp.eq.s32.totalorder %s30, 1
      %p221 = por %p219, %p220
      %p222 = scmp.ne.s32.totalorder %s213, %s214
      %p223 = scmp.eq.s32.totalorder %s30, 0
      %p224 = por %p222, %p223
      %p225 = scmp.ne.s32.totalorder %s213, %s214
      %p226 = scmp.eq.s32.totalorder %s31, 1
      %p227 = por %p225, %p226
      %p229 = scmp.ne.s32.totalorder %s214, %s228
      %p230 = scmp.eq.s32.totalorder %s31, 0
      %p231 = por %p229, %p230
      %s233 = sadd.s32 %s232, 1
      %p236 = scmp.eq.s32.totalorder %s25, 1
      %p237 = scmp.ne.s32.totalorder %s232, %s234
      %p238 = scmp.eq.s32.totalorder %s25, 0
      %p239 = por %p237, %p238
      %p240 = scmp.ne.s32.totalorder %s232, %s234
      %p241 = scmp.eq.s32.totalorder %s30, 1
      %p242 = por %p240, %p241
      %p243 = scmp.ne.s32.totalorder %s234, %s235
      %p244 = scmp.eq.s32.totalorder %s30, 0
      %p245 = por %p243, %p244
      %p246 = scmp.ne.s32.totalorder %s234, %s235
      %p247 = scmp.eq.s32.totalorder %s31, 1
      %p248 = por %p246, %p247
      %p250 = scmp.ne.s32.totalorder %s235, %s249
      %p251 = scmp.eq.s32.totalorder %s31, 0
      %p252 = por %p250, %p251
      %s254 = sadd.s32 %s253, 1
      %p257 = scmp.eq.s32.totalorder %s25, 1
      %p258 = scmp.ne.s32.totalorder %s253, %s255
      %p259 = scmp.eq.s32.totalorder %s25, 0
      %p260 = por %p258, %p259
      %p261 = scmp.ne.s32.totalorder %s253, %s255
      %p262 = scmp.eq.s32.totalorder %s30, 1
      %p263 = por %p261, %p262
      %p264 = scmp.ne.s32.totalorder %s255, %s256
      %p265 = scmp.eq.s32.totalorder %s30, 0
      %p266 = por %p264, %p265
      %p267 = scmp.ne.s32.totalorder %s255, %s256
      %p268 = scmp.eq.s32.totalorder %s31, 1
      %p269 = por %p267, %p268
      %p271 = scmp.ne.s32.totalorder %s256, %s270
      %p272 = scmp.eq.s32.totalorder %s31, 0
      %p273 = por %p271, %p272
      %s275 = sadd.s32 %s274, 1
      %p278 = scmp.eq.s32.totalorder %s25, 1
      %p279 = scmp.ne.s32.totalorder %s274, %s276
      %p280 = scmp.eq.s32.totalorder %s25, 0
      %p281 = por %p279, %p280
      %p282 = scmp.ne.s32.totalorder %s274, %s276
      %p283 = scmp.eq.s32.totalorder %s30, 1
      %p284 = por %p282, %p283
      %p285 = scmp.ne.s32.totalorder %s276, %s277
      %p286 = scmp.eq.s32.totalorder %s30, 0
      %p287 = por %p285, %p286
      %p288 = scmp.ne.s32.totalorder %s276, %s277
      %p289 = scmp.eq.s32.totalorder %s31, 1
      %p290 = por %p288, %p289
      %p292 = scmp.ne.s32.totalorder %s277, %s291
      %p293 = scmp.eq.s32.totalorder %s31, 0
      %p294 = por %p292, %p293
      %s296 = sadd.s32 %s295, 1
      %p299 = scmp.eq.s32.totalorder %s25, 1
      %p300 = scmp.ne.s32.totalorder %s295, %s297
      %p301 = scmp.eq.s32.totalorder %s25, 0
      %p302 = por %p300, %p301
      %p303 = scmp.ne.s32.totalorder %s295, %s297
      %p304 = scmp.eq.s32.totalorder %s30, 1
      %p305 = por %p303, %p304
      %p306 = scmp.ne.s32.totalorder %s297, %s298
      %p307 = scmp.eq.s32.totalorder %s30, 0
      %p308 = por %p306, %p307
      %p309 = scmp.ne.s32.totalorder %s297, %s298
      %p310 = scmp.eq.s32.totalorder %s31, 1
      %p311 = por %p309, %p310
      %p313 = scmp.ne.s32.totalorder %s298, %s312
      %p314 = scmp.eq.s32.totalorder %s31, 0
      %p315 = por %p313, %p314
      %s317 = sadd.s32 %s316, 1
      %p320 = scmp.eq.s32.totalorder %s25, 1
      %p321 = scmp.ne.s32.totalorder %s316, %s318
      %p322 = scmp.eq.s32.totalorder %s25, 0
      %p323 = por %p321, %p322
      %p324 = scmp.ne.s32.totalorder %s316, %s318
      %p325 = scmp.eq.s32.totalorder %s30, 1
      %p326 = por %p324, %p325
      %p327 = scmp.ne.s32.totalorder %s318, %s319
      %p328 = scmp.eq.s32.totalorder %s30, 0
      %p329 = por %p327, %p328
      %p330 = scmp.ne.s32.totalorder %s318, %s319
      %p331 = scmp.eq.s32.totalorder %s31, 1
      %p332 = por %p330, %p331
      %p334 = scmp.ne.s32.totalorder %s319, %s333
      %p335 = scmp.eq.s32.totalorder %s31, 0
      %p336 = por %p334, %p335
      %s337 = ssub.s32 %s25, %s32
      %p338 = scmp.eq.s32.totalorder %s337, 0
      %s340 = sadd.s32 %s339, 1
      %s341 = scalar_select %p338, %s339, %s340
      %p344 = pneg %p338
      %p345 = scmp.eq.s32.totalorder %s25, 1
      %p346 = por %p344, %p345
      %p347 = scmp.ne.s32.totalorder %s339, %s342
      %p348 = scmp.eq.s32.totalorder %s25, 0
      %p349 = por %p347, %p348
      %p350 = scmp.ne.s32.totalorder %s339, %s342
      %p351 = scmp.eq.s32.totalorder %s30, 1
      %p352 = por %p350, %p351
      %p353 = scmp.ne.s32.totalorder %s342, %s343
      %p354 = scmp.eq.s32.totalorder %s30, 0
      %p355 = por %p353, %p354
      %p356 = scmp.ne.s32.totalorder %s342, %s343
      %p357 = scmp.eq.s32.totalorder %s31, 1
      %p358 = por %p356, %p357
      %p360 = scmp.ne.s32.totalorder %s343, %s359
      %p361 = scmp.eq.s32.totalorder %s31, 0
      %p362 = por %p360, %p361
      %p363 = scmp.le.s32.totalorder 1, %s25
      %p364 = scmp.lt.s32.totalorder %s25, 3
      %p365 = pnand %p363, %p364
      %p366 = pneg %p365
      // Predicated region
      $region9: #{encoder_forward.2} parent=5 // pred_check
        _
      $region10: #{encoder_forward.2} parent=5 // pred_check_branch
        %368 = sbr.rel (%p365) target = $region12
      $region11: #{encoder_forward.2} parent=5 // pred_region
        %s369 = ssub.s32 %s25, 1
        // Predicated region
        $region13: #{encoder_forward.2} parent=11 // pred_check
          %p370 = pneg %p98
        $region14: #{encoder_forward.2} parent=11 // pred_check_branch
          %372 = sbr.rel (%p370) target = $region16
        $region15: #{encoder_forward.2} parent=11 // pred_region
          %s374 = ssub.s32 3072, 3072
          %375 = vsyncadd [#allocation5], %s374
          %s376 = sshll.u32 [#allocation4], 4
          %s377 = int_to_ptr.vmem [resolvable:$true] %s376
          %382 = dma.hbm_to_vmem [thread:$0]  %s2, 3072, %s377, [#allocation5], 192, 192, 12
        $region16: #{encoder_forward.2} parent=11 // pred_fallthru
          _
        // Predicated region
        $region17: #{encoder_forward.2} parent=11 // pred_check
          %p383 = pneg %p119
        $region18: #{encoder_forward.2} parent=11 // pred_check_branch
          %385 = sbr.rel (%p383) target = $region20
        $region19: #{encoder_forward.2} parent=11 // pred_region
          _
        $region20: #{encoder_forward.2} parent=11 // pred_fallthru
          _
        // Predicated region
        $region21: #{encoder_forward.2} parent=11 // pred_check
          %p386 = pneg %p140
        $region22: #{encoder_forward.2} parent=11 // pred_check_branch
          %388 = sbr.rel (%p386) target = $region24
        $region23: #{encoder_forward.2} parent=11 // pred_region
          %s390 = ssub.s32 1024, 1024
          %391 = vsyncadd [#allocation5], %s390
          %s392 = sshll.u32 [#allocation6], 4
          %s393 = int_to_ptr.vmem [resolvable:$true] %s392
          %398 = dma.hbm_to_vmem [thread:$0]  %s4, 1024, %s393, [#allocation5], 64, 64, 4
        $region24: #{encoder_forward.2} parent=11 // pred_fallthru
          _
        // Predicated region
        $region25: #{encoder_forward.2} parent=11 // pred_check
          %p399 = pneg %p161
        $region26: #{encoder_forward.2} parent=11 // pred_check_branch
          %401 = sbr.rel (%p399) target = $region28
        $region27: #{encoder_forward.2} parent=11 // pred_region
          _
        $region28: #{encoder_forward.2} parent=11 // pred_fallthru
          _
        // Predicated region
        $region29: #{encoder_forward.2} parent=11 // pred_check
          %p402 = pneg %p182
        $region30: #{encoder_forward.2} parent=11 // pred_check_branch
          %404 = sbr.rel (%p402) target = $region32
        $region31: #{encoder_forward.2} parent=11 // pred_region
          _
        $region32: #{encoder_forward.2} parent=11 // pred_fallthru
          _
        // Predicated region
        $region33: #{encoder_forward.2} parent=11 // pred_check
          %p405 = pneg %p203
        $region34: #{encoder_forward.2} parent=11 // pred_check_branch
          %407 = sbr.rel (%p405) target = $region36
        $region35: #{encoder_forward.2} parent=11 // pred_region
          _
        $region36: #{encoder_forward.2} parent=11 // pred_fallthru
          _
        // Predicated region
        $region37: #{encoder_forward.2} parent=11 // pred_check
          %p408 = pneg %p224
        $region38: #{encoder_forward.2} parent=11 // pred_check_branch
          %410 = sbr.rel (%p408) target = $region40
        $region39: #{encoder_forward.2} parent=11 // pred_region
          %s412 = ssub.s32 2048, 2048
          %413 = vsyncadd [#allocation8], %s412
          %s414 = sshll.u32 [#allocation7], 4
          %s415 = int_to_ptr.vmem [resolvable:$true] %s414
          %420 = dma.hbm_to_vmem [thread:$0]  %s8, 2048, %s415, [#allocation8], 128, 128, 8
        $region40: #{encoder_forward.2} parent=11 // pred_fallthru
          _
        // Predicated region
        $region41: #{encoder_forward.2} parent=11 // pred_check
          %p421 = pneg %p245
        $region42: #{encoder_forward.2} parent=11 // pred_check_branch
          %423 = sbr.rel (%p421) target = $region44
        $region43: #{encoder_forward.2} parent=11 // pred_region
          _
        $region44: #{encoder_forward.2} parent=11 // pred_fallthru
          _
        // Predicated region
        $region45: #{encoder_forward.2} parent=11 // pred_check
          %p424 = pneg %p266
        $region46: #{encoder_forward.2} parent=11 // pred_check_branch
          %426 = sbr.rel (%p424) target = $region48
        $region47: #{encoder_forward.2} parent=11 // pred_region
          %s428 = ssub.s32 2048, 2048
          %429 = vsyncadd [#allocation8], %s428
          %s430 = sshll.u32 [#allocation9], 4
          %s431 = int_to_ptr.vmem [resolvable:$true] %s430
          %436 = dma.hbm_to_vmem [thread:$0]  %s10, 2048, %s431, [#allocation8], 64, 64, 4
        $region48: #{encoder_forward.2} parent=11 // pred_fallthru
          _
        // Predicated region
        $region49: #{encoder_forward.2} parent=11 // pred_check
          %p437 = pneg %p287
        $region50: #{encoder_forward.2} parent=11 // pred_check_branch
          %439 = sbr.rel (%p437) target = $region52
        $region51: #{encoder_forward.2} parent=11 // pred_region
          _
        $region52: #{encoder_forward.2} parent=11 // pred_fallthru
          _
        // Predicated region
        $region53: #{encoder_forward.2} parent=11 // pred_check
          %p440 = pneg %p308
        $region54: #{encoder_forward.2} parent=11 // pred_check_branch
          %442 = sbr.rel (%p440) target = $region56
        $region55: #{encoder_forward.2} parent=11 // pred_region
          _
        $region56: #{encoder_forward.2} parent=11 // pred_fallthru
          _
        // Predicated region
        $region57: #{encoder_forward.2} parent=11 // pred_check
          %p443 = pneg %p329
        $region58: #{encoder_forward.2} parent=11 // pred_check_branch
          %445 = sbr.rel (%p443) target = $region60
        $region59: #{encoder_forward.2} parent=11 // pred_region
          _
        $region60: #{encoder_forward.2} parent=11 // pred_fallthru
          _
      $region12: #{encoder_forward.2} parent=5 // pred_fallthru
        _
      %p446 = scmp.lt.s32.totalorder %s25, 2
      // Predicated region
      $region61: #{encoder_forward.2} parent=5 // pred_check
        %p447 = pneg %p446
      $region62: #{encoder_forward.2} parent=5 // pred_check_branch
        %449 = sbr.rel (%p447) target = $region64
      $region63: #{encoder_forward.2} parent=5 // pred_region
        // Predicated region
        $region65: #{encoder_forward.2} parent=63 // pred_check
          %p450 = pneg %p45
        $region66: #{encoder_forward.2} parent=63 // pred_check_branch
          %452 = sbr.rel (%p450) target = $region68
        $region67: #{encoder_forward.2} parent=63 // pred_region
          %s453 = sand.u32 %s35, 1
          %s454 = scalar_lea.sflag [#allocation3], %s453
          %s455 = sand.u32 %s35, 1
          %s456 = smul.addr %s455, 8
          %s457 = scalar_lea.vmem [#allocation2], %s456
          %s459 = ssub.s32 128, 128
          %460 = vsyncadd %s454, %s459
          %s461 = smul.addr %s25, 128
          %s462 = scalar_lea.hbm %s0, %s461
          %s464 = sshll.u32 %s457, 4
          %s465 = int_to_ptr.vmem [resolvable:$true] %s464
          %467 = dma.hbm_to_vmem [thread:$0]  %s462, 128, %s465, %s454
        $region68: #{encoder_forward.2} parent=63 // pred_fallthru
          _
        // Predicated region
        $region69: #{encoder_forward.2} parent=63 // pred_check
          %p468 = pneg %p71
        $region70: #{encoder_forward.2} parent=63 // pred_check_branch
          %470 = sbr.rel (%p468) target = $region72
        $region71: #{encoder_forward.2} parent=63 // pred_region
          %p471 = scmp.lt.s32.totalorder %s25, 1
          %s472 = scalar_select %p471, %s25, 1
          %s473 = smul.addr %s472, 2
          %s474 = scalar_lea.vmem %s1, %s473
        $region72: #{encoder_forward.2} parent=63 // pred_fallthru
          _
      $region64: #{encoder_forward.2} parent=5 // pred_fallthru
        _
      %p475 = scmp.le.s32.totalorder 1, %s25
      %p476 = scmp.lt.s32.totalorder %s25, 3
      %p477 = pnand %p475, %p476
      %p478 = pneg %p477
      // Predicated region
      $region73: #{encoder_forward.2} parent=5 // pred_check
        _
      $region74: #{encoder_forward.2} parent=5 // pred_check_branch
        %480 = sbr.rel (%p477) target = $region76
      $region75: #{encoder_forward.2} parent=5 // pred_region
        %s481 = ssub.s32 %s25, 1
        %s482 = sand.u32 %s38, 1
        %s483 = scalar_lea.sflag [#allocation3], %s482
        %s484 = sand.u32 %s38, 1
        %s485 = smul.addr %s484, 8
        %s486 = scalar_lea.vmem [#allocation2], %s485
        // Predicated region
        $region77: #{encoder_forward.2} parent=75 // pred_check
          %p487 = pneg %p51
        $region78: #{encoder_forward.2} parent=75 // pred_check_branch
          %489 = sbr.rel (%p487) target = $region80
        $region79: #{encoder_forward.2} parent=75 // pred_region
          %490 = dma.done %s483, 128
        $region80: #{encoder_forward.2} parent=75 // pred_fallthru
          _
        // Predicated region
        $region81: #{encoder_forward.2} parent=75 // pred_check
          %p491 = pneg %p98
        $region82: #{encoder_forward.2} parent=75 // pred_check_branch
          %493 = sbr.rel (%p491) target = $region84
        $region83: #{encoder_forward.2} parent=75 // pred_region
          %494 = dma.done [#allocation5], 3072
        $region84: #{encoder_forward.2} parent=75 // pred_fallthru
          _
        // Predicated region
        $region85: #{encoder_forward.2} parent=75 // pred_check
          %p495 = pneg %p140
        $region86: #{encoder_forward.2} parent=75 // pred_check_branch
          %497 = sbr.rel (%p495) target = $region88
        $region87: #{encoder_forward.2} parent=75 // pred_region
          %498 = dma.done [#allocation5], 1024
        $region88: #{encoder_forward.2} parent=75 // pred_fallthru
          _
        // Predicated region
        $region89: #{encoder_forward.2} parent=75 // pred_check
          %p499 = pneg %p224
        $region90: #{encoder_forward.2} parent=75 // pred_check_branch
          %501 = sbr.rel (%p499) target = $region92
        $region91: #{encoder_forward.2} parent=75 // pred_region
          %502 = dma.done [#allocation8], 2048
        $region92: #{encoder_forward.2} parent=75 // pred_fallthru
          _
        // Predicated region
        $region93: #{encoder_forward.2} parent=75 // pred_check
          %p503 = pneg %p266
        $region94: #{encoder_forward.2} parent=75 // pred_check_branch
          %505 = sbr.rel (%p503) target = $region96
        $region95: #{encoder_forward.2} parent=75 // pred_region
          %506 = dma.done [#allocation8], 2048
        $region96: #{encoder_forward.2} parent=75 // pred_fallthru
          _
        %s507 = sand.u32 %s38, 1
        %s508 = scalar_lea.sflag [#allocation3], %s507
        %s509 = sand.u32 %s38, 1
        %s510 = smul.addr %s509, 8
        %s511 = scalar_lea.vmem [#allocation2], %s510
        %p512 = pneg %p51
        %p513 = pneg %p48
        %p514 = scmp.lt.s32.totalorder %s30, 1
        %s515 = scalar_select %p514, %s30, 1
        %s516 = smul.addr %s515, 2
        %s517 = scalar_lea.vmem %s1, %s516
        %p518 = pneg %p77
        %p519 = pneg %p74
        %p520 = pneg %p98
        %p521 = pneg %p95
        %p522 = pneg %p119
        %p523 = pneg %p116
        %p524 = pneg %p140
        %p525 = pneg %p137
        %p526 = pneg %p161
        %p527 = pneg %p158
        %p528 = pneg %p182
        %p529 = pneg %p179
        %p530 = pneg %p203
        %p531 = pneg %p200
        %p532 = pneg %p224
        %p533 = pneg %p221
        %p534 = pneg %p245
        %p535 = pneg %p242
        %p536 = pneg %p266
        %p537 = pneg %p263
        %p538 = pneg %p287
        %p539 = pneg %p284
        %p540 = pneg %p308
        %p541 = pneg %p305
        %p542 = pneg %p329
        %p543 = pneg %p326
        %p544 = pneg %p355
        %p545 = pneg %p352
        %p546 = scmp.lt.s32.totalorder %s30, 1
        %s547 = scalar_select %p546, %s30, 1
        %s548 = smul.addr %s547, 8
        %s549 = scalar_lea.vmem %s14, %s548
        %p550 = scmp.lt.s32.totalorder %s30, 1
        %s551 = scalar_select %p550, %s30, 1
        %s552 = smul.addr %s551, 2
        %s553 = scalar_lea.vmem %s1, %s552
        %p554 = scmp.lt.s32.totalorder %s30, 1
        %s555 = scalar_select %p554, %s30, 1
        %s556 = smul.addr %s555, 8
        %s557 = scalar_lea.vmem %s14, %s556
        %v561 = vld [vmem:[%s486] sm:$0xff]
        %v562 = vld [vmem:[%s553] sm:$0x3]
        %vm563 = vnez %v562
        %v564 = vpack.c.bf16 %v561, %v561
        %v565 = vld [vmem:[#allocation4] sm:$0xff]
        %v566 = vld [vmem:[#allocation4 + $0x8] sm:$0xf]
        %v567 = vld [vmem:[#allocation4 + $0xc] sm:$0xff]
        %v568 = vld [vmem:[#allocation4 + $0x14] sm:$0xf]
        %v569 = vld [vmem:[#allocation4 + $0x18] sm:$0xff]
        %v570 = vld [vmem:[#allocation4 + $0x20] sm:$0xf]
        %v571 = vld [vmem:[#allocation4 + $0x24] sm:$0xff]
        %v572 = vld [vmem:[#allocation4 + $0x2c] sm:$0xf]
        %v573 = vld [vmem:[#allocation4 + $0x30] sm:$0xff]
        %v574 = vld [vmem:[#allocation4 + $0x38] sm:$0xf]
        %v575 = vld [vmem:[#allocation4 + $0x3c] sm:$0xff]
        %v576 = vld [vmem:[#allocation4 + $0x44] sm:$0xf]
        %v577 = vld [vmem:[#allocation4 + $0x48] sm:$0xff]
        %v578 = vld [vmem:[#allocation4 + $0x50] sm:$0xf]
        %v579 = vld [vmem:[#allocation4 + $0x54] sm:$0xff]
        %v580 = vld [vmem:[#allocation4 + $0x5c] sm:$0xf]
        %v581 = vld [vmem:[#allocation4 + $0x60] sm:$0xff]
        %v582 = vld [vmem:[#allocation4 + $0x68] sm:$0xf]
        %v583 = vld [vmem:[#allocation4 + $0x6c] sm:$0xff]
        %v584 = vld [vmem:[#allocation4 + $0x74] sm:$0xf]
        %v585 = vld [vmem:[#allocation4 + $0x78] sm:$0xff]
        %v586 = vld [vmem:[#allocation4 + $0x80] sm:$0xf]
        %v587 = vld [vmem:[#allocation4 + $0x84] sm:$0xff]
        %v588 = vld [vmem:[#allocation4 + $0x8c] sm:$0xf]
        %v589 = vld [vmem:[#allocation4 + $0x90] sm:$0xff]
        %v590 = vld [vmem:[#allocation4 + $0x98] sm:$0xf]
        %v591 = vld [vmem:[#allocation4 + $0x9c] sm:$0xff]
        %v592 = vld [vmem:[#allocation4 + $0xa4] sm:$0xf]
        %v593 = vld [vmem:[#allocation4 + $0xa8] sm:$0xff]
        %v594 = vld [vmem:[#allocation4 + $0xb0] sm:$0xf]
        %v595 = vld [vmem:[#allocation4 + $0xb4] sm:$0xff]
        %v596 = vld [vmem:[#allocation4 + $0xbc] sm:$0xf]
        %v597 = vld [vmem:[%s3] sm:$0x7]
        %v599 = vlaneseq
        %v600 = vshrl.u32 %v599, 7
        %v601 = vsub.s32 0, %v600
        %v602 = vrot.slane %v597, %v601
        %v603 = vlaneseq
        %v604 = vshrl.u32 %v603, 7
        %v605 = vsub.s32 1, %v604
        %v606 = vrot.slane %v597, %v605
        %v607 = vlaneseq
        %v608 = vshrl.u32 %v607, 7
        %v609 = vsub.s32 2, %v608
        %v610 = vrot.slane %v597, %v609
        %v646 = vunpack.c.l.b16 %v565
        %v647 = vunpack.c.h.b16 %v565
        %v648 = vunpack.c.l.b16 %v566
        %v649 = vunpack.c.l.b16 %v567
        %v650 = vunpack.c.h.b16 %v567
        %v651 = vunpack.c.l.b16 %v568
        %v652 = vunpack.c.l.b16 %v569
        %v653 = vunpack.c.h.b16 %v569
        %v654 = vunpack.c.l.b16 %v570
        %v655 = vunpack.c.l.b16 %v571
        %v656 = vunpack.c.h.b16 %v571
        %v657 = vunpack.c.l.b16 %v572
        %v658 = vunpack.c.l.b16 %v573
        %v659 = vunpack.c.h.b16 %v573
        %v660 = vunpack.c.l.b16 %v574
        %v661 = vunpack.c.l.b16 %v575
        %v662 = vunpack.c.h.b16 %v575
        %v663 = vunpack.c.l.b16 %v576
        %v664 = vunpack.c.l.b16 %v577
        %v665 = vunpack.c.h.b16 %v577
        %v666 = vunpack.c.l.b16 %v578
        %v667 = vunpack.c.l.b16 %v579
        %v668 = vunpack.c.h.b16 %v579
        %v669 = vunpack.c.l.b16 %v580
        %v670 = vunpack.c.l.b16 %v581
        %v671 = vunpack.c.h.b16 %v581
        %v672 = vunpack.c.l.b16 %v582
        %v673 = vunpack.c.l.b16 %v583
        %v674 = vunpack.c.h.b16 %v583
        %v675 = vunpack.c.l.b16 %v584
        %v676 = vunpack.c.l.b16 %v585
        %v677 = vunpack.c.h.b16 %v585
        %v678 = vunpack.c.l.b16 %v586
        %v679 = vunpack.c.l.b16 %v587
        %v680 = vunpack.c.h.b16 %v587
        %v681 = vunpack.c.l.b16 %v588
        %v682 = vunpack.c.l.b16 %v589
        %v683 = vunpack.c.h.b16 %v589
        %v684 = vunpack.c.l.b16 %v590
        %v685 = vunpack.c.l.b16 %v591
        %v686 = vunpack.c.h.b16 %v591
        %v687 = vunpack.c.l.b16 %v592
        %v688 = vunpack.c.l.b16 %v593
        %v689 = vunpack.c.h.b16 %v593
        %v690 = vunpack.c.l.b16 %v594
        %v691 = vunpack.c.l.b16 %v595
        %v692 = vunpack.c.h.b16 %v595
        %v693 = vunpack.c.l.b16 %v596
        %v694 = vpack.c.b16 %v649, %v646
        %v695 = vpack.c.b16 %v650, %v647
        %v696 = vpack.c.b16 %v651, %v648
        %v697 = vpack.c.b16 %v655, %v652
        %v698 = vpack.c.b16 %v656, %v653
        %v699 = vpack.c.b16 %v657, %v654
        %v700 = vpack.c.b16 %v661, %v658
        %v701 = vpack.c.b16 %v662, %v659
        %v702 = vpack.c.b16 %v663, %v660
        %v703 = vpack.c.b16 %v667, %v664
        %v704 = vpack.c.b16 %v668, %v665
        %v705 = vpack.c.b16 %v669, %v666
        %v706 = vpack.c.b16 %v673, %v670
        %v707 = vpack.c.b16 %v674, %v671
        %v708 = vpack.c.b16 %v675, %v672
        %v709 = vpack.c.b16 %v679, %v676
        %v710 = vpack.c.b16 %v680, %v677
        %v711 = vpack.c.b16 %v681, %v678
        %v712 = vpack.c.b16 %v685, %v682
        %v713 = vpack.c.b16 %v686, %v683
        %v714 = vpack.c.b16 %v687, %v684
        %v715 = vpack.c.b16 %v691, %v688
        %v716 = vpack.c.b16 %v692, %v689
        %v717 = vpack.c.b16 %v693, %v690
        %742 = vmatprep.subr.bf16.mxu0 %v716
        %743 = vmatpush1.bf16.msra.mxu0 %v715
        %744 = vmatprep.subr.bf16.mxu0 %v713
        %745 = vmatpush1.bf16.msra.mxu0 %v712
        %746 = vmatprep.subr.bf16.mxu0 %v710
        %747 = vmatpush1.bf16.msra.mxu0 %v709
        %748 = vmatprep.subr.bf16.mxu0 %v707
        %749 = vmatpush1.bf16.msra.mxu0 %v706
        %750 = vmatprep.subr.bf16.mxu0 %v704
        %751 = vmatpush1.bf16.msra.mxu0 %v703
        %752 = vmatprep.subr.bf16.mxu0 %v701
        %753 = vmatpush1.bf16.msra.mxu0 %v700
        %754 = vmatprep.subr.bf16.mxu0 %v698
        %755 = vmatpush1.bf16.msra.mxu0 %v697
        %756 = vmatprep.subr.bf16.mxu0 %v695
        %757 = vmatpush1.bf16.msra.mxu0 %v694
        %758 = vmatprep.subr.bf16.mxu0 0
        %759 = vmatpush2.bf16.msra.mxu0 0
        %760 = vmatprep.subr.bf16.mxu0 0
        %761 = vmatpush2.bf16.msra.mxu0 0
        %762 = vmatprep.subr.bf16.mxu0 0
        %763 = vmatpush2.bf16.msra.mxu0 0
        %764 = vmatprep.subr.bf16.mxu0 0
        %765 = vmatpush2.bf16.msra.mxu0 0
        %766 = vmatprep.subr.bf16.mxu0 0
        %767 = vmatpush2.bf16.msra.mxu0 0
        %768 = vmatprep.subr.bf16.mxu0 0
        %769 = vmatpush2.bf16.msra.mxu0 0
        %770 = vmatprep.subr.bf16.mxu0 0
        %771 = vmatpush2.bf16.msra.mxu0 0
        %772 = vmatprep.subr.bf16.mxu0 0
        %773 = vmatpush2.bf16.msra.mxu0 0
        %774 = vmatprep.mubr.bf16.mxu0 0
        %775 = vmatmul.mubr.bf16.gmra.mxu0 %v564
        %v776 = vpop.f32.mrf.mxu0
        %v777 = vadd.f32 %v602, %v776
        %v778 = vpop.f32.mrf.mxu0
        %v779 = vadd.f32 %v606, %v778
        %v780 = vpop.f32.mrf.mxu0
        %v781 = vpop.f32.mrf.mxu0
        %782 = vdwg.mxu0
        %783 = vmatprep.subr.bf16.mxu0 0
        %784 = vmatpush1.bf16.msra.mxu0 %v717
        %785 = vmatprep.subr.bf16.mxu0 0
        %786 = vmatpush1.bf16.msra.mxu0 %v714
        %787 = vmatprep.subr.bf16.mxu0 0
        %788 = vmatpush1.bf16.msra.mxu0 %v711
        %789 = vmatprep.subr.bf16.mxu0 0
        %790 = vmatpush1.bf16.msra.mxu0 %v708
        %791 = vmatprep.subr.bf16.mxu0 0
        %792 = vmatpush1.bf16.msra.mxu0 %v705
        %793 = vmatprep.subr.bf16.mxu0 0
        %794 = vmatpush1.bf16.msra.mxu0 %v702
        %795 = vmatprep.subr.bf16.mxu0 0
        %796 = vmatpush1.bf16.msra.mxu0 %v699
        %797 = vmatprep.subr.bf16.mxu0 0
        %798 = vmatpush1.bf16.msra.mxu0 %v696
        %799 = vmatprep.subr.bf16.mxu0 0
        %800 = vmatpush2.bf16.msra.mxu0 0
        %801 = vmatprep.subr.bf16.mxu0 0
        %802 = vmatpush2.bf16.msra.mxu0 0
        %803 = vmatprep.subr.bf16.mxu0 0
        %804 = vmatpush2.bf16.msra.mxu0 0
        %805 = vmatprep.subr.bf16.mxu0 0
        %806 = vmatpush2.bf16.msra.mxu0 0
        %807 = vmatprep.subr.bf16.mxu0 0
        %808 = vmatpush2.bf16.msra.mxu0 0
        %809 = vmatprep.subr.bf16.mxu0 0
        %810 = vmatpush2.bf16.msra.mxu0 0
        %811 = vmatprep.subr.bf16.mxu0 0
        %812 = vmatpush2.bf16.msra.mxu0 0
        %813 = vmatprep.subr.bf16.mxu0 0
        %814 = vmatpush2.bf16.msra.mxu0 0
        %815 = vmatprep.mubr.bf16.mxu0 0
        %816 = vmatmul.mubr.bf16.gmra.mxu0 %v564
        %v817 = vpop.f32.mrf.mxu0
        %v818 = vadd.f32 %v610, %v817
        %v819 = vpop.f32.mrf.mxu0
        %v820 = vpop.f32.mrf.mxu0
        %v821 = vpop.f32.mrf.mxu0
        %822 = vdwg.mxu0
        %v823 = vpack.c.bf16 %v777, %v777
        %v824 = vpack.c.bf16 %v779, %v779
        %v825 = vpack.c.bf16 %v818, %v818
        %vm826 = vcmask 261120
        %v828 = vsel %vm826, %v823, 0
        %v831 = vsel %vm826, %v824, 0
        %833 = vmatprep.subr.bf16.mxu0 0
        %834 = vmatpush1.bf16.xpose.msra.mxu0 0
        %835 = vmatprep.subr.bf16.mxu0 0
        %836 = vmatpush1.bf16.xpose.msra.mxu0 0
        %837 = vmatprep.subr.bf16.mxu0 0
        %838 = vmatpush1.bf16.xpose.msra.mxu0 0
        %839 = vmatprep.subr.bf16.mxu0 0
        %840 = vmatpush1.bf16.xpose.msra.mxu0 0
        %841 = vmatprep.subr.bf16.mxu0 0
        %842 = vmatpush1.bf16.xpose.msra.mxu0 0
        %843 = vmatprep.subr.bf16.mxu0 0
        %844 = vmatpush1.bf16.xpose.msra.mxu0 0
        %845 = vmatprep.subr.bf16.mxu0 0
        %846 = vmatpush1.bf16.xpose.msra.mxu0 0
        %847 = vmatprep.subr.bf16.mxu0 0
        %848 = vmatpush1.bf16.xpose.msra.mxu0 %v831
        %849 = vmatprep.subr.bf16.mxu0 0
        %850 = vmatpush2.bf16.xpose.msra.mxu0 0
        %851 = vmatprep.subr.bf16.mxu0 0
        %852 = vmatpush2.bf16.xpose.msra.mxu0 0
        %853 = vmatprep.subr.bf16.mxu0 0
        %854 = vmatpush2.bf16.xpose.msra.mxu0 0
        %855 = vmatprep.subr.bf16.mxu0 0
        %856 = vmatpush2.bf16.xpose.msra.mxu0 0
        %857 = vmatprep.subr.bf16.mxu0 0
        %858 = vmatpush2.bf16.xpose.msra.mxu0 0
        %859 = vmatprep.subr.bf16.mxu0 0
        %860 = vmatpush2.bf16.xpose.msra.mxu0 0
        %861 = vmatprep.subr.bf16.mxu0 0
        %862 = vmatpush2.bf16.xpose.msra.mxu0 0
        %863 = vmatprep.subr.bf16.mxu0 0
        %864 = vmatpush2.bf16.xpose.msra.mxu0 0
        %865 = vmatprep.mubr.bf16.mxu0 0
        %866 = vmatmul.mubr.bf16.gmra.mxu0 %v828
        %v867 = vpop.f32.mrf.mxu0
        %v868 = vadd.f32 0.0, %v867
        %v869 = vpop.f32.mrf.mxu0
        %v870 = vpop.f32.mrf.mxu0
        %v871 = vpop.f32.mrf.mxu0
        %872 = vdwg.mxu0
        %v873 = vmul.f32 %v868, 0.17677669
        %v874 = vsel %vm563, 16843009, 0
        %v875 = vunpack.c.0.s8 %v874
        %vm876 = vcmp.ne.s32.totalorder %v875, 0
        %v877 = vsel %vm876, -1e+09, %v873
        %vm878 = vcmask 64512
        %v879 = vsel %vm878, %v877, -inf
        %880 = vmax.xlane.f32.xlu0 %v879
        %v881 = vpop.xlane.xlu0 %880
        %v882 = vsub.f32 %v877, %v881
        %v883 = vmul.f32 %v882, 1.442695
        %v884 = vpow.pop %v883
        %v885 = vsel %vm878, %v884, 0.0
        %886 = vadd.xlane.f32.xlu0 %v885
        %v887 = vpop.xlane.xlu0 %886
        %v888 = vrcp.pop %v887
        %v889 = vmul.f32 %v884, %v888
        %v890 = vpack.c.bf16 %v889, %v889
        %v892 = vsel %vm878, %v890, 0
        %vm894 = vcmask 1043456
        %v896 = vsel %vm894, %v825, 0
        %898 = vmatprep.subr.bf16.mxu0 0
        %899 = vmatpush1.bf16.msra.mxu0 0
        %900 = vmatprep.subr.bf16.mxu0 0
        %901 = vmatpush1.bf16.msra.mxu0 0
        %902 = vmatprep.subr.bf16.mxu0 0
        %903 = vmatpush1.bf16.msra.mxu0 0
        %904 = vmatprep.subr.bf16.mxu0 0
        %905 = vmatpush1.bf16.msra.mxu0 0
        %906 = vmatprep.subr.bf16.mxu0 0
        %907 = vmatpush1.bf16.msra.mxu0 0
        %908 = vmatprep.subr.bf16.mxu0 0
        %909 = vmatpush1.bf16.msra.mxu0 0
        %910 = vmatprep.subr.bf16.mxu0 0
        %911 = vmatpush1.bf16.msra.mxu0 0
        %912 = vmatprep.subr.bf16.mxu0 0
        %913 = vmatpush1.bf16.msra.mxu0 %v896
        %914 = vmatprep.subr.bf16.mxu0 0
        %915 = vmatpush2.bf16.msra.mxu0 0
        %916 = vmatprep.subr.bf16.mxu0 0
        %917 = vmatpush2.bf16.msra.mxu0 0
        %918 = vmatprep.subr.bf16.mxu0 0
        %919 = vmatpush2.bf16.msra.mxu0 0
        %920 = vmatprep.subr.bf16.mxu0 0
        %921 = vmatpush2.bf16.msra.mxu0 0
        %922 = vmatprep.subr.bf16.mxu0 0
        %923 = vmatpush2.bf16.msra.mxu0 0
        %924 = vmatprep.subr.bf16.mxu0 0
        %925 = vmatpush2.bf16.msra.mxu0 0
        %926 = vmatprep.subr.bf16.mxu0 0
        %927 = vmatpush2.bf16.msra.mxu0 0
        %928 = vmatprep.subr.bf16.mxu0 0
        %929 = vmatpush2.bf16.msra.mxu0 0
        %930 = vmatprep.mubr.bf16.mxu0 0
        %931 = vmatmul.mubr.bf16.gmra.mxu0 %v892
        %v932 = vpop.f32.mrf.mxu0
        %v933 = vadd.f32 0.0, %v932
        %v934 = vpop.f32.mrf.mxu0
        %v935 = vpop.f32.mrf.mxu0
        %v936 = vpop.f32.mrf.mxu0
        %937 = vdwg.mxu0
        %v938 = vpack.c.bf16 %v933, %v933
        %v939 = vld [vmem:[#allocation6] sm:$0xf]
        %v940 = vld [vmem:[#allocation6 + $0x4] sm:$0xf]
        %v941 = vld [vmem:[#allocation6 + $0x8] sm:$0xf]
        %v942 = vld [vmem:[#allocation6 + $0xc] sm:$0xf]
        %944 = vrot.lane.b32.xlu0 %v823, 96
        %v945 = vpop.permute.xlu0 %944
        %947 = vrot.lane.b32.xlu0 %v824, 96
        %v948 = vpop.permute.xlu0 %947
        %v950 = vsel %vm826, %v945, 0
        %v953 = vsel %vm826, %v948, 0
        %955 = vmatprep.subr.bf16.mxu0 0
        %956 = vmatpush1.bf16.xpose.msra.mxu0 0
        %957 = vmatprep.subr.bf16.mxu0 0
        %958 = vmatpush1.bf16.xpose.msra.mxu0 0
        %959 = vmatprep.subr.bf16.mxu0 0
        %960 = vmatpush1.bf16.xpose.msra.mxu0 0
        %961 = vmatprep.subr.bf16.mxu0 0
        %962 = vmatpush1.bf16.xpose.msra.mxu0 0
        %963 = vmatprep.subr.bf16.mxu0 0
        %964 = vmatpush1.bf16.xpose.msra.mxu0 0
        %965 = vmatprep.subr.bf16.mxu0 0
        %966 = vmatpush1.bf16.xpose.msra.mxu0 0
        %967 = vmatprep.subr.bf16.mxu0 0
        %968 = vmatpush1.bf16.xpose.msra.mxu0 0
        %969 = vmatprep.subr.bf16.mxu0 0
        %970 = vmatpush1.bf16.xpose.msra.mxu0 %v953
        %971 = vmatprep.subr.bf16.mxu0 0
        %972 = vmatpush2.bf16.xpose.msra.mxu0 0
        %973 = vmatprep.subr.bf16.mxu0 0
        %974 = vmatpush2.bf16.xpose.msra.mxu0 0
        %975 = vmatprep.subr.bf16.mxu0 0
        %976 = vmatpush2.bf16.xpose.msra.mxu0 0
        %977 = vmatprep.subr.bf16.mxu0 0
        %978 = vmatpush2.bf16.xpose.msra.mxu0 0
        %979 = vmatprep.subr.bf16.mxu0 0
        %980 = vmatpush2.bf16.xpose.msra.mxu0 0
        %981 = vmatprep.subr.bf16.mxu0 0
        %982 = vmatpush2.bf16.xpose.msra.mxu0 0
        %983 = vmatprep.subr.bf16.mxu0 0
        %984 = vmatpush2.bf16.xpose.msra.mxu0 0
        %985 = vmatprep.subr.bf16.mxu0 0
        %986 = vmatpush2.bf16.xpose.msra.mxu0 0
        %987 = vmatprep.mubr.bf16.mxu0 0
        %988 = vmatmul.mubr.bf16.gmra.mxu0 %v950
        %v989 = vpop.f32.mrf.mxu0
        %v990 = vadd.f32 0.0, %v989
        %v991 = vpop.f32.mrf.mxu0
        %v992 = vpop.f32.mrf.mxu0
        %v993 = vpop.f32.mrf.mxu0
        %994 = vdwg.mxu0
        %v995 = vmul.f32 %v990, 0.17677669
        %v996 = vsel %vm876, -1e+09, %v995
        %v997 = vsel %vm878, %v996, -inf
        %998 = vmax.xlane.f32.xlu0 %v997
        %v999 = vpop.xlane.xlu0 %998
        %v1000 = vsub.f32 %v996, %v999
        %v1001 = vmul.f32 %v1000, 1.442695
        %v1002 = vpow.pop %v1001
        %v1003 = vsel %vm878, %v1002, 0.0
        %1004 = vadd.xlane.f32.xlu0 %v1003
        %v1005 = vpop.xlane.xlu0 %1004
        %v1006 = vrcp.pop %v1005
        %v1007 = vmul.f32 %v1002, %v1006
        %v1008 = vpack.c.bf16 %v1007, %v1007
        %1010 = vrot.lane.b32.xlu0 %v825, 96
        %v1011 = vpop.permute.xlu0 %1010
        %v1013 = vsel %vm878, %v1008, 0
        %v1016 = vsel %vm894, %v1011, 0
        %1018 = vmatprep.subr.bf16.mxu0 0
        %1019 = vmatpush1.bf16.msra.mxu0 0
        %1020 = vmatprep.subr.bf16.mxu0 0
        %1021 = vmatpush1.bf16.msra.mxu0 0
        %1022 = vmatprep.subr.bf16.mxu0 0
        %1023 = vmatpush1.bf16.msra.mxu0 0
        %1024 = vmatprep.subr.bf16.mxu0 0
        %1025 = vmatpush1.bf16.msra.mxu0 0
        %1026 = vmatprep.subr.bf16.mxu0 0
        %1027 = vmatpush1.bf16.msra.mxu0 0
        %1028 = vmatprep.subr.bf16.mxu0 0
        %1029 = vmatpush1.bf16.msra.mxu0 0
        %1030 = vmatprep.subr.bf16.mxu0 0
        %1031 = vmatpush1.bf16.msra.mxu0 0
        %1032 = vmatprep.subr.bf16.mxu0 0
        %1033 = vmatpush1.bf16.msra.mxu0 %v1016
        %1034 = vmatprep.subr.bf16.mxu0 0
        %1035 = vmatpush2.bf16.msra.mxu0 0
        %1036 = vmatprep.subr.bf16.mxu0 0
        %1037 = vmatpush2.bf16.msra.mxu0 0
        %1038 = vmatprep.subr.bf16.mxu0 0
        %1039 = vmatpush2.bf16.msra.mxu0 0
        %1040 = vmatprep.subr.bf16.mxu0 0
        %1041 = vmatpush2.bf16.msra.mxu0 0
        %1042 = vmatprep.subr.bf16.mxu0 0
        %1043 = vmatpush2.bf16.msra.mxu0 0
        %1044 = vmatprep.subr.bf16.mxu0 0
        %1045 = vmatpush2.bf16.msra.mxu0 0
        %1046 = vmatprep.subr.bf16.mxu0 0
        %1047 = vmatpush2.bf16.msra.mxu0 0
        %1048 = vmatprep.subr.bf16.mxu0 0
        %1049 = vmatpush2.bf16.msra.mxu0 0
        %1050 = vmatprep.mubr.bf16.mxu0 0
        %1051 = vmatmul.mubr.bf16.gmra.mxu0 %v1013
        %v1052 = vpop.f32.mrf.mxu0
        %v1053 = vadd.f32 0.0, %v1052
        %v1054 = vpop.f32.mrf.mxu0
        %v1055 = vpop.f32.mrf.mxu0
        %v1056 = vpop.f32.mrf.mxu0
        %1057 = vdwg.mxu0
        %v1058 = vpack.c.bf16 %v1053, %v1053
        %v1059 = vld [vmem:[#allocation6 + $0x10] sm:$0xf]
        %v1060 = vld [vmem:[#allocation6 + $0x14] sm:$0xf]
        %v1061 = vld [vmem:[#allocation6 + $0x18] sm:$0xf]
        %v1062 = vld [vmem:[#allocation6 + $0x1c] sm:$0xf]
        %v1067 = vunpack.c.l.b16 %v1059
        %v1068 = vunpack.c.l.b16 %v1060
        %v1069 = vunpack.c.l.b16 %v1061
        %v1070 = vunpack.c.l.b16 %v1062
        %v1071 = vpack.c.b16 %v1068, %v1067
        %v1072 = vpack.c.b16 %v1070, %v1069
        %v1076 = vsel %vm826, %v1058, 0
        %1078 = vmatprep.subr.bf16.mxu0 0
        %1079 = vmatpush1.bf16.msra.mxu0 0
        %1080 = vmatprep.subr.bf16.mxu0 0
        %1081 = vmatpush1.bf16.msra.mxu0 0
        %1082 = vmatprep.subr.bf16.mxu0 0
        %1083 = vmatpush1.bf16.msra.mxu0 0
        %1084 = vmatprep.subr.bf16.mxu0 0
        %1085 = vmatpush1.bf16.msra.mxu0 0
        %1086 = vmatprep.subr.bf16.mxu0 0
        %1087 = vmatpush1.bf16.msra.mxu0 0
        %1088 = vmatprep.subr.bf16.mxu0 0
        %1089 = vmatpush1.bf16.msra.mxu0 0
        %1090 = vmatprep.subr.bf16.mxu0 0
        %1091 = vmatpush1.bf16.msra.mxu0 %v1072
        %1092 = vmatprep.subr.bf16.mxu0 0
        %1093 = vmatpush1.bf16.msra.mxu0 %v1071
        %1094 = vmatprep.subr.bf16.mxu0 0
        %1095 = vmatpush2.bf16.msra.mxu0 0
        %1096 = vmatprep.subr.bf16.mxu0 0
        %1097 = vmatpush2.bf16.msra.mxu0 0
        %1098 = vmatprep.subr.bf16.mxu0 0
        %1099 = vmatpush2.bf16.msra.mxu0 0
        %1100 = vmatprep.subr.bf16.mxu0 0
        %1101 = vmatpush2.bf16.msra.mxu0 0
        %1102 = vmatprep.subr.bf16.mxu0 0
        %1103 = vmatpush2.bf16.msra.mxu0 0
        %1104 = vmatprep.subr.bf16.mxu0 0
        %1105 = vmatpush2.bf16.msra.mxu0 0
        %1106 = vmatprep.subr.bf16.mxu0 0
        %1107 = vmatpush2.bf16.msra.mxu0 0
        %1108 = vmatprep.subr.bf16.mxu0 0
        %1109 = vmatpush2.bf16.msra.mxu0 0
        %1110 = vmatprep.mubr.bf16.mxu0 0
        %1111 = vmatmul.mubr.bf16.gmra.mxu0 %v1076
        %v1112 = vpop.f32.mrf.mxu0
        %v1113 = vadd.f32 0.0, %v1112
        %v1114 = vpop.f32.mrf.mxu0
        %v1115 = vpop.f32.mrf.mxu0
        %v1116 = vpop.f32.mrf.mxu0
        %1117 = vdwg.mxu0
        %v1122 = vunpack.c.l.b16 %v939
        %v1123 = vunpack.c.l.b16 %v940
        %v1124 = vunpack.c.l.b16 %v941
        %v1125 = vunpack.c.l.b16 %v942
        %v1126 = vpack.c.b16 %v1123, %v1122
        %v1127 = vpack.c.b16 %v1125, %v1124
        %v1131 = vsel %vm826, %v938, 0
        %1133 = vmatprep.subr.bf16.mxu0 0
        %1134 = vmatpush1.bf16.msra.mxu0 0
        %1135 = vmatprep.subr.bf16.mxu0 0
        %1136 = vmatpush1.bf16.msra.mxu0 0
        %1137 = vmatprep.subr.bf16.mxu0 0
        %1138 = vmatpush1.bf16.msra.mxu0 0
        %1139 = vmatprep.subr.bf16.mxu0 0
        %1140 = vmatpush1.bf16.msra.mxu0 0
        %1141 = vmatprep.subr.bf16.mxu0 0
        %1142 = vmatpush1.bf16.msra.mxu0 0
        %1143 = vmatprep.subr.bf16.mxu0 0
        %1144 = vmatpush1.bf16.msra.mxu0 0
        %1145 = vmatprep.subr.bf16.mxu0 0
        %1146 = vmatpush1.bf16.msra.mxu0 %v1127
        %1147 = vmatprep.subr.bf16.mxu0 0
        %1148 = vmatpush1.bf16.msra.mxu0 %v1126
        %1149 = vmatprep.subr.bf16.mxu0 0
        %1150 = vmatpush2.bf16.msra.mxu0 0
        %1151 = vmatprep.subr.bf16.mxu0 0
        %1152 = vmatpush2.bf16.msra.mxu0 0
        %1153 = vmatprep.subr.bf16.mxu0 0
        %1154 = vmatpush2.bf16.msra.mxu0 0
        %1155 = vmatprep.subr.bf16.mxu0 0
        %1156 = vmatpush2.bf16.msra.mxu0 0
        %1157 = vmatprep.subr.bf16.mxu0 0
        %1158 = vmatpush2.bf16.msra.mxu0 0
        %1159 = vmatprep.subr.bf16.mxu0 0
        %1160 = vmatpush2.bf16.msra.mxu0 0
        %1161 = vmatprep.subr.bf16.mxu0 0
        %1162 = vmatpush2.bf16.msra.mxu0 0
        %1163 = vmatprep.subr.bf16.mxu0 0
        %1164 = vmatpush2.bf16.msra.mxu0 0
        %1165 = vmatprep.mubr.bf16.mxu0 0
        %1166 = vmatmul.mubr.bf16.gmra.mxu0 %v1131
        %v1167 = vpop.f32.mrf.mxu0
        %v1168 = vadd.f32 %v1113, %v1167
        %v1169 = vpop.f32.mrf.mxu0
        %v1170 = vpop.f32.mrf.mxu0
        %v1171 = vpop.f32.mrf.mxu0
        %1172 = vdwg.mxu0
        %1173 = vrot.lane.b32.xlu0 %v823, 64
        %v1174 = vpop.permute.xlu0 %1173
        %1175 = vrot.lane.b32.xlu0 %v824, 64
        %v1176 = vpop.permute.xlu0 %1175
        %v1178 = vsel %vm826, %v1174, 0
        %v1181 = vsel %vm826, %v1176, 0
        %1183 = vmatprep.subr.bf16.mxu0 0
        %1184 = vmatpush1.bf16.xpose.msra.mxu0 0
        %1185 = vmatprep.subr.bf16.mxu0 0
        %1186 = vmatpush1.bf16.xpose.msra.mxu0 0
        %1187 = vmatprep.subr.bf16.mxu0 0
        %1188 = vmatpush1.bf16.xpose.msra.mxu0 0
        %1189 = vmatprep.subr.bf16.mxu0 0
        %1190 = vmatpush1.bf16.xpose.msra.mxu0 0
        %1191 = vmatprep.subr.bf16.mxu0 0
        %1192 = vmatpush1.bf16.xpose.msra.mxu0 0
        %1193 = vmatprep.subr.bf16.mxu0 0
        %1194 = vmatpush1.bf16.xpose.msra.mxu0 0
        %1195 = vmatprep.subr.bf16.mxu0 0
        %1196 = vmatpush1.bf16.xpose.msra.mxu0 0
        %1197 = vmatprep.subr.bf16.mxu0 0
        %1198 = vmatpush1.bf16.xpose.msra.mxu0 %v1181
        %1199 = vmatprep.subr.bf16.mxu0 0
        %1200 = vmatpush2.bf16.xpose.msra.mxu0 0
        %1201 = vmatprep.subr.bf16.mxu0 0
        %1202 = vmatpush2.bf16.xpose.msra.mxu0 0
        %1203 = vmatprep.subr.bf16.mxu0 0
        %1204 = vmatpush2.bf16.xpose.msra.mxu0 0
        %1205 = vmatprep.subr.bf16.mxu0 0
        %1206 = vmatpush2.bf16.xpose.msra.mxu0 0
        %1207 = vmatprep.subr.bf16.mxu0 0
        %1208 = vmatpush2.bf16.xpose.msra.mxu0 0
        %1209 = vmatprep.subr.bf16.mxu0 0
        %1210 = vmatpush2.bf16.xpose.msra.mxu0 0
        %1211 = vmatprep.subr.bf16.mxu0 0
        %1212 = vmatpush2.bf16.xpose.msra.mxu0 0
        %1213 = vmatprep.subr.bf16.mxu0 0
        %1214 = vmatpush2.bf16.xpose.msra.mxu0 0
        %1215 = vmatprep.mubr.bf16.mxu0 0
        %1216 = vmatmul.mubr.bf16.gmra.mxu0 %v1178
        %v1217 = vpop.f32.mrf.mxu0
        %v1218 = vadd.f32 0.0, %v1217
        %v1219 = vpop.f32.mrf.mxu0
        %v1220 = vpop.f32.mrf.mxu0
        %v1221 = vpop.f32.mrf.mxu0
        %1222 = vdwg.mxu0
        %v1223 = vmul.f32 %v1218, 0.17677669
        %v1224 = vsel %vm876, -1e+09, %v1223
        %v1225 = vsel %vm878, %v1224, -inf
        %1226 = vmax.xlane.f32.xlu0 %v1225
        %v1227 = vpop.xlane.xlu0 %1226
        %v1228 = vsub.f32 %v1224, %v1227
        %v1229 = vmul.f32 %v1228, 1.442695
        %v1230 = vpow.pop %v1229
        %v1231 = vsel %vm878, %v1230, 0.0
        %1232 = vadd.xlane.f32.xlu0 %v1231
        %v1233 = vpop.xlane.xlu0 %1232
        %v1234 = vrcp.pop %v1233
        %v1235 = vmul.f32 %v1230, %v1234
        %v1236 = vpack.c.bf16 %v1235, %v1235
        %1237 = vrot.lane.b32.xlu0 %v825, 64
        %v1238 = vpop.permute.xlu0 %1237
        %v1240 = vsel %vm878, %v1236, 0
        %v1243 = vsel %vm894, %v1238, 0
        %1245 = vmatprep.subr.bf16.mxu0 0
        %1246 = vmatpush1.bf16.msra.mxu0 0
        %1247 = vmatprep.subr.bf16.mxu0 0
        %1248 = vmatpush1.bf16.msra.mxu0 0
        %1249 = vmatprep.subr.bf16.mxu0 0
        %1250 = vmatpush1.bf16.msra.mxu0 0
        %1251 = vmatprep.subr.bf16.mxu0 0
        %1252 = vmatpush1.bf16.msra.mxu0 0
        %1253 = vmatprep.subr.bf16.mxu0 0
        %1254 = vmatpush1.bf16.msra.mxu0 0
        %1255 = vmatprep.subr.bf16.mxu0 0
        %1256 = vmatpush1.bf16.msra.mxu0 0
        %1257 = vmatprep.subr.bf16.mxu0 0
        %1258 = vmatpush1.bf16.msra.mxu0 0
        %1259 = vmatprep.subr.bf16.mxu0 0
        %1260 = vmatpush1.bf16.msra.mxu0 %v1243
        %1261 = vmatprep.subr.bf16.mxu0 0
        %1262 = vmatpush2.bf16.msra.mxu0 0
        %1263 = vmatprep.subr.bf16.mxu0 0
        %1264 = vmatpush2.bf16.msra.mxu0 0
        %1265 = vmatprep.subr.bf16.mxu0 0
        %1266 = vmatpush2.bf16.msra.mxu0 0
        %1267 = vmatprep.subr.bf16.mxu0 0
        %1268 = vmatpush2.bf16.msra.mxu0 0
        %1269 = vmatprep.subr.bf16.mxu0 0
        %1270 = vmatpush2.bf16.msra.mxu0 0
        %1271 = vmatprep.subr.bf16.mxu0 0
        %1272 = vmatpush2.bf16.msra.mxu0 0
        %1273 = vmatprep.subr.bf16.mxu0 0
        %1274 = vmatpush2.bf16.msra.mxu0 0
        %1275 = vmatprep.subr.bf16.mxu0 0
        %1276 = vmatpush2.bf16.msra.mxu0 0
        %1277 = vmatprep.mubr.bf16.mxu0 0
        %1278 = vmatmul.mubr.bf16.gmra.mxu0 %v1240
        %v1279 = vpop.f32.mrf.mxu0
        %v1280 = vadd.f32 0.0, %v1279
        %v1281 = vpop.f32.mrf.mxu0
        %v1282 = vpop.f32.mrf.mxu0
        %v1283 = vpop.f32.mrf.mxu0
        %1284 = vdwg.mxu0
        %v1285 = vpack.c.bf16 %v1280, %v1280
        %v1286 = vld [vmem:[#allocation6 + $0x20] sm:$0xf]
        %v1287 = vld [vmem:[#allocation6 + $0x24] sm:$0xf]
        %v1288 = vld [vmem:[#allocation6 + $0x28] sm:$0xf]
        %v1289 = vld [vmem:[#allocation6 + $0x2c] sm:$0xf]
        %v1294 = vunpack.c.l.b16 %v1286
        %v1295 = vunpack.c.l.b16 %v1287
        %v1296 = vunpack.c.l.b16 %v1288
        %v1297 = vunpack.c.l.b16 %v1289
        %v1298 = vpack.c.b16 %v1295, %v1294
        %v1299 = vpack.c.b16 %v1297, %v1296
        %v1303 = vsel %vm826, %v1285, 0
        %1305 = vmatprep.subr.bf16.mxu0 0
        %1306 = vmatpush1.bf16.msra.mxu0 0
        %1307 = vmatprep.subr.bf16.mxu0 0
        %1308 = vmatpush1.bf16.msra.mxu0 0
        %1309 = vmatprep.subr.bf16.mxu0 0
        %1310 = vmatpush1.bf16.msra.mxu0 0
        %1311 = vmatprep.subr.bf16.mxu0 0
        %1312 = vmatpush1.bf16.msra.mxu0 0
        %1313 = vmatprep.subr.bf16.mxu0 0
        %1314 = vmatpush1.bf16.msra.mxu0 0
        %1315 = vmatprep.subr.bf16.mxu0 0
        %1316 = vmatpush1.bf16.msra.mxu0 0
        %1317 = vmatprep.subr.bf16.mxu0 0
        %1318 = vmatpush1.bf16.msra.mxu0 %v1299
        %1319 = vmatprep.subr.bf16.mxu0 0
        %1320 = vmatpush1.bf16.msra.mxu0 %v1298
        %1321 = vmatprep.subr.bf16.mxu0 0
        %1322 = vmatpush2.bf16.msra.mxu0 0
        %1323 = vmatprep.subr.bf16.mxu0 0
        %1324 = vmatpush2.bf16.msra.mxu0 0
        %1325 = vmatprep.subr.bf16.mxu0 0
        %1326 = vmatpush2.bf16.msra.mxu0 0
        %1327 = vmatprep.subr.bf16.mxu0 0
        %1328 = vmatpush2.bf16.msra.mxu0 0
        %1329 = vmatprep.subr.bf16.mxu0 0
        %1330 = vmatpush2.bf16.msra.mxu0 0
        %1331 = vmatprep.subr.bf16.mxu0 0
        %1332 = vmatpush2.bf16.msra.mxu0 0
        %1333 = vmatprep.subr.bf16.mxu0 0
        %1334 = vmatpush2.bf16.msra.mxu0 0
        %1335 = vmatprep.subr.bf16.mxu0 0
        %1336 = vmatpush2.bf16.msra.mxu0 0
        %1337 = vmatprep.mubr.bf16.mxu0 0
        %1338 = vmatmul.mubr.bf16.gmra.mxu0 %v1303
        %v1339 = vpop.f32.mrf.mxu0
        %v1340 = vadd.f32 0.0, %v1339
        %v1341 = vpop.f32.mrf.mxu0
        %v1342 = vpop.f32.mrf.mxu0
        %v1343 = vpop.f32.mrf.mxu0
        %1344 = vdwg.mxu0
        %v1345 = vadd.f32 %v1168, %v1340
        %1346 = vrot.lane.b32.xlu0 %v823, 32
        %v1347 = vpop.permute.xlu0 %1346
        %1348 = vrot.lane.b32.xlu0 %v824, 32
        %v1349 = vpop.permute.xlu0 %1348
        %v1351 = vsel %vm826, %v1347, 0
        %v1354 = vsel %vm826, %v1349, 0
        %1356 = vmatprep.subr.bf16.mxu0 0
        %1357 = vmatpush1.bf16.xpose.msra.mxu0 0
        %1358 = vmatprep.subr.bf16.mxu0 0
        %1359 = vmatpush1.bf16.xpose.msra.mxu0 0
        %1360 = vmatprep.subr.bf16.mxu0 0
        %1361 = vmatpush1.bf16.xpose.msra.mxu0 0
        %1362 = vmatprep.subr.bf16.mxu0 0
        %1363 = vmatpush1.bf16.xpose.msra.mxu0 0
        %1364 = vmatprep.subr.bf16.mxu0 0
        %1365 = vmatpush1.bf16.xpose.msra.mxu0 0
        %1366 = vmatprep.subr.bf16.mxu0 0
        %1367 = vmatpush1.bf16.xpose.msra.mxu0 0
        %1368 = vmatprep.subr.bf16.mxu0 0
        %1369 = vmatpush1.bf16.xpose.msra.mxu0 0
        %1370 = vmatprep.subr.bf16.mxu0 0
        %1371 = vmatpush1.bf16.xpose.msra.mxu0 %v1354
        %1372 = vmatprep.subr.bf16.mxu0 0
        %1373 = vmatpush2.bf16.xpose.msra.mxu0 0
        %1374 = vmatprep.subr.bf16.mxu0 0
        %1375 = vmatpush2.bf16.xpose.msra.mxu0 0
        %1376 = vmatprep.subr.bf16.mxu0 0
        %1377 = vmatpush2.bf16.xpose.msra.mxu0 0
        %1378 = vmatprep.subr.bf16.mxu0 0
        %1379 = vmatpush2.bf16.xpose.msra.mxu0 0
        %1380 = vmatprep.subr.bf16.mxu0 0
        %1381 = vmatpush2.bf16.xpose.msra.mxu0 0
        %1382 = vmatprep.subr.bf16.mxu0 0
        %1383 = vmatpush2.bf16.xpose.msra.mxu0 0
        %1384 = vmatprep.subr.bf16.mxu0 0
        %1385 = vmatpush2.bf16.xpose.msra.mxu0 0
        %1386 = vmatprep.subr.bf16.mxu0 0
        %1387 = vmatpush2.bf16.xpose.msra.mxu0 0
        %1388 = vmatprep.mubr.bf16.mxu0 0
        %1389 = vmatmul.mubr.bf16.gmra.mxu0 %v1351
        %v1390 = vpop.f32.mrf.mxu0
        %v1391 = vadd.f32 0.0, %v1390
        %v1392 = vpop.f32.mrf.mxu0
        %v1393 = vpop.f32.mrf.mxu0
        %v1394 = vpop.f32.mrf.mxu0
        %1395 = vdwg.mxu0
        %v1396 = vmul.f32 %v1391, 0.17677669
        %v1397 = vsel %vm876, -1e+09, %v1396
        %v1398 = vsel %vm878, %v1397, -inf
        %1399 = vmax.xlane.f32.xlu0 %v1398
        %v1400 = vpop.xlane.xlu0 %1399
        %v1401 = vsub.f32 %v1397, %v1400
        %v1402 = vmul.f32 %v1401, 1.442695
        %v1403 = vpow.pop %v1402
        %v1404 = vsel %vm878, %v1403, 0.0
        %1405 = vadd.xlane.f32.xlu0 %v1404
        %v1406 = vpop.xlane.xlu0 %1405
        %v1407 = vrcp.pop %v1406
        %v1408 = vmul.f32 %v1403, %v1407
        %v1409 = vpack.c.bf16 %v1408, %v1408
        %1410 = vrot.lane.b32.xlu0 %v825, 32
        %v1411 = vpop.permute.xlu0 %1410
        %v1413 = vsel %vm878, %v1409, 0
        %v1416 = vsel %vm894, %v1411, 0
        %1418 = vmatprep.subr.bf16.mxu0 0
        %1419 = vmatpush1.bf16.msra.mxu0 0
        %1420 = vmatprep.subr.bf16.mxu0 0
        %1421 = vmatpush1.bf16.msra.mxu0 0
        %1422 = vmatprep.subr.bf16.mxu0 0
        %1423 = vmatpush1.bf16.msra.mxu0 0
        %1424 = vmatprep.subr.bf16.mxu0 0
        %1425 = vmatpush1.bf16.msra.mxu0 0
        %1426 = vmatprep.subr.bf16.mxu0 0
        %1427 = vmatpush1.bf16.msra.mxu0 0
        %1428 = vmatprep.subr.bf16.mxu0 0
        %1429 = vmatpush1.bf16.msra.mxu0 0
        %1430 = vmatprep.subr.bf16.mxu0 0
        %1431 = vmatpush1.bf16.msra.mxu0 0
        %1432 = vmatprep.subr.bf16.mxu0 0
        %1433 = vmatpush1.bf16.msra.mxu0 %v1416
        %1434 = vmatprep.subr.bf16.mxu0 0
        %1435 = vmatpush2.bf16.msra.mxu0 0
        %1436 = vmatprep.subr.bf16.mxu0 0
        %1437 = vmatpush2.bf16.msra.mxu0 0
        %1438 = vmatprep.subr.bf16.mxu0 0
        %1439 = vmatpush2.bf16.msra.mxu0 0
        %1440 = vmatprep.subr.bf16.mxu0 0
        %1441 = vmatpush2.bf16.msra.mxu0 0
        %1442 = vmatprep.subr.bf16.mxu0 0
        %1443 = vmatpush2.bf16.msra.mxu0 0
        %1444 = vmatprep.subr.bf16.mxu0 0
        %1445 = vmatpush2.bf16.msra.mxu0 0
        %1446 = vmatprep.subr.bf16.mxu0 0
        %1447 = vmatpush2.bf16.msra.mxu0 0
        %1448 = vmatprep.subr.bf16.mxu0 0
        %1449 = vmatpush2.bf16.msra.mxu0 0
        %1450 = vmatprep.mubr.bf16.mxu0 0
        %1451 = vmatmul.mubr.bf16.gmra.mxu0 %v1413
        %v1452 = vpop.f32.mrf.mxu0
        %v1453 = vadd.f32 0.0, %v1452
        %v1454 = vpop.f32.mrf.mxu0
        %v1455 = vpop.f32.mrf.mxu0
        %v1456 = vpop.f32.mrf.mxu0
        %1457 = vdwg.mxu0
        %v1458 = vpack.c.bf16 %v1453, %v1453
        %v1459 = vld [vmem:[#allocation6 + $0x30] sm:$0xf]
        %v1460 = vld [vmem:[#allocation6 + $0x34] sm:$0xf]
        %v1461 = vld [vmem:[#allocation6 + $0x38] sm:$0xf]
        %v1462 = vld [vmem:[#allocation6 + $0x3c] sm:$0xf]
        %v1467 = vunpack.c.l.b16 %v1459
        %v1468 = vunpack.c.l.b16 %v1460
        %v1469 = vunpack.c.l.b16 %v1461
        %v1470 = vunpack.c.l.b16 %v1462
        %v1471 = vpack.c.b16 %v1468, %v1467
        %v1472 = vpack.c.b16 %v1470, %v1469
        %v1476 = vsel %vm826, %v1458, 0
        %1478 = vmatprep.subr.bf16.mxu0 0
        %1479 = vmatpush1.bf16.msra.mxu0 0
        %1480 = vmatprep.subr.bf16.mxu0 0
        %1481 = vmatpush1.bf16.msra.mxu0 0
        %1482 = vmatprep.subr.bf16.mxu0 0
        %1483 = vmatpush1.bf16.msra.mxu0 0
        %1484 = vmatprep.subr.bf16.mxu0 0
        %1485 = vmatpush1.bf16.msra.mxu0 0
        %1486 = vmatprep.subr.bf16.mxu0 0
        %1487 = vmatpush1.bf16.msra.mxu0 0
        %1488 = vmatprep.subr.bf16.mxu0 0
        %1489 = vmatpush1.bf16.msra.mxu0 0
        %1490 = vmatprep.subr.bf16.mxu0 0
        %1491 = vmatpush1.bf16.msra.mxu0 %v1472
        %1492 = vmatprep.subr.bf16.mxu0 0
        %1493 = vmatpush1.bf16.msra.mxu0 %v1471
        %1494 = vmatprep.subr.bf16.mxu0 0
        %1495 = vmatpush2.bf16.msra.mxu0 0
        %1496 = vmatprep.subr.bf16.mxu0 0
        %1497 = vmatpush2.bf16.msra.mxu0 0
        %1498 = vmatprep.subr.bf16.mxu0 0
        %1499 = vmatpush2.bf16.msra.mxu0 0
        %1500 = vmatprep.subr.bf16.mxu0 0
        %1501 = vmatpush2.bf16.msra.mxu0 0
        %1502 = vmatprep.subr.bf16.mxu0 0
        %1503 = vmatpush2.bf16.msra.mxu0 0
        %1504 = vmatprep.subr.bf16.mxu0 0
        %1505 = vmatpush2.bf16.msra.mxu0 0
        %1506 = vmatprep.subr.bf16.mxu0 0
        %1507 = vmatpush2.bf16.msra.mxu0 0
        %1508 = vmatprep.subr.bf16.mxu0 0
        %1509 = vmatpush2.bf16.msra.mxu0 0
        %1510 = vmatprep.mubr.bf16.mxu0 0
        %1511 = vmatmul.mubr.bf16.gmra.mxu0 %v1476
        %v1512 = vpop.f32.mrf.mxu0
        %v1513 = vadd.f32 0.0, %v1512
        %v1514 = vpop.f32.mrf.mxu0
        %v1515 = vpop.f32.mrf.mxu0
        %v1516 = vpop.f32.mrf.mxu0
        %1517 = vdwg.mxu0
        %v1518 = vadd.f32 %v1345, %v1513
        %v1519 = vld [vmem:[%s5] sm:$0x1]
        %v1521 = vlaneseq
        %v1522 = vshrl.u32 %v1521, 7
        %v1523 = vsub.s32 0, %v1522
        %v1524 = vrot.slane %v1519, %v1523
        %v1526 = vadd.f32 %v1518, %v1524
        %v1527 = vadd.f32 %v1526, %v561
        %v1528 = vld [vmem:[%s6] sm:$0x1]
        %v1529 = vld [vmem:[%s7] sm:$0x1]
        %1530 = vadd.xlane.f32.xlu0 %v1527
        %v1531 = vpop.xlane.xlu0 %1530
        %v1532 = vrcp.pop 128.0
        %v1533 = vmul.f32 %v1531, %v1532
        %v1534 = vsub.f32 %v1527, %v1533
        %v1535 = vmul.f32 %v1534, %v1534
        %1536 = vadd.xlane.f32.xlu0 %v1535
        %v1537 = vpop.xlane.xlu0 %1536
        %v1538 = vmul.f32 %v1537, %v1532
        %v1539 = vadd.f32 %v1538, 1e-05
        %v1540 = vrsqrt.pop %v1539
        %v1541 = vmul.f32 %v1534, %v1540
        %v1543 = vlaneseq
        %v1544 = vshrl.u32 %v1543, 7
        %v1545 = vsub.s32 0, %v1544
        %v1546 = vrot.slane %v1528, %v1545
        %v1548 = vmul.f32 %v1541, %v1546
        %v1550 = vlaneseq
        %v1551 = vshrl.u32 %v1550, 7
        %v1552 = vsub.s32 0, %v1551
        %v1553 = vrot.slane %v1529, %v1552
        %v1555 = vadd.f32 %v1548, %v1553
        %v1556 = vpack.c.bf16 %v1555, %v1555
        %v1557 = vld [vmem:[#allocation7] sm:$0xff]
        %v1558 = vld [vmem:[#allocation7 + $0x8] sm:$0xff]
        %v1559 = vld [vmem:[#allocation7 + $0x10] sm:$0xff]
        %v1560 = vld [vmem:[#allocation7 + $0x18] sm:$0xff]
        %v1561 = vld [vmem:[#allocation7 + $0x20] sm:$0xff]
        %v1562 = vld [vmem:[#allocation7 + $0x28] sm:$0xff]
        %v1563 = vld [vmem:[#allocation7 + $0x30] sm:$0xff]
        %v1564 = vld [vmem:[#allocation7 + $0x38] sm:$0xff]
        %v1565 = vld [vmem:[#allocation7 + $0x40] sm:$0xff]
        %v1566 = vld [vmem:[#allocation7 + $0x48] sm:$0xff]
        %v1567 = vld [vmem:[#allocation7 + $0x50] sm:$0xff]
        %v1568 = vld [vmem:[#allocation7 + $0x58] sm:$0xff]
        %v1569 = vld [vmem:[#allocation7 + $0x60] sm:$0xff]
        %v1570 = vld [vmem:[#allocation7 + $0x68] sm:$0xff]
        %v1571 = vld [vmem:[#allocation7 + $0x70] sm:$0xff]
        %v1572 = vld [vmem:[#allocation7 + $0x78] sm:$0xff]
        %v1573 = vld [vmem:[%s9] sm:$0x3]
        %v1575 = vlaneseq
        %v1576 = vshrl.u32 %v1575, 7
        %v1577 = vsub.s32 0, %v1576
        %v1578 = vrot.slane %v1573, %v1577
        %v1579 = vlaneseq
        %v1580 = vshrl.u32 %v1579, 7
        %v1581 = vsub.s32 1, %v1580
        %v1582 = vrot.slane %v1573, %v1581
        %v1601 = vunpack.c.l.b16 %v1557
        %v1602 = vunpack.c.h.b16 %v1557
        %v1603 = vunpack.c.l.b16 %v1558
        %v1604 = vunpack.c.h.b16 %v1558
        %v1605 = vunpack.c.l.b16 %v1559
        %v1606 = vunpack.c.h.b16 %v1559
        %v1607 = vunpack.c.l.b16 %v1560
        %v1608 = vunpack.c.h.b16 %v1560
        %v1609 = vunpack.c.l.b16 %v1561
        %v1610 = vunpack.c.h.b16 %v1561
        %v1611 = vunpack.c.l.b16 %v1562
        %v1612 = vunpack.c.h.b16 %v1562
        %v1613 = vunpack.c.l.b16 %v1563
        %v1614 = vunpack.c.h.b16 %v1563
        %v1615 = vunpack.c.l.b16 %v1564
        %v1616 = vunpack.c.h.b16 %v1564
        %v1617 = vunpack.c.l.b16 %v1565
        %v1618 = vunpack.c.h.b16 %v1565
        %v1619 = vunpack.c.l.b16 %v1566
        %v1620 = vunpack.c.h.b16 %v1566
        %v1621 = vunpack.c.l.b16 %v1567
        %v1622 = vunpack.c.h.b16 %v1567
        %v1623 = vunpack.c.l.b16 %v1568
        %v1624 = vunpack.c.h.b16 %v1568
        %v1625 = vunpack.c.l.b16 %v1569
        %v1626 = vunpack.c.h.b16 %v1569
        %v1627 = vunpack.c.l.b16 %v1570
        %v1628 = vunpack.c.h.b16 %v1570
        %v1629 = vunpack.c.l.b16 %v1571
        %v1630 = vunpack.c.h.b16 %v1571
        %v1631 = vunpack.c.l.b16 %v1572
        %v1632 = vunpack.c.h.b16 %v1572
        %v1633 = vpack.c.b16 %v1603, %v1601
        %v1634 = vpack.c.b16 %v1604, %v1602
        %v1635 = vpack.c.b16 %v1607, %v1605
        %v1636 = vpack.c.b16 %v1608, %v1606
        %v1637 = vpack.c.b16 %v1611, %v1609
        %v1638 = vpack.c.b16 %v1612, %v1610
        %v1639 = vpack.c.b16 %v1615, %v1613
        %v1640 = vpack.c.b16 %v1616, %v1614
        %v1641 = vpack.c.b16 %v1619, %v1617
        %v1642 = vpack.c.b16 %v1620, %v1618
        %v1643 = vpack.c.b16 %v1623, %v1621
        %v1644 = vpack.c.b16 %v1624, %v1622
        %v1645 = vpack.c.b16 %v1627, %v1625
        %v1646 = vpack.c.b16 %v1628, %v1626
        %v1647 = vpack.c.b16 %v1631, %v1629
        %v1648 = vpack.c.b16 %v1632, %v1630
        %1665 = vmatprep.subr.bf16.mxu0 %v1648
        %1666 = vmatpush1.bf16.msra.mxu0 %v1647
        %1667 = vmatprep.subr.bf16.mxu0 %v1646
        %1668 = vmatpush1.bf16.msra.mxu0 %v1645
        %1669 = vmatprep.subr.bf16.mxu0 %v1644
        %1670 = vmatpush1.bf16.msra.mxu0 %v1643
        %1671 = vmatprep.subr.bf16.mxu0 %v1642
        %1672 = vmatpush1.bf16.msra.mxu0 %v1641
        %1673 = vmatprep.subr.bf16.mxu0 %v1640
        %1674 = vmatpush1.bf16.msra.mxu0 %v1639
        %1675 = vmatprep.subr.bf16.mxu0 %v1638
        %1676 = vmatpush1.bf16.msra.mxu0 %v1637
        %1677 = vmatprep.subr.bf16.mxu0 %v1636
        %1678 = vmatpush1.bf16.msra.mxu0 %v1635
        %1679 = vmatprep.subr.bf16.mxu0 %v1634
        %1680 = vmatpush1.bf16.msra.mxu0 %v1633
        %1681 = vmatprep.subr.bf16.mxu0 0
        %1682 = vmatpush2.bf16.msra.mxu0 0
        %1683 = vmatprep.subr.bf16.mxu0 0
        %1684 = vmatpush2.bf16.msra.mxu0 0
        %1685 = vmatprep.subr.bf16.mxu0 0
        %1686 = vmatpush2.bf16.msra.mxu0 0
        %1687 = vmatprep.subr.bf16.mxu0 0
        %1688 = vmatpush2.bf16.msra.mxu0 0
        %1689 = vmatprep.subr.bf16.mxu0 0
        %1690 = vmatpush2.bf16.msra.mxu0 0
        %1691 = vmatprep.subr.bf16.mxu0 0
        %1692 = vmatpush2.bf16.msra.mxu0 0
        %1693 = vmatprep.subr.bf16.mxu0 0
        %1694 = vmatpush2.bf16.msra.mxu0 0
        %1695 = vmatprep.subr.bf16.mxu0 0
        %1696 = vmatpush2.bf16.msra.mxu0 0
        %1697 = vmatprep.mubr.bf16.mxu0 0
        %1698 = vmatmul.mubr.bf16.gmra.mxu0 %v1556
        %v1699 = vpop.f32.mrf.mxu0
        %v1700 = vadd.f32 %v1578, %v1699
        %v1701 = vpop.f32.mrf.mxu0
        %v1702 = vadd.f32 %v1582, %v1701
        %v1703 = vpop.f32.mrf.mxu0
        %v1704 = vpop.f32.mrf.mxu0
        %1705 = vdwg.mxu0
        %v1706 = vmax.f32 %v1700, 0.0
        %v1707 = vmax.f32 %v1702, 0.0
        %v1708 = vpack.c.bf16 %v1706, %v1706
        %v1709 = vpack.c.bf16 %v1707, %v1707
        %v1710 = vld [vmem:[#allocation9] sm:$0xf]
        %v1711 = vld [vmem:[#allocation9 + $0x4] sm:$0xf]
        %v1712 = vld [vmem:[#allocation9 + $0x8] sm:$0xf]
        %v1713 = vld [vmem:[#allocation9 + $0xc] sm:$0xf]
        %v1714 = vld [vmem:[#allocation9 + $0x10] sm:$0xf]
        %v1715 = vld [vmem:[#allocation9 + $0x14] sm:$0xf]
        %v1716 = vld [vmem:[#allocation9 + $0x18] sm:$0xf]
        %v1717 = vld [vmem:[#allocation9 + $0x1c] sm:$0xf]
        %v1718 = vld [vmem:[#allocation9 + $0x20] sm:$0xf]
        %v1719 = vld [vmem:[#allocation9 + $0x24] sm:$0xf]
        %v1720 = vld [vmem:[#allocation9 + $0x28] sm:$0xf]
        %v1721 = vld [vmem:[#allocation9 + $0x2c] sm:$0xf]
        %v1722 = vld [vmem:[#allocation9 + $0x30] sm:$0xf]
        %v1723 = vld [vmem:[#allocation9 + $0x34] sm:$0xf]
        %v1724 = vld [vmem:[#allocation9 + $0x38] sm:$0xf]
        %v1725 = vld [vmem:[#allocation9 + $0x3c] sm:$0xf]
        %v1726 = vld [vmem:[#allocation9 + $0x40] sm:$0xf]
        %v1727 = vld [vmem:[#allocation9 + $0x44] sm:$0xf]
        %v1728 = vld [vmem:[#allocation9 + $0x48] sm:$0xf]
        %v1729 = vld [vmem:[#allocation9 + $0x4c] sm:$0xf]
        %v1730 = vld [vmem:[#allocation9 + $0x50] sm:$0xf]
        %v1731 = vld [vmem:[#allocation9 + $0x54] sm:$0xf]
        %v1732 = vld [vmem:[#allocation9 + $0x58] sm:$0xf]
        %v1733 = vld [vmem:[#allocation9 + $0x5c] sm:$0xf]
        %v1734 = vld [vmem:[#allocation9 + $0x60] sm:$0xf]
        %v1735 = vld [vmem:[#allocation9 + $0x64] sm:$0xf]
        %v1736 = vld [vmem:[#allocation9 + $0x68] sm:$0xf]
        %v1737 = vld [vmem:[#allocation9 + $0x6c] sm:$0xf]
        %v1738 = vld [vmem:[#allocation9 + $0x70] sm:$0xf]
        %v1739 = vld [vmem:[#allocation9 + $0x74] sm:$0xf]
        %v1740 = vld [vmem:[#allocation9 + $0x78] sm:$0xf]
        %v1741 = vld [vmem:[#allocation9 + $0x7c] sm:$0xf]
        %v1742 = vld [vmem:[%s11] sm:$0x1]
        %v1744 = vlaneseq
        %v1745 = vshrl.u32 %v1744, 7
        %v1746 = vsub.s32 0, %v1745
        %v1747 = vrot.slane %v1742, %v1746
        %v1781 = vunpack.c.l.b16 %v1710
        %v1782 = vunpack.c.l.b16 %v1711
        %v1783 = vunpack.c.l.b16 %v1712
        %v1784 = vunpack.c.l.b16 %v1713
        %v1785 = vunpack.c.l.b16 %v1714
        %v1786 = vunpack.c.l.b16 %v1715
        %v1787 = vunpack.c.l.b16 %v1716
        %v1788 = vunpack.c.l.b16 %v1717
        %v1789 = vunpack.c.l.b16 %v1718
        %v1790 = vunpack.c.l.b16 %v1719
        %v1791 = vunpack.c.l.b16 %v1720
        %v1792 = vunpack.c.l.b16 %v1721
        %v1793 = vunpack.c.l.b16 %v1722
        %v1794 = vunpack.c.l.b16 %v1723
        %v1795 = vunpack.c.l.b16 %v1724
        %v1796 = vunpack.c.l.b16 %v1725
        %v1797 = vunpack.c.l.b16 %v1726
        %v1798 = vunpack.c.l.b16 %v1727
        %v1799 = vunpack.c.l.b16 %v1728
        %v1800 = vunpack.c.l.b16 %v1729
        %v1801 = vunpack.c.l.b16 %v1730
        %v1802 = vunpack.c.l.b16 %v1731
        %v1803 = vunpack.c.l.b16 %v1732
        %v1804 = vunpack.c.l.b16 %v1733
        %v1805 = vunpack.c.l.b16 %v1734
        %v1806 = vunpack.c.l.b16 %v1735
        %v1807 = vunpack.c.l.b16 %v1736
        %v1808 = vunpack.c.l.b16 %v1737
        %v1809 = vunpack.c.l.b16 %v1738
        %v1810 = vunpack.c.l.b16 %v1739
        %v1811 = vunpack.c.l.b16 %v1740
        %v1812 = vunpack.c.l.b16 %v1741
        %v1813 = vpack.c.b16 %v1782, %v1781
        %v1814 = vpack.c.b16 %v1784, %v1783
        %v1815 = vpack.c.b16 %v1786, %v1785
        %v1816 = vpack.c.b16 %v1788, %v1787
        %v1817 = vpack.c.b16 %v1790, %v1789
        %v1818 = vpack.c.b16 %v1792, %v1791
        %v1819 = vpack.c.b16 %v1794, %v1793
        %v1820 = vpack.c.b16 %v1796, %v1795
        %v1821 = vpack.c.b16 %v1798, %v1797
        %v1822 = vpack.c.b16 %v1800, %v1799
        %v1823 = vpack.c.b16 %v1802, %v1801
        %v1824 = vpack.c.b16 %v1804, %v1803
        %v1825 = vpack.c.b16 %v1806, %v1805
        %v1826 = vpack.c.b16 %v1808, %v1807
        %v1827 = vpack.c.b16 %v1810, %v1809
        %v1828 = vpack.c.b16 %v1812, %v1811
        %1845 = vmatprep.subr.bf16.mxu0 0
        %1846 = vmatpush1.bf16.msra.mxu0 %v1820
        %1847 = vmatprep.subr.bf16.mxu0 0
        %1848 = vmatpush1.bf16.msra.mxu0 %v1819
        %1849 = vmatprep.subr.bf16.mxu0 0
        %1850 = vmatpush1.bf16.msra.mxu0 %v1818
        %1851 = vmatprep.subr.bf16.mxu0 0
        %1852 = vmatpush1.bf16.msra.mxu0 %v1817
        %1853 = vmatprep.subr.bf16.mxu0 0
        %1854 = vmatpush1.bf16.msra.mxu0 %v1816
        %1855 = vmatprep.subr.bf16.mxu0 0
        %1856 = vmatpush1.bf16.msra.mxu0 %v1815
        %1857 = vmatprep.subr.bf16.mxu0 0
        %1858 = vmatpush1.bf16.msra.mxu0 %v1814
        %1859 = vmatprep.subr.bf16.mxu0 0
        %1860 = vmatpush1.bf16.msra.mxu0 %v1813
        %1861 = vmatprep.subr.bf16.mxu0 0
        %1862 = vmatpush2.bf16.msra.mxu0 %v1828
        %1863 = vmatprep.subr.bf16.mxu0 0
        %1864 = vmatpush2.bf16.msra.mxu0 %v1827
        %1865 = vmatprep.subr.bf16.mxu0 0
        %1866 = vmatpush2.bf16.msra.mxu0 %v1826
        %1867 = vmatprep.subr.bf16.mxu0 0
        %1868 = vmatpush2.bf16.msra.mxu0 %v1825
        %1869 = vmatprep.subr.bf16.mxu0 0
        %1870 = vmatpush2.bf16.msra.mxu0 %v1824
        %1871 = vmatprep.subr.bf16.mxu0 0
        %1872 = vmatpush2.bf16.msra.mxu0 %v1823
        %1873 = vmatprep.subr.bf16.mxu0 0
        %1874 = vmatpush2.bf16.msra.mxu0 %v1822
        %1875 = vmatprep.subr.bf16.mxu0 0
        %1876 = vmatpush2.bf16.msra.mxu0 %v1821
        %1877 = vmatprep.mubr.bf16.mxu0 %v1709
        %1878 = vmatmul.mubr.bf16.gmra.mxu0 %v1708
        %v1879 = vpop.f32.mrf.mxu0
        %v1880 = vadd.f32 %v1747, %v1879
        %v1881 = vpop.f32.mrf.mxu0
        %v1882 = vpop.f32.mrf.mxu0
        %v1883 = vpop.f32.mrf.mxu0
        %1884 = vdwg.mxu0
        %v1885 = vadd.f32 %v1880, %v1555
        %v1886 = vld [vmem:[%s12] sm:$0x1]
        %v1887 = vld [vmem:[%s13] sm:$0x1]
        %1888 = vadd.xlane.f32.xlu0 %v1885
        %v1889 = vpop.xlane.xlu0 %1888
        %v1890 = vmul.f32 %v1889, %v1532
        %v1891 = vsub.f32 %v1885, %v1890
        %v1892 = vmul.f32 %v1891, %v1891
        %1893 = vadd.xlane.f32.xlu0 %v1892
        %v1894 = vpop.xlane.xlu0 %1893
        %v1895 = vmul.f32 %v1894, %v1532
        %v1896 = vadd.f32 %v1895, 1e-05
        %v1897 = vrsqrt.pop %v1896
        %v1898 = vmul.f32 %v1891, %v1897
        %v1900 = vlaneseq
        %v1901 = vshrl.u32 %v1900, 7
        %v1902 = vsub.s32 0, %v1901
        %v1903 = vrot.slane %v1886, %v1902
        %v1905 = vmul.f32 %v1898, %v1903
        %v1907 = vlaneseq
        %v1908 = vshrl.u32 %v1907, 7
        %v1909 = vsub.s32 0, %v1908
        %v1910 = vrot.slane %v1887, %v1909
        %v1912 = vadd.f32 %v1905, %v1910
        %1913 = vst [vmem:[%s557] sm:$0xff] %v1912
        %p1914 = scmp.lt.s32.totalorder %s30, 1
        %s1915 = scalar_select %p1914, %s30, 1
        %s1916 = smul.addr %s1915, 8
        %s1917 = scalar_lea.vmem %s14, %s1916
        // Predicated region
        $region97: #{encoder_forward.2} parent=75 // pred_check
          %p1918 = pneg %p352
        $region98: #{encoder_forward.2} parent=75 // pred_check_branch
          %1920 = sbr.rel (%p1918) target = $region100
        $region99: #{encoder_forward.2} parent=75 // pred_region
          _
        $region100: #{encoder_forward.2} parent=75 // pred_fallthru
          _
      $region76: #{encoder_forward.2} parent=5 // pred_fallthru
        _
      %p1921 = scmp.le.s32.totalorder 2, %s25
      // Predicated region
      $region101: #{encoder_forward.2} parent=5 // pred_check
        %p1922 = pneg %p1921
      $region102: #{encoder_forward.2} parent=5 // pred_check_branch
        %1924 = sbr.rel (%p1922) target = $region104
      $region103: #{encoder_forward.2} parent=5 // pred_region
        %s1925 = ssub.s32 %s25, 2
        // Predicated region
        $region105: #{encoder_forward.2} parent=103 // pred_check
          %p1926 = pneg %p358
        $region106: #{encoder_forward.2} parent=103 // pred_check_branch
          %1928 = sbr.rel (%p1926) target = $region108
        $region107: #{encoder_forward.2} parent=103 // pred_region
          %p1929 = scmp.lt.s32.totalorder %s31, 1
          %s1930 = scalar_select %p1929, %s31, 1
          %s1931 = smul.addr %s1930, 8
          %s1932 = scalar_lea.vmem %s14, %s1931
        $region108: #{encoder_forward.2} parent=103 // pred_fallthru
          _
      $region104: #{encoder_forward.2} parent=5 // pred_fallthru
        _
    $region6: #{encoder_forward.2} parent=1 // loop_footer
      %s29 = sadd.s32 1, %s25
    $region7: #{encoder_forward.2} parent=1 // loop_footer_branch
      %24 = sbr.rel target = $region3
    $region8: #{encoder_forward.2} parent=1 // loop_exit
      _
    %1933 = vsyncpa [#allocation3], 1
    %s1934 = scalar_lea.sflag [#allocation3], 1
    %1935 = vsyncpa %s1934, 1
    %1936 = vsyncpa [#allocation5], 1
    %1937 = vsyncpa [#allocation8], 1

</llo_original>
